<compile_context>
chip_gen: v6e
topology: v6e:2x2x1
jax: 0.10.0
libtpu: 0.0.40
codegen_flags: <defaults>
</compile_context>

<pallas_src>
import functools
import math

import numpy as np
import jax
import jax.numpy as jnp
from jax.experimental import pallas as pl
from jax.experimental.pallas import tpu as pltpu

EPS = 1e-5  # PyTorch LayerNorm default


# ----------------------------------------------------------------------------
# In-kernel math helpers (must lower under Mosaic)
# ----------------------------------------------------------------------------
def _erf(x):
    # Abramowitz & Stegun 7.1.26 rational approximation (max abs err ~1.5e-7).
    a1, a2, a3, a4, a5 = 0.254829592, -0.284496736, 1.421413741, -1.453152027, 1.061405429
    p = 0.3275911
    sgn = jnp.where(x >= 0.0, 1.0, -1.0)
    ax = jnp.abs(x)
    t = 1.0 / (1.0 + p * ax)
    poly = ((((a5 * t + a4) * t + a3) * t + a2) * t + a1) * t
    return sgn * (1.0 - poly * jnp.exp(-ax * ax))


def _gelu_exact(x):
    # PyTorch activation='gelu' => exact (erf-based) GELU.
    return 0.5 * x * (1.0 + _erf(x * 0.7071067811865476))


def _layernorm(x, g, b):
    mu = jnp.mean(x, axis=-1, keepdims=True)
    xc = x - mu
    var = jnp.mean(xc * xc, axis=-1, keepdims=True)
    return xc * jax.lax.rsqrt(var + EPS) * g + b


def _add_layernorm(x, r, g, b):
    return _layernorm(x + r, g, b)


# ----------------------------------------------------------------------------
# Fused whole-model kernel: grid step == one encoder layer
# ----------------------------------------------------------------------------
def _fused_encoder_kernel(
    # constants (same block every grid step)
    x_ref, posb_ref, emb_w_ref, bias_ref, pool_ref, fln_ref, head_w_ref, head_b_ref,
    # per-layer packed weights (block l selected by index_map)
    w_attn_ref,   # (1, D, 4D)   = [wq*scale | wk | wv | wo] along lanes
    w1b_ref,      # (1, D+1, FF) = [w1 ; b1]
    w2t_ref,      # (1, D, FF)   = w2^T (lane-dense)
    slab_ref,     # (1, 8, 128)  = small per-layer params
    # output + scratch
    o_ref, h_ref,
    *, H):
    l = pl.program_id(0)
    BS, D = h_ref.shape
    Dh = D // H

    # ---- first layer only: input embedding (+bias +pos folded into posb) ----
    @pl.when(l == 0)
    def _():
        h0 = jnp.dot(x_ref[...], emb_w_ref[...], preferred_element_type=jnp.float32)
        h_ref[...] = h0 + posb_ref[...]

    h = h_ref[...]                                           # (B*S, D), VMEM-resident

    # ---- unpack this layer's weights (all lane-dense, 4 DMAs total) ----
    w_attn = w_attn_ref[0]                                   # (D, 4D)
    wqkv = w_attn[:, :3 * D]                                 # (D, 3D)
    wo = w_attn[:, 3 * D:]                                   # (D, D)
    slab = slab_ref[0]                                       # (8, 128)
    bqkv = slab[0:1, :3 * D]
    bo = slab[1:2, 0:D]
    ln1_g = slab[1:2, D:2 * D]
    ln1_b = slab[1:2, 2 * D:3 * D]
    b2 = slab[1:2, 3 * D:4 * D]
    ln2_g = slab[2:3, 0:D]
    ln2_b = slab[2:3, D:2 * D]

    # ---- self-attention: one fused QKV matmul, heads packed into one score matmul ----
    qkv = jnp.dot(h, wqkv, preferred_element_type=jnp.float32) + bqkv      # (BS, 3D)
    # head-major packing: (H*BS, Dh) via static slices + concat (no in-kernel transpose)
    q2 = jnp.concatenate([qkv[:, hh * Dh:(hh + 1) * Dh] for hh in range(H)], axis=0)
    k2 = jnp.concatenate([qkv[:, D + hh * Dh:D + (hh + 1) * Dh] for hh in range(H)], axis=0)
    v2 = jnp.concatenate([qkv[:, 2 * D + hh * Dh:2 * D + (hh + 1) * Dh] for hh in range(H)], axis=0)

    # q @ k^T over all (head, batch) blocks at once; bias_ref masks cross-block entries.
    # scale is folded into wq/bq at pack time.
    s = jax.lax.dot_general(q2, k2, (((1,), (1,)), ((), ())),
                            preferred_element_type=jnp.float32) + bias_ref[...]
    s = s - jnp.max(s, axis=-1, keepdims=True)
    p = jnp.exp(s)
    # reciprocal-multiply softmax normalization (approx=False keeps f32 parity).
    p = p * pl.reciprocal(jnp.sum(p, axis=-1, keepdims=True), approx=False)
    a2 = jnp.dot(p, v2, preferred_element_type=jnp.float32)                 # (H*BS, Dh)
    # merge heads back to (BS, D)
    a = jnp.concatenate([a2[hh * BS:(hh + 1) * BS, :] for hh in range(H)], axis=1)
    attn = jnp.dot(a, wo, preferred_element_type=jnp.float32) + bo
    h = _add_layernorm(h, attn, ln1_g, ln1_b)

    # ---- feed-forward (the (B*S, FF) intermediate never leaves VMEM) ----
    w1b = w1b_ref[0]                                                        # (D+1, FF)
    ff = jnp.dot(h, w1b[:D, :], preferred_element_type=jnp.float32) + w1b[D:D + 1, :]
    ff = _gelu_exact(ff)
    # w2 is stored transposed (D, FF): contract last dims (lane-dense DMA + q@k^T pattern).
    ff = jax.lax.dot_general(ff, w2t_ref[0], (((1,), (1,)), ((), ())),
                             preferred_element_type=jnp.float32) + b2
    h = _add_layernorm(h, ff, ln2_g, ln2_b)
    h_ref[...] = h

    # ---- last layer only: mean-pool over seq, final LayerNorm, output head ----
    @pl.when(l == pl.num_programs(0) - 1)
    def _():
        pooled = jnp.dot(pool_ref[...], h, preferred_element_type=jnp.float32)   # (B, D)
        y = _layernorm(pooled, fln_ref[0:1, :], fln_ref[1:2, :])
        out = jnp.dot(y, head_w_ref[...], preferred_element_type=jnp.float32) + head_b_ref[...]
        o_ref[...] = out.astype(o_ref.dtype)


def pallas_transformer_forward(x, packed, *, num_heads):
    """x: (B, S, F); packed: stacked/lane-dense params from pack_params()."""
    B, S, F = x.shape
    D = packed["embed_w"].shape[1]
    L = packed["w2t"].shape[0]
    O = packed["out_w"].shape[1]
    H = num_heads
    assert D % H == 0
    BS = B * S
    HBS = H * BS

    x2 = x.reshape(BS, F)
    posb2 = jnp.tile(packed["posb"], (B, 1))                                # (BS, D)

    # Layer-invariant constants, hoisted out of the per-step body (perf review item).
    grp = np.arange(HBS) // S                                               # (head, batch) group
    attn_bias = jnp.asarray(np.where(grp[:, None] == grp[None, :], 0.0, -1e30), np.float32)
    pool_np = np.zeros((B, BS), np.float32)
    for b in range(B):
        pool_np[b, b * S:(b + 1) * S] = 1.0 / S
    pool = jnp.asarray(pool_np)

    const_inputs = [x2, posb2, packed["embed_w"], attn_bias, pool,
                    packed["fln"], packed["out_w"], packed["out_b"]]
    layer_inputs = [packed["w_attn"], packed["w1b"], packed["w2t"], packed["slab"]]

    def const_spec(a):
        zeros = (0,) * a.ndim
        return pl.BlockSpec(tuple(a.shape), lambda l, _z=zeros: _z)

    def layer_spec(a):
        tail = (0,) * (a.ndim - 1)
        return pl.BlockSpec((1,) + tuple(a.shape[1:]), lambda l, _t=tail: (l,) + _t)

    in_specs = [const_spec(a) for a in const_inputs] + [layer_spec(a) for a in layer_inputs]

    kernel = functools.partial(_fused_encoder_kernel, H=H)
    return pl.pallas_call(
        kernel,
        out_shape=jax.ShapeDtypeStruct((B, O), x.dtype),
        grid=(L,),
        in_specs=in_specs,
        out_specs=pl.BlockSpec((B, O), lambda l: (0, 0)),
        scratch_shapes=[pltpu.VMEM((BS, D), jnp.float32)],
        compiler_params=pltpu.CompilerParams(
            dimension_semantics=("arbitrary",)),   # layers are sequential (carried state)
    )(*const_inputs, *layer_inputs)


# ----------------------------------------------------------------------------
# Parameter packing: canonical (PyTorch-layout) params -> lane-dense kernel layout.
# Done ONCE outside the forward pass.
# ----------------------------------------------------------------------------
def pack_params(params, num_heads):
    D = params["embed_w"].shape[1]
    H = num_heads
    Dh = D // H
    scale = 1.0 / math.sqrt(Dh)
    layers = params["layers"]
    FF = layers[0]["w1"].shape[1]
    O = params["out_w"].shape[1]
    LANES = 128
    assert 4 * D <= LANES, "small-param slab layout assumes 4*D <= 128"

    def w_attn_l(lyr):
        # fold the 1/sqrt(Dh) attention scale into the Q projection (free at pack time)
        wqkv = jnp.concatenate([lyr["in_proj_w"][:, :D] * scale, lyr["in_proj_w"][:, D:]], axis=1)
        return jnp.concatenate([wqkv, lyr["out_proj_w"]], axis=1)           # (D, 4D)

    def slab_l(lyr):
        def pad(v):
            return jnp.concatenate([v, jnp.zeros((LANES - v.shape[0],), jnp.float32)])
        bqkv = jnp.concatenate([lyr["in_proj_b"][:D] * scale, lyr["in_proj_b"][D:]])
        r0 = pad(bqkv)
        r1 = pad(jnp.concatenate([lyr["out_proj_b"], lyr["ln1_g"], lyr["ln1_b"], lyr["b2"]]))
        r2 = pad(jnp.concatenate([lyr["ln2_g"], lyr["ln2_b"]]))
        rows = jnp.stack([r0, r1, r2], axis=0)                              # (3, 128)
        return jnp.concatenate([rows, jnp.zeros((5, LANES), jnp.float32)], axis=0)  # (8, 128)

    def w1b_l(lyr):
        return jnp.concatenate([lyr["w1"], lyr["b1"].reshape(1, FF)], axis=0)   # (D+1, FF)

    def w2t_l(lyr):
        return lyr["w2"].T                                                   # (D, FF), lane-dense

    stack = lambda fn: jnp.stack([fn(lyr) for lyr in layers], axis=0)

    return dict(
        embed_w=params["embed_w"],                                           # (F, D)
        posb=params["pos"][0] + params["embed_b"][None, :],                  # (S, D): pos + embed bias
        w_attn=stack(w_attn_l),                                              # (L, D, 4D)
        w1b=stack(w1b_l),                                                    # (L, D+1, FF)
        w2t=stack(w2t_l),                                                    # (L, D, FF)
        slab=stack(slab_l),                                                  # (L, 8, 128)
        fln=jnp.stack([params["final_ln_g"], params["final_ln_b"]], axis=0),  # (2, D)
        out_w=params["out_w"],                                               # (D, O)
        out_b=params["out_b"].reshape(1, O),                                 # (1, O)
    )


# ----------------------------------------------------------------------------
# Pure-JAX reference (numerical sanity check, canonical param layout)
# ----------------------------------------------------------------------------
def _layer_norm_ref(x, g, b):
    mu = jnp.mean(x, axis=-1, keepdims=True)
    var = jnp.mean((x - mu) ** 2, axis=-1, keepdims=True)
    return (x - mu) * jax.lax.rsqrt(var + EPS) * g + b


def reference_forward(x, params, num_heads):
    B, S, F = x.shape
    D = params["embed_w"].shape[1]
    H = num_heads
    Dh = D // H
    lin = lambda t, w, b: t @ w + b

    h = lin(x, params["embed_w"], params["embed_b"]) + params["pos"]
    for layer in params["layers"]:
        qkv = lin(h, layer["in_proj_w"], layer["in_proj_b"])
        q, k, v = jnp.split(qkv, 3, axis=-1)
        heads = lambda t: t.reshape(B, S, H, Dh).transpose(0, 2, 1, 3)
        q, k, v = heads(q), heads(k), heads(v)
        s = jnp.einsum("bhqd,bhkd->bhqk", q, k) / jnp.sqrt(jnp.float32(Dh))
        p = jax.nn.softmax(s, axis=-1)
        a = jnp.einsum("bhqk,bhkd->bhqd", p, v).transpose(0, 2, 1, 3).reshape(B, S, D)
        a = lin(a, layer["out_proj_w"], layer["out_proj_b"])
        h = _layer_norm_ref(h + a, layer["ln1_g"], layer["ln1_b"])
        ff = lin(jax.nn.gelu(lin(h, layer["w1"], layer["b1"]), approximate=False),
                 layer["w2"], layer["b2"])
        h = _layer_norm_ref(h + ff, layer["ln2_g"], layer["ln2_b"])
    pooled = h.mean(axis=1)
    pooled = _layer_norm_ref(pooled, params["final_ln_g"], params["final_ln_b"])
    return lin(pooled, params["out_w"], params["out_b"])


# ----------------------------------------------------------------------------
# Deterministic synthetic parameter init (canonical / PyTorch-like layout)
# ----------------------------------------------------------------------------
def init_params(key, input_features, model_dim, num_layers, seq_length, output_dim, dim_ff):
    def dense(k, fan_in, fan_out):
        kw, kb = jax.random.split(k)
        w = jax.random.normal(kw, (fan_in, fan_out), jnp.float32) / np.sqrt(fan_in)
        b = 0.01 * jax.random.normal(kb, (fan_out,), jnp.float32)
        return w, b

    keys = jax.random.split(key, 3 + num_layers)
    params = {}
    params["embed_w"], params["embed_b"] = dense(keys[0], input_features, model_dim)
    params["pos"] = 0.02 * jax.random.normal(keys[1], (1, seq_length, model_dim), jnp.float32)
    params["out_w"], params["out_b"] = dense(keys[2], model_dim, output_dim)
    params["final_ln_g"] = jnp.ones((model_dim,), jnp.float32)
    params["final_ln_b"] = jnp.zeros((model_dim,), jnp.float32)

    layers = []
    for l in range(num_layers):
        k0, k1, k2, k3 = jax.random.split(keys[3 + l], 4)
        layer = {}
        layer["in_proj_w"], layer["in_proj_b"] = dense(k0, model_dim, 3 * model_dim)
        layer["out_proj_w"], layer["out_proj_b"] = dense(k1, model_dim, model_dim)
        layer["w1"], layer["b1"] = dense(k2, model_dim, dim_ff)
        layer["w2"], layer["b2"] = dense(k3, dim_ff, model_dim)
        layer["ln1_g"] = jnp.ones((model_dim,), jnp.float32)
        layer["ln1_b"] = jnp.zeros((model_dim,), jnp.float32)
        layer["ln2_g"] = jnp.ones((model_dim,), jnp.float32)
        layer["ln2_b"] = jnp.zeros((model_dim,), jnp.float32)
        layers.append(layer)
    params["layers"] = layers
    return params


# ----------------------------------------------------------------------------
if __name__ == "__main__":
    # Small shapes consistent with the module's forward.
    B, S, F = 2, 8, 16          # batch, seq_length, input_features
    D, H, O = 32, 4, 75         # model_dim, num_heads, output_dim (default 75)
    FF = 2048                   # nn.TransformerEncoderLayer default dim_feedforward
    NUM_LAYERS = 6              # module hard-codes 6 layers regardless of num_layers arg

    key = jax.random.PRNGKey(0)
    pkey, xkey = jax.random.split(key)
    params = init_params(pkey, F, D, NUM_LAYERS, S, O, FF)
    x = jax.random.normal(xkey, (B, S, F), jnp.float32)

    packed = pack_params(params, H)   # one-time layout packing (outside the hot path)
    fwd = jax.jit(functools.partial(pallas_transformer_forward, num_heads=H))
    out = jax.block_until_ready(fwd(x, packed))
    assert out.shape == (B, O), out.shape

    ref = reference_forward(x, params, H)
    np.testing.assert_allclose(np.asarray(out), np.asarray(ref), rtol=2e-3, atol=2e-3)

    print("KERNEL_OK")
</pallas_src>

<mosaic_0001>
module attributes {stable_mosaic.version = 11 : i64} {
  func.func @_fused_encoder_kernel(%arg0: i32, %arg1: memref<16x16xf32, #tpu.memory_space<vmem>>, %arg2: memref<16x32xf32, #tpu.memory_space<vmem>>, %arg3: memref<16x32xf32, #tpu.memory_space<vmem>>, %arg4: memref<64x64xf32, #tpu.memory_space<vmem>>, %arg5: memref<2x16xf32, #tpu.memory_space<vmem>>, %arg6: memref<2x32xf32, #tpu.memory_space<vmem>>, %arg7: memref<32x75xf32, #tpu.memory_space<vmem>>, %arg8: memref<1x75xf32, #tpu.memory_space<vmem>>, %arg9: memref<1x32x128xf32, #tpu.memory_space<vmem>>, %arg10: memref<1x33x2048xf32, #tpu.memory_space<vmem>>, %arg11: memref<1x32x2048xf32, #tpu.memory_space<vmem>>, %arg12: memref<1x8x128xf32, #tpu.memory_space<vmem>>, %arg13: memref<2x75xf32, #tpu.memory_space<vmem>>, %arg14: memref<16x32xf32, #tpu.memory_space<vmem>>) attributes {dimension_semantics = [#tpu.dimension_semantics<arbitrary>], iteration_bounds = array<i64: 6>, scalar_prefetch = 0 : i64, scratch_operands = 1 : i64, tpu.core_type = #tpu.core_type<tc>, window_params = [{pipeline_mode = #tpu.pipeline_mode<synchronous>, transform_indices = @transform_0, window_bounds = array<i64: 16, 16>}, {pipeline_mode = #tpu.pipeline_mode<synchronous>, transform_indices = @transform_1, window_bounds = array<i64: 16, 32>}, {pipeline_mode = #tpu.pipeline_mode<synchronous>, transform_indices = @transform_2, window_bounds = array<i64: 16, 32>}, {pipeline_mode = #tpu.pipeline_mode<synchronous>, transform_indices = @transform_3, window_bounds = array<i64: 64, 64>}, {pipeline_mode = #tpu.pipeline_mode<synchronous>, transform_indices = @transform_4, window_bounds = array<i64: 2, 16>}, {pipeline_mode = #tpu.pipeline_mode<synchronous>, transform_indices = @transform_5, window_bounds = array<i64: 2, 32>}, {pipeline_mode = #tpu.pipeline_mode<synchronous>, transform_indices = @transform_6, window_bounds = array<i64: 32, 75>}, {pipeline_mode = #tpu.pipeline_mode<synchronous>, transform_indices = @transform_7, window_bounds = array<i64: 1, 75>}, {transform_indices = @transform_8, window_bounds = array<i64: 1, 32, 128>}, {transform_indices = @transform_9, window_bounds = array<i64: 1, 33, 2048>}, {transform_indices = @transform_10, window_bounds = array<i64: 1, 32, 2048>}, {transform_indices = @transform_11, window_bounds = array<i64: 1, 8, 128>}, {pipeline_mode = #tpu.pipeline_mode<synchronous>, transform_indices = @transform_12, window_bounds = array<i64: 2, 75>}]} {
    %c0_i32 = arith.constant 0 : i32
    %0 = arith.cmpi eq, %arg0, %c0_i32 : i32
    %1 = arith.extui %0 : i1 to i32
    %c0_i32_0 = arith.constant 0 : i32
    %2 = arith.cmpi ne, %1, %c0_i32_0 : i32
    scf.if %2 {
      %c0_52 = arith.constant 0 : index
      %c0_53 = arith.constant 0 : index
      %156 = vector.load %arg1[%c0_52, %c0_53] : memref<16x16xf32, #tpu.memory_space<vmem>>, vector<16x16xf32>
      %c0_54 = arith.constant 0 : index
      %c0_55 = arith.constant 0 : index
      %157 = vector.load %arg3[%c0_54, %c0_55] : memref<16x32xf32, #tpu.memory_space<vmem>>, vector<16x32xf32>
      %cst_56 = arith.constant dense<0.000000e+00> : vector<16x32xf32>
      %158 = tpu.matmul %156, %157, %cst_56 {dimension_numbers = #tpu.dot_dimension_numbers<[1], [0], [0], [1], [0, 0, 1, 1], [], []>} : vector<16x16xf32>, vector<16x32xf32>, vector<16x32xf32> -> vector<16x32xf32>
      %c0_57 = arith.constant 0 : index
      %c0_58 = arith.constant 0 : index
      %159 = vector.load %arg2[%c0_57, %c0_58] : memref<16x32xf32, #tpu.memory_space<vmem>>, vector<16x32xf32>
      %160 = arith.addf %158, %159 : vector<16x32xf32>
      %c0_59 = arith.constant 0 : index
      %c0_60 = arith.constant 0 : index
      %161 = vector.load %arg14[%c0_59, %c0_60] : memref<16x32xf32, #tpu.memory_space<vmem>>, vector<16x32xf32>
      tpu.vector_store %arg14[%c0_59, %c0_60], %160 {strides = array<i32>} : memref<16x32xf32, #tpu.memory_space<vmem>>, vector<16x32xf32>,
    } else {
    }
    %c0 = arith.constant 0 : index
    %c0_1 = arith.constant 0 : index
    %3 = vector.load %arg14[%c0, %c0_1] : memref<16x32xf32, #tpu.memory_space<vmem>>, vector<16x32xf32>
    %c0_2 = arith.constant 0 : index
    %c0_3 = arith.constant 0 : index
    %c0_4 = arith.constant 0 : index
    %4 = vector.load %arg9[%c0_2, %c0_3, %c0_4] : memref<1x32x128xf32, #tpu.memory_space<vmem>>, vector<1x32x128xf32>
    %5 = vector.shape_cast %4 : vector<1x32x128xf32> to vector<32x128xf32>
    %6 = vector.extract_strided_slice %5 {offsets = [0, 0], sizes = [32, 96], strides = [1, 1]} : vector<32x128xf32> to vector<32x96xf32>
    %7 = vector.extract_strided_slice %5 {offsets = [0, 96], sizes = [32, 32], strides = [1, 1]} : vector<32x128xf32> to vector<32x32xf32>
    %c0_5 = arith.constant 0 : index
    %c0_6 = arith.constant 0 : index
    %c0_7 = arith.constant 0 : index
    %8 = vector.load %arg12[%c0_5, %c0_6, %c0_7] : memref<1x8x128xf32, #tpu.memory_space<vmem>>, vector<1x8x128xf32>
    %9 = vector.shape_cast %8 : vector<1x8x128xf32> to vector<8x128xf32>
    %10 = vector.extract_strided_slice %9 {offsets = [0, 0], sizes = [1, 96], strides = [1, 1]} : vector<8x128xf32> to vector<1x96xf32>
    %11 = vector.extract_strided_slice %9 {offsets = [1, 0], sizes = [1, 32], strides = [1, 1]} : vector<8x128xf32> to vector<1x32xf32>
    %12 = vector.extract_strided_slice %9 {offsets = [1, 32], sizes = [1, 32], strides = [1, 1]} : vector<8x128xf32> to vector<1x32xf32>
    %13 = vector.extract_strided_slice %9 {offsets = [1, 64], sizes = [1, 32], strides = [1, 1]} : vector<8x128xf32> to vector<1x32xf32>
    %14 = vector.extract_strided_slice %9 {offsets = [1, 96], sizes = [1, 32], strides = [1, 1]} : vector<8x128xf32> to vector<1x32xf32>
    %15 = vector.extract_strided_slice %9 {offsets = [2, 0], sizes = [1, 32], strides = [1, 1]} : vector<8x128xf32> to vector<1x32xf32>
    %16 = vector.extract_strided_slice %9 {offsets = [2, 32], sizes = [1, 32], strides = [1, 1]} : vector<8x128xf32> to vector<1x32xf32>
    %cst = arith.constant dense<0.000000e+00> : vector<16x96xf32>
    %17 = tpu.matmul %3, %6, %cst {dimension_numbers = #tpu.dot_dimension_numbers<[1], [0], [0], [1], [0, 0, 1, 1], [], []>} : vector<16x32xf32>, vector<32x96xf32>, vector<16x96xf32> -> vector<16x96xf32>
    %18 = vector.broadcast %10 : vector<1x96xf32> to vector<16x96xf32>
    %19 = arith.addf %17, %18 : vector<16x96xf32>
    %20 = vector.extract_strided_slice %19 {offsets = [0, 0], sizes = [16, 8], strides = [1, 1]} : vector<16x96xf32> to vector<16x8xf32>
    %21 = vector.extract_strided_slice %19 {offsets = [0, 8], sizes = [16, 8], strides = [1, 1]} : vector<16x96xf32> to vector<16x8xf32>
    %22 = vector.extract_strided_slice %19 {offsets = [0, 16], sizes = [16, 8], strides = [1, 1]} : vector<16x96xf32> to vector<16x8xf32>
    %23 = vector.extract_strided_slice %19 {offsets = [0, 24], sizes = [16, 8], strides = [1, 1]} : vector<16x96xf32> to vector<16x8xf32>
    %24 = tpu.concatenate %20, %21, %22, %23 in 0 : vector<16x8xf32>, vector<16x8xf32>, vector<16x8xf32>, vector<16x8xf32> -> vector<64x8xf32>
    %25 = vector.extract_strided_slice %19 {offsets = [0, 32], sizes = [16, 8], strides = [1, 1]} : vector<16x96xf32> to vector<16x8xf32>
    %26 = vector.extract_strided_slice %19 {offsets = [0, 40], sizes = [16, 8], strides = [1, 1]} : vector<16x96xf32> to vector<16x8xf32>
    %27 = vector.extract_strided_slice %19 {offsets = [0, 48], sizes = [16, 8], strides = [1, 1]} : vector<16x96xf32> to vector<16x8xf32>
    %28 = vector.extract_strided_slice %19 {offsets = [0, 56], sizes = [16, 8], strides = [1, 1]} : vector<16x96xf32> to vector<16x8xf32>
    %29 = tpu.concatenate %25, %26, %27, %28 in 0 : vector<16x8xf32>, vector<16x8xf32>, vector<16x8xf32>, vector<16x8xf32> -> vector<64x8xf32>
    %30 = vector.extract_strided_slice %19 {offsets = [0, 64], sizes = [16, 8], strides = [1, 1]} : vector<16x96xf32> to vector<16x8xf32>
    %31 = vector.extract_strided_slice %19 {offsets = [0, 72], sizes = [16, 8], strides = [1, 1]} : vector<16x96xf32> to vector<16x8xf32>
    %32 = vector.extract_strided_slice %19 {offsets = [0, 80], sizes = [16, 8], strides = [1, 1]} : vector<16x96xf32> to vector<16x8xf32>
    %33 = vector.extract_strided_slice %19 {offsets = [0, 88], sizes = [16, 8], strides = [1, 1]} : vector<16x96xf32> to vector<16x8xf32>
    %34 = tpu.concatenate %30, %31, %32, %33 in 0 : vector<16x8xf32>, vector<16x8xf32>, vector<16x8xf32>, vector<16x8xf32> -> vector<64x8xf32>
    %cst_8 = arith.constant dense<0.000000e+00> : vector<64x64xf32>
    %35 = tpu.matmul %24, %29, %cst_8 {dimension_numbers = #tpu.dot_dimension_numbers<[1], [1], [0], [0], [0, 0, 1, 0], [], []>} : vector<64x8xf32>, vector<64x8xf32>, vector<64x64xf32> -> vector<64x64xf32>
    %c0_9 = arith.constant 0 : index
    %c0_10 = arith.constant 0 : index
    %36 = vector.load %arg4[%c0_9, %c0_10] : memref<64x64xf32, #tpu.memory_space<vmem>>, vector<64x64xf32>
    %37 = arith.addf %35, %36 : vector<64x64xf32>
    %cst_11 = arith.constant dense<0xFF800000> : vector<64xf32>
    %38 = vector.multi_reduction <maximumf>, %37, %cst_11 [1] : vector<64x64xf32> to vector<64xf32>
    %39 = vector.shape_cast %38 : vector<64xf32> to vector<64x1xf32>
    %40 = vector.broadcast %39 : vector<64x1xf32> to vector<64x64xf32>
    %41 = arith.subf %37, %40 : vector<64x64xf32>
    %42 = math.exp %41 : vector<64x64xf32>
    %cst_12 = arith.constant dense<0.000000e+00> : vector<64xf32>
    %43 = vector.multi_reduction <add>, %42, %cst_12 [1] : vector<64x64xf32> to vector<64xf32>
    %44 = vector.shape_cast %43 : vector<64xf32> to vector<64x1xf32>
    %45 = tpu.reciprocal %44 : vector<64x1xf32> -> vector<64x1xf32>
    %46 = vector.broadcast %45 : vector<64x1xf32> to vector<64x64xf32>
    %47 = arith.mulf %42, %46 : vector<64x64xf32>
    %cst_13 = arith.constant dense<0.000000e+00> : vector<64x8xf32>
    %48 = tpu.matmul %47, %34, %cst_13 {dimension_numbers = #tpu.dot_dimension_numbers<[1], [0], [0], [1], [0, 0, 1, 1], [], []>} : vector<64x64xf32>, vector<64x8xf32>, vector<64x8xf32> -> vector<64x8xf32>
    %49 = vector.extract_strided_slice %48 {offsets = [0, 0], sizes = [16, 8], strides = [1, 1]} : vector<64x8xf32> to vector<16x8xf32>
    %50 = vector.extract_strided_slice %48 {offsets = [16, 0], sizes = [16, 8], strides = [1, 1]} : vector<64x8xf32> to vector<16x8xf32>
    %51 = vector.extract_strided_slice %48 {offsets = [32, 0], sizes = [16, 8], strides = [1, 1]} : vector<64x8xf32> to vector<16x8xf32>
    %52 = vector.extract_strided_slice %48 {offsets = [48, 0], sizes = [16, 8], strides = [1, 1]} : vector<64x8xf32> to vector<16x8xf32>
    %53 = tpu.concatenate %49, %50, %51, %52 in 1 : vector<16x8xf32>, vector<16x8xf32>, vector<16x8xf32>, vector<16x8xf32> -> vector<16x32xf32>
    %cst_14 = arith.constant dense<0.000000e+00> : vector<16x32xf32>
    %54 = tpu.matmul %53, %7, %cst_14 {dimension_numbers = #tpu.dot_dimension_numbers<[1], [0], [0], [1], [0, 0, 1, 1], [], []>} : vector<16x32xf32>, vector<32x32xf32>, vector<16x32xf32> -> vector<16x32xf32>
    %55 = vector.broadcast %11 : vector<1x32xf32> to vector<16x32xf32>
    %56 = arith.addf %54, %55 : vector<16x32xf32>
    %57 = arith.addf %3, %56 : vector<16x32xf32>
    %cst_15 = arith.constant dense<0.000000e+00> : vector<16xf32>
    %58 = vector.multi_reduction <add>, %57, %cst_15 [1] : vector<16x32xf32> to vector<16xf32>
    %59 = vector.shape_cast %58 : vector<16xf32> to vector<16x1xf32>
    %cst_16 = arith.constant 3.200000e+01 : f32
    %60 = vector.broadcast %cst_16 : f32 to vector<16x1xf32>
    %61 = arith.divf %59, %60 : vector<16x1xf32>
    %62 = vector.broadcast %61 : vector<16x1xf32> to vector<16x32xf32>
    %63 = arith.subf %57, %62 : vector<16x32xf32>
    %64 = arith.mulf %63, %63 : vector<16x32xf32>
    %cst_17 = arith.constant dense<0.000000e+00> : vector<16xf32>
    %65 = vector.multi_reduction <add>, %64, %cst_17 [1] : vector<16x32xf32> to vector<16xf32>
    %66 = vector.shape_cast %65 : vector<16xf32> to vector<16x1xf32>
    %cst_18 = arith.constant 3.200000e+01 : f32
    %67 = vector.broadcast %cst_18 : f32 to vector<16x1xf32>
    %68 = arith.divf %66, %67 : vector<16x1xf32>
    %cst_19 = arith.constant 9.99999974E-6 : f32
    %69 = vector.broadcast %cst_19 : f32 to vector<16x1xf32>
    %70 = arith.addf %68, %69 : vector<16x1xf32>
    %71 = math.rsqrt %70 : vector<16x1xf32>
    %72 = vector.broadcast %71 : vector<16x1xf32> to vector<16x32xf32>
    %73 = arith.mulf %63, %72 : vector<16x32xf32>
    %74 = vector.broadcast %12 : vector<1x32xf32> to vector<16x32xf32>
    %75 = arith.mulf %73, %74 : vector<16x32xf32>
    %76 = vector.broadcast %13 : vector<1x32xf32> to vector<16x32xf32>
    %77 = arith.addf %75, %76 : vector<16x32xf32>
    %c0_20 = arith.constant 0 : index
    %c0_21 = arith.constant 0 : index
    %c0_22 = arith.constant 0 : index
    %78 = vector.load %arg10[%c0_20, %c0_21, %c0_22] : memref<1x33x2048xf32, #tpu.memory_space<vmem>>, vector<1x33x2048xf32>
    %79 = vector.shape_cast %78 : vector<1x33x2048xf32> to vector<33x2048xf32>
    %80 = vector.extract_strided_slice %79 {offsets = [0, 0], sizes = [32, 2048], strides = [1, 1]} : vector<33x2048xf32> to vector<32x2048xf32>
    %cst_23 = arith.constant dense<0.000000e+00> : vector<16x2048xf32>
    %81 = tpu.matmul %77, %80, %cst_23 {dimension_numbers = #tpu.dot_dimension_numbers<[1], [0], [0], [1], [0, 0, 1, 1], [], []>} : vector<16x32xf32>, vector<32x2048xf32>, vector<16x2048xf32> -> vector<16x2048xf32>
    %82 = vector.extract_strided_slice %79 {offsets = [32, 0], sizes = [1, 2048], strides = [1, 1]} : vector<33x2048xf32> to vector<1x2048xf32>
    %83 = vector.broadcast %82 : vector<1x2048xf32> to vector<16x2048xf32>
    %84 = arith.addf %81, %83 : vector<16x2048xf32>
    %cst_24 = arith.constant 5.000000e-01 : f32
    %85 = vector.broadcast %cst_24 : f32 to vector<16x2048xf32>
    %86 = arith.mulf %85, %84 : vector<16x2048xf32>
    %cst_25 = arith.constant 0.707106769 : f32
    %87 = vector.broadcast %cst_25 : f32 to vector<16x2048xf32>
    %88 = arith.mulf %84, %87 : vector<16x2048xf32>
    %cst_26 = arith.constant 0.000000e+00 : f32
    %89 = vector.broadcast %cst_26 : f32 to vector<16x2048xf32>
    %90 = arith.cmpf oge, %88, %89 : vector<16x2048xf32>
    %cst_27 = arith.constant 1.000000e+00 : f32
    %cst_28 = arith.constant -1.000000e+00 : f32
    %91 = vector.broadcast %cst_27 : f32 to vector<16x2048xf32>
    %92 = vector.broadcast %cst_28 : f32 to vector<16x2048xf32>
    %93 = arith.select %90, %91, %92 : vector<16x2048xi1>, vector<16x2048xf32>
    %94 = math.absf %88 : vector<16x2048xf32>
    %cst_29 = arith.constant 0.327591091 : f32
    %95 = vector.broadcast %cst_29 : f32 to vector<16x2048xf32>
    %96 = arith.mulf %95, %94 : vector<16x2048xf32>
    %cst_30 = arith.constant 1.000000e+00 : f32
    %97 = vector.broadcast %cst_30 : f32 to vector<16x2048xf32>
    %98 = arith.addf %97, %96 : vector<16x2048xf32>
    %cst_31 = arith.constant 1.000000e+00 : f32
    %99 = vector.broadcast %cst_31 : f32 to vector<16x2048xf32>
    %100 = arith.divf %99, %98 : vector<16x2048xf32>
    %cst_32 = arith.constant 1.06140542 : f32
    %101 = vector.broadcast %cst_32 : f32 to vector<16x2048xf32>
    %102 = arith.mulf %101, %100 : vector<16x2048xf32>
    %cst_33 = arith.constant -1.45315206 : f32
    %103 = vector.broadcast %cst_33 : f32 to vector<16x2048xf32>
    %104 = arith.addf %102, %103 : vector<16x2048xf32>
    %105 = arith.mulf %104, %100 : vector<16x2048xf32>
    %cst_34 = arith.constant 1.42141378 : f32
    %106 = vector.broadcast %cst_34 : f32 to vector<16x2048xf32>
    %107 = arith.addf %105, %106 : vector<16x2048xf32>
    %108 = arith.mulf %107, %100 : vector<16x2048xf32>
    %cst_35 = arith.constant -0.284496725 : f32
    %109 = vector.broadcast %cst_35 : f32 to vector<16x2048xf32>
    %110 = arith.addf %108, %109 : vector<16x2048xf32>
    %111 = arith.mulf %110, %100 : vector<16x2048xf32>
    %cst_36 = arith.constant 0.254829586 : f32
    %112 = vector.broadcast %cst_36 : f32 to vector<16x2048xf32>
    %113 = arith.addf %111, %112 : vector<16x2048xf32>
    %114 = arith.mulf %113, %100 : vector<16x2048xf32>
    %cst_37 = arith.constant 0.000000e+00 : f32
    %115 = vector.broadcast %cst_37 : f32 to vector<16x2048xf32>
    %116 = arith.subf %115, %94 : vector<16x2048xf32>
    %117 = arith.mulf %116, %94 : vector<16x2048xf32>
    %118 = math.exp %117 : vector<16x2048xf32>
    %119 = arith.mulf %114, %118 : vector<16x2048xf32>
    %cst_38 = arith.constant 1.000000e+00 : f32
    %120 = vector.broadcast %cst_38 : f32 to vector<16x2048xf32>
    %121 = arith.subf %120, %119 : vector<16x2048xf32>
    %122 = arith.mulf %93, %121 : vector<16x2048xf32>
    %cst_39 = arith.constant 1.000000e+00 : f32
    %123 = vector.broadcast %cst_39 : f32 to vector<16x2048xf32>
    %124 = arith.addf %123, %122 : vector<16x2048xf32>
    %125 = arith.mulf %86, %124 : vector<16x2048xf32>
    %c0_40 = arith.constant 0 : index
    %c0_41 = arith.constant 0 : index
    %c0_42 = arith.constant 0 : index
    %126 = vector.load %arg11[%c0_40, %c0_41, %c0_42] : memref<1x32x2048xf32, #tpu.memory_space<vmem>>, vector<1x32x2048xf32>
    %127 = vector.shape_cast %126 : vector<1x32x2048xf32> to vector<32x2048xf32>
    %cst_43 = arith.constant dense<0.000000e+00> : vector<16x32xf32>
    %128 = tpu.matmul %125, %127, %cst_43 {dimension_numbers = #tpu.dot_dimension_numbers<[1], [1], [0], [0], [0, 0, 1, 0], [], []>} : vector<16x2048xf32>, vector<32x2048xf32>, vector<16x32xf32> -> vector<16x32xf32>
    %129 = vector.broadcast %14 : vector<1x32xf32> to vector<16x32xf32>
    %130 = arith.addf %128, %129 : vector<16x32xf32>
    %131 = arith.addf %77, %130 : vector<16x32xf32>
    %cst_44 = arith.constant dense<0.000000e+00> : vector<16xf32>
    %132 = vector.multi_reduction <add>, %131, %cst_44 [1] : vector<16x32xf32> to vector<16xf32>
    %133 = vector.shape_cast %132 : vector<16xf32> to vector<16x1xf32>
    %cst_45 = arith.constant 3.200000e+01 : f32
    %134 = vector.broadcast %cst_45 : f32 to vector<16x1xf32>
    %135 = arith.divf %133, %134 : vector<16x1xf32>
    %136 = vector.broadcast %135 : vector<16x1xf32> to vector<16x32xf32>
    %137 = arith.subf %131, %136 : vector<16x32xf32>
    %138 = arith.mulf %137, %137 : vector<16x32xf32>
    %cst_46 = arith.constant dense<0.000000e+00> : vector<16xf32>
    %139 = vector.multi_reduction <add>, %138, %cst_46 [1] : vector<16x32xf32> to vector<16xf32>
    %140 = vector.shape_cast %139 : vector<16xf32> to vector<16x1xf32>
    %cst_47 = arith.constant 3.200000e+01 : f32
    %141 = vector.broadcast %cst_47 : f32 to vector<16x1xf32>
    %142 = arith.divf %140, %141 : vector<16x1xf32>
    %cst_48 = arith.constant 9.99999974E-6 : f32
    %143 = vector.broadcast %cst_48 : f32 to vector<16x1xf32>
    %144 = arith.addf %142, %143 : vector<16x1xf32>
    %145 = math.rsqrt %144 : vector<16x1xf32>
    %146 = vector.broadcast %145 : vector<16x1xf32> to vector<16x32xf32>
    %147 = arith.mulf %137, %146 : vector<16x32xf32>
    %148 = vector.broadcast %15 : vector<1x32xf32> to vector<16x32xf32>
    %149 = arith.mulf %147, %148 : vector<16x32xf32>
    %150 = vector.broadcast %16 : vector<1x32xf32> to vector<16x32xf32>
    %151 = arith.addf %149, %150 : vector<16x32xf32>
    %c0_49 = arith.constant 0 : index
    %c0_50 = arith.constant 0 : index
    %152 = vector.load %arg14[%c0_49, %c0_50] : memref<16x32xf32, #tpu.memory_space<vmem>>, vector<16x32xf32>
    tpu.vector_store %arg14[%c0_49, %c0_50], %151 {strides = array<i32>} : memref<16x32xf32, #tpu.memory_space<vmem>>, vector<16x32xf32>,
    %c5_i32 = arith.constant 5 : i32
    %153 = arith.cmpi eq, %arg0, %c5_i32 : i32
    %154 = arith.extui %153 : i1 to i32
    %c0_i32_51 = arith.constant 0 : i32
    %155 = arith.cmpi ne, %154, %c0_i32_51 : i32
    scf.if %155 {
      %c0_52 = arith.constant 0 : index
      %c0_53 = arith.constant 0 : index
      %156 = vector.load %arg5[%c0_52, %c0_53] : memref<2x16xf32, #tpu.memory_space<vmem>>, vector<2x16xf32>
      %cst_54 = arith.constant dense<0.000000e+00> : vector<2x32xf32>
      %157 = tpu.matmul %156, %151, %cst_54 {dimension_numbers = #tpu.dot_dimension_numbers<[1], [0], [0], [1], [0, 0, 1, 1], [], []>} : vector<2x16xf32>, vector<16x32xf32>, vector<2x32xf32> -> vector<2x32xf32>
      %c0_55 = arith.constant 0 : index
      %c0_56 = arith.constant 0 : index
      %158 = vector.load %arg6[%c0_55, %c0_56] : memref<2x32xf32, #tpu.memory_space<vmem>>, vector<1x32xf32>
      %c1 = arith.constant 1 : index
      %c0_57 = arith.constant 0 : index
      %159 = vector.load %arg6[%c1, %c0_57] : memref<2x32xf32, #tpu.memory_space<vmem>>, vector<1x32xf32>
      %cst_58 = arith.constant dense<0.000000e+00> : vector<2xf32>
      %160 = vector.multi_reduction <add>, %157, %cst_58 [1] : vector<2x32xf32> to vector<2xf32>
      %161 = vector.shape_cast %160 : vector<2xf32> to vector<2x1xf32>
      %cst_59 = arith.constant 3.200000e+01 : f32
      %162 = vector.broadcast %cst_59 : f32 to vector<2x1xf32>
      %163 = arith.divf %161, %162 : vector<2x1xf32>
      %164 = vector.broadcast %163 : vector<2x1xf32> to vector<2x32xf32>
      %165 = arith.subf %157, %164 : vector<2x32xf32>
      %166 = arith.mulf %165, %165 : vector<2x32xf32>
      %cst_60 = arith.constant dense<0.000000e+00> : vector<2xf32>
      %167 = vector.multi_reduction <add>, %166, %cst_60 [1] : vector<2x32xf32> to vector<2xf32>
      %168 = vector.shape_cast %167 : vector<2xf32> to vector<2x1xf32>
      %cst_61 = arith.constant 3.200000e+01 : f32
      %169 = vector.broadcast %cst_61 : f32 to vector<2x1xf32>
      %170 = arith.divf %168, %169 : vector<2x1xf32>
      %cst_62 = arith.constant 9.99999974E-6 : f32
      %171 = vector.broadcast %cst_62 : f32 to vector<2x1xf32>
      %172 = arith.addf %170, %171 : vector<2x1xf32>
      %173 = math.rsqrt %172 : vector<2x1xf32>
      %174 = vector.broadcast %173 : vector<2x1xf32> to vector<2x32xf32>
      %175 = arith.mulf %165, %174 : vector<2x32xf32>
      %176 = vector.broadcast %158 : vector<1x32xf32> to vector<2x32xf32>
      %177 = arith.mulf %175, %176 : vector<2x32xf32>
      %178 = vector.broadcast %159 : vector<1x32xf32> to vector<2x32xf32>
      %179 = arith.addf %177, %178 : vector<2x32xf32>
      %c0_63 = arith.constant 0 : index
      %c0_64 = arith.constant 0 : index
      %180 = vector.load %arg7[%c0_63, %c0_64] : memref<32x75xf32, #tpu.memory_space<vmem>>, vector<32x75xf32>
      %cst_65 = arith.constant dense<0.000000e+00> : vector<2x75xf32>
      %181 = tpu.matmul %179, %180, %cst_65 {dimension_numbers = #tpu.dot_dimension_numbers<[1], [0], [0], [1], [0, 0, 1, 1], [], []>} : vector<2x32xf32>, vector<32x75xf32>, vector<2x75xf32> -> vector<2x75xf32>
      %c0_66 = arith.constant 0 : index
      %c0_67 = arith.constant 0 : index
      %182 = vector.load %arg8[%c0_66, %c0_67] : memref<1x75xf32, #tpu.memory_space<vmem>>, vector<1x75xf32>
      %183 = vector.broadcast %182 : vector<1x75xf32> to vector<2x75xf32>
      %184 = arith.addf %181, %183 : vector<2x75xf32>
      %c0_68 = arith.constant 0 : index
      %c0_69 = arith.constant 0 : index
      %185 = vector.load %arg13[%c0_68, %c0_69] : memref<2x75xf32, #tpu.memory_space<vmem>>, vector<2x75xf32>
      tpu.vector_store %arg13[%c0_68, %c0_69], %184 {strides = array<i32>} : memref<2x75xf32, #tpu.memory_space<vmem>>, vector<2x75xf32>,
    } else {
    }
    return
  }
  func.func @transform_0(%arg0: i32) -> (i32, i32) {
    %c0_i32 = arith.constant 0 : i32
    %c0_i32_0 = arith.constant 0 : i32
    %c0_i32_1 = arith.constant 0 : i32
    return %c0_i32, %c0_i32_0 : i32, i32
  }
  func.func @transform_1(%arg0: i32) -> (i32, i32) {
    %c0_i32 = arith.constant 0 : i32
    %c0_i32_0 = arith.constant 0 : i32
    %c0_i32_1 = arith.constant 0 : i32
    return %c0_i32, %c0_i32_0 : i32, i32
  }
  func.func @transform_2(%arg0: i32) -> (i32, i32) {
    %c0_i32 = arith.constant 0 : i32
    %c0_i32_0 = arith.constant 0 : i32
    %c0_i32_1 = arith.constant 0 : i32
    return %c0_i32, %c0_i32_0 : i32, i32
  }
  func.func @transform_3(%arg0: i32) -> (i32, i32) {
    %c0_i32 = arith.constant 0 : i32
    %c0_i32_0 = arith.constant 0 : i32
    %c0_i32_1 = arith.constant 0 : i32
    return %c0_i32, %c0_i32_0 : i32, i32
  }
  func.func @transform_4(%arg0: i32) -> (i32, i32) {
    %c0_i32 = arith.constant 0 : i32
    %c0_i32_0 = arith.constant 0 : i32
    %c0_i32_1 = arith.constant 0 : i32
    return %c0_i32, %c0_i32_0 : i32, i32
  }
  func.func @transform_5(%arg0: i32) -> (i32, i32) {
    %c0_i32 = arith.constant 0 : i32
    %c0_i32_0 = arith.constant 0 : i32
    %c0_i32_1 = arith.constant 0 : i32
    return %c0_i32, %c0_i32_0 : i32, i32
  }
  func.func @transform_6(%arg0: i32) -> (i32, i32) {
    %c0_i32 = arith.constant 0 : i32
    %c0_i32_0 = arith.constant 0 : i32
    %c0_i32_1 = arith.constant 0 : i32
    return %c0_i32, %c0_i32_0 : i32, i32
  }
  func.func @transform_7(%arg0: i32) -> (i32, i32) {
    %c0_i32 = arith.constant 0 : i32
    %c0_i32_0 = arith.constant 0 : i32
    %c0_i32_1 = arith.constant 0 : i32
    return %c0_i32, %c0_i32_0 : i32, i32
  }
  func.func @transform_8(%arg0: i32) -> (i32, i32, i32) {
    %c0_i32 = arith.constant 0 : i32
    %c0_i32_0 = arith.constant 0 : i32
    %c0_i32_1 = arith.constant 0 : i32
    return %arg0, %c0_i32, %c0_i32_0 : i32, i32, i32
  }
  func.func @transform_9(%arg0: i32) -> (i32, i32, i32) {
    %c0_i32 = arith.constant 0 : i32
    %c0_i32_0 = arith.constant 0 : i32
    %c0_i32_1 = arith.constant 0 : i32
    return %arg0, %c0_i32, %c0_i32_0 : i32, i32, i32
  }
  func.func @transform_10(%arg0: i32) -> (i32, i32, i32) {
    %c0_i32 = arith.constant 0 : i32
    %c0_i32_0 = arith.constant 0 : i32
    %c0_i32_1 = arith.constant 0 : i32
    return %arg0, %c0_i32, %c0_i32_0 : i32, i32, i32
  }
  func.func @transform_11(%arg0: i32) -> (i32, i32, i32) {
    %c0_i32 = arith.constant 0 : i32
    %c0_i32_0 = arith.constant 0 : i32
    %c0_i32_1 = arith.constant 0 : i32
    return %arg0, %c0_i32, %c0_i32_0 : i32, i32, i32
  }
  func.func @transform_12(%arg0: i32) -> (i32, i32) {
    %c0_i32 = arith.constant 0 : i32
    %c0_i32_0 = arith.constant 0 : i32
    %c0_i32_1 = arith.constant 0 : i32
    return %c0_i32, %c0_i32_0 : i32, i32
  }
}

</mosaic_0001>

<llo_original>
// kernel: pallas_transformer_forward.1
$region0: #{pallas_transformer_forward.1}
  #allocation0 [shape = 'u32[]', space=smem, size = 0x4, offset = 0x4, fixed_abs, tag = 'smem constant byte address 0x4 - core index']
  #allocation1 [shape = 'u32[144,128]{1,0:T(1,128)}', space=vmem, size = 0x12000, scoped, tag = 'internal scratch']
  #allocation2 [shape = 'f32[16,32]{1,0:T(8,128)}', space=vmem, size = 0x2000, scoped, tag = 'scratch operand']
  %s0 = inlined_call_operand.hbm [shape: f32[16,16], index: 0, kind: input, shape index: {}]
  %s1 = inlined_call_operand.vmem [shape: f32[16,32], index: 1, kind: input, shape index: {}]
  %s2 = inlined_call_operand.hbm [shape: f32[16,32], index: 2, kind: input, shape index: {}]
  %s3 = inlined_call_operand.hbm [shape: f32[64,64], index: 3, kind: input, shape index: {}]
  %s4 = inlined_call_operand.hbm [shape: f32[2,16], index: 4, kind: input, shape index: {}]
  %s5 = inlined_call_operand.hbm [shape: f32[2,32], index: 5, kind: input, shape index: {}]
  %s6 = inlined_call_operand.hbm [shape: f32[32,75], index: 6, kind: input, shape index: {}]
  %s7 = inlined_call_operand.hbm [shape: f32[1,75], index: 7, kind: input, shape index: {}]
  %s8 = inlined_call_operand.hbm [shape: f32[6,32,128], index: 8, kind: input, shape index: {}]
  %s9 = inlined_call_operand.hbm [shape: f32[6,33,2048], index: 9, kind: input, shape index: {}]
  %s10 = inlined_call_operand.hbm [shape: f32[6,32,2048], index: 10, kind: input, shape index: {}]
  %s11 = inlined_call_operand.hbm [shape: f32[6,8,128], index: 11, kind: input, shape index: {}]
  %s12 = inlined_call_operand.hbm [shape: f32[2,75], index: 12, kind: output, shape index: {}]
  %s13 = sld [smem:[#allocation0]]
  $region133: #{pallas_transformer_forward.1} parent=0
    _
  %s15 = ssub.s32 1, %s13
  %s16 = scalar_select 0, %s15, %s13
  $region1: #{pallas_transformer_forward.1} parent=0
    #allocation3 [shape = 'u8[8192]{0}', space=vmem, size = 0x2000, scoped, tag = 'input window, operand 0, single buffered']
    #allocation4 [shape = 's32[2]{0}', space=sflag, size = 0x8, scoped, tag = 'scoped memory for pallas_transformer_forward.1']
    #allocation5 [shape = 's32[2]{0}', space=sflag, size = 0x8, scoped, tag = 'scoped memory for pallas_transformer_forward.1']
    #allocation6 [shape = 'u8[8192]{0}', space=vmem, size = 0x2000, scoped, tag = 'input window, operand 2, single buffered']
    #allocation7 [shape = 's32[1]{0}', space=sflag, size = 0x4, scoped, tag = 'scoped memory for pallas_transformer_forward.1']
    #allocation8 [shape = 'u8[32768]{0}', space=vmem, size = 0x8000, scoped, tag = 'input window, operand 3, single buffered']
    #allocation9 [shape = 'u8[1024]{0}', space=vmem, size = 0x400, scoped, tag = 'input window, operand 4, single buffered']
    #allocation10 [shape = 's32[1]{0}', space=sflag, size = 0x4, scoped, tag = 'scoped memory for pallas_transformer_forward.1']
    #allocation11 [shape = 'u8[1024]{0}', space=vmem, size = 0x400, scoped, tag = 'input window, operand 5, single buffered']
    #allocation12 [shape = 'u8[16384]{0}', space=vmem, size = 0x4000, scoped, tag = 'input window, operand 6, single buffered']
    #allocation13 [shape = 's32[1]{0}', space=sflag, size = 0x4, scoped, tag = 'scoped memory for pallas_transformer_forward.1']
    #allocation14 [shape = 'u8[512]{0}', space=vmem, size = 0x400, scoped, tag = 'input window, operand 7, single buffered']
    #allocation15 [shape = 'u8[32768]{0}', space=vmem, size = 0x8000, scoped, tag = 'input window, operand 8']
    #allocation16 [shape = 's32[2]{0}', space=sflag, size = 0x8, scoped, tag = 'scoped memory for pallas_transformer_forward.1']
    #allocation17 [shape = 'u8[655360]{0}', space=vmem, size = 0xa0000, scoped, tag = 'input window, operand 9']
    #allocation18 [shape = 'u8[524288]{0}', space=vmem, size = 0x80000, scoped, tag = 'input window, operand 10']
    #allocation19 [shape = 's32[2]{0}', space=sflag, size = 0x8, scoped, tag = 'scoped memory for pallas_transformer_forward.1']
    #allocation20 [shape = 'u8[8192]{0}', space=vmem, size = 0x2000, scoped, tag = 'input window, operand 11']
    #allocation21 [shape = 'u8[1024]{0}', space=vmem, size = 0x400, scoped, tag = 'output window, operand 0, single buffered']
    %17 = vsyncpa [#allocation4], 0
    %18 = vsyncpa [#allocation7], 0
    %19 = vsyncpa [#allocation10], 0
    %20 = vsyncpa [#allocation13], 0
    %21 = vsyncpa [#allocation16], 0
    %s22 = scalar_lea.sflag [#allocation16], 1
    %23 = vsyncpa %s22, 0
    %24 = vsyncpa [#allocation19], 0
    %s25 = scalar_lea.sflag [#allocation19], 1
    %26 = vsyncpa %s25, 0
    %27 = vsyncpa [#allocation5], 0
    loop: start=0, step=1, limit=8
    $region2: #{pallas_transformer_forward.1} parent=1 // loop_pre_header
      _
    $region3: #{pallas_transformer_forward.1} parent=1 // loop_header
      %s29 = sphi 0, %s33
      %p30 = scmp.ge.s32.totalorder %s29, 8
      %s37 = sphi 0, %s37
      %s39 = sphi 0, %s37
      %s40 = sphi 0, %s39
      %s54 = sphi 0, %s40
      %s58 = sphi 0, %s58
      %s60 = sphi 0, %s58
      %s61 = sphi 0, %s60
      %s75 = sphi 0, %s61
      %s79 = sphi 0, %s79
      %s81 = sphi 0, %s79
      %s82 = sphi 0, %s81
      %s96 = sphi 0, %s82
      %s100 = sphi 0, %s100
      %s102 = sphi 0, %s100
      %s103 = sphi 0, %s102
      %s117 = sphi 0, %s103
      %s121 = sphi 0, %s121
      %s123 = sphi 0, %s121
      %s124 = sphi 0, %s123
      %s138 = sphi 0, %s124
      %s142 = sphi 0, %s142
      %s144 = sphi 0, %s142
      %s145 = sphi 0, %s144
      %s159 = sphi 0, %s145
      %s163 = sphi 0, %s163
      %s165 = sphi 0, %s163
      %s166 = sphi 0, %s165
      %s180 = sphi 0, %s166
      %s184 = sphi 0, %s184
      %s186 = sphi 0, %s184
      %s187 = sphi 0, %s186
      %s201 = sphi 0, %s187
      %s207 = sphi 0, %s209
      %s210 = sphi 0, %s207
      %s211 = sphi 0, %s210
      %s227 = sphi 0, %s211
      %s233 = sphi 0, %s235
      %s236 = sphi 0, %s233
      %s237 = sphi 0, %s236
      %s253 = sphi 0, %s237
      %s259 = sphi 0, %s261
      %s262 = sphi 0, %s259
      %s263 = sphi 0, %s262
      %s279 = sphi 0, %s263
      %s285 = sphi 0, %s287
      %s288 = sphi 0, %s285
      %s289 = sphi 0, %s288
      %s305 = sphi 0, %s289
      %s309 = sphi 0, %s309
      %s311 = sphi 0, %s309
      %s312 = sphi 0, %s311
      %s326 = sphi 0, %s312
    $region4: #{pallas_transformer_forward.1} parent=1 // loop_header_branch
      %32 = sbr.rel (%p30) target = $region8
    $region5: #{pallas_transformer_forward.1} parent=1 // loop_body
      %s34 = ssub.s32 %s29, 1
      %s35 = ssub.s32 %s29, 2
      %s36 = sadd.s32 %s29, 1
      %s38 = sadd.s32 %s37, 1
      %p41 = scmp.eq.s32.totalorder %s29, 5
      %p42 = scmp.ne.s32.totalorder %s37, %s39
      %p43 = scmp.eq.s32.totalorder %s29, 0
      %p44 = por %p42, %p43
      %p45 = scmp.ne.s32.totalorder %s37, %s39
      %p46 = scmp.eq.s32.totalorder %s34, 5
      %p47 = por %p45, %p46
      %p48 = scmp.ne.s32.totalorder %s39, %s40
      %p49 = scmp.eq.s32.totalorder %s34, 0
      %p50 = por %p48, %p49
      %p51 = scmp.ne.s32.totalorder %s39, %s40
      %p52 = scmp.eq.s32.totalorder %s35, 5
      %p53 = por %p51, %p52
      %p55 = scmp.ne.s32.totalorder %s40, %s54
      %p56 = scmp.eq.s32.totalorder %s35, 0
      %p57 = por %p55, %p56
      %s59 = sadd.s32 %s58, 1
      %p62 = scmp.eq.s32.totalorder %s29, 5
      %p63 = scmp.ne.s32.totalorder %s58, %s60
      %p64 = scmp.eq.s32.totalorder %s29, 0
      %p65 = por %p63, %p64
      %p66 = scmp.ne.s32.totalorder %s58, %s60
      %p67 = scmp.eq.s32.totalorder %s34, 5
      %p68 = por %p66, %p67
      %p69 = scmp.ne.s32.totalorder %s60, %s61
      %p70 = scmp.eq.s32.totalorder %s34, 0
      %p71 = por %p69, %p70
      %p72 = scmp.ne.s32.totalorder %s60, %s61
      %p73 = scmp.eq.s32.totalorder %s35, 5
      %p74 = por %p72, %p73
      %p76 = scmp.ne.s32.totalorder %s61, %s75
      %p77 = scmp.eq.s32.totalorder %s35, 0
      %p78 = por %p76, %p77
      %s80 = sadd.s32 %s79, 1
      %p83 = scmp.eq.s32.totalorder %s29, 5
      %p84 = scmp.ne.s32.totalorder %s79, %s81
      %p85 = scmp.eq.s32.totalorder %s29, 0
      %p86 = por %p84, %p85
      %p87 = scmp.ne.s32.totalorder %s79, %s81
      %p88 = scmp.eq.s32.totalorder %s34, 5
      %p89 = por %p87, %p88
      %p90 = scmp.ne.s32.totalorder %s81, %s82
      %p91 = scmp.eq.s32.totalorder %s34, 0
      %p92 = por %p90, %p91
      %p93 = scmp.ne.s32.totalorder %s81, %s82
      %p94 = scmp.eq.s32.totalorder %s35, 5
      %p95 = por %p93, %p94
      %p97 = scmp.ne.s32.totalorder %s82, %s96
      %p98 = scmp.eq.s32.totalorder %s35, 0
      %p99 = por %p97, %p98
      %s101 = sadd.s32 %s100, 1
      %p104 = scmp.eq.s32.totalorder %s29, 5
      %p105 = scmp.ne.s32.totalorder %s100, %s102
      %p106 = scmp.eq.s32.totalorder %s29, 0
      %p107 = por %p105, %p106
      %p108 = scmp.ne.s32.totalorder %s100, %s102
      %p109 = scmp.eq.s32.totalorder %s34, 5
      %p110 = por %p108, %p109
      %p111 = scmp.ne.s32.totalorder %s102, %s103
      %p112 = scmp.eq.s32.totalorder %s34, 0
      %p113 = por %p111, %p112
      %p114 = scmp.ne.s32.totalorder %s102, %s103
      %p115 = scmp.eq.s32.totalorder %s35, 5
      %p116 = por %p114, %p115
      %p118 = scmp.ne.s32.totalorder %s103, %s117
      %p119 = scmp.eq.s32.totalorder %s35, 0
      %p120 = por %p118, %p119
      %s122 = sadd.s32 %s121, 1
      %p125 = scmp.eq.s32.totalorder %s29, 5
      %p126 = scmp.ne.s32.totalorder %s121, %s123
      %p127 = scmp.eq.s32.totalorder %s29, 0
      %p128 = por %p126, %p127
      %p129 = scmp.ne.s32.totalorder %s121, %s123
      %p130 = scmp.eq.s32.totalorder %s34, 5
      %p131 = por %p129, %p130
      %p132 = scmp.ne.s32.totalorder %s123, %s124
      %p133 = scmp.eq.s32.totalorder %s34, 0
      %p134 = por %p132, %p133
      %p135 = scmp.ne.s32.totalorder %s123, %s124
      %p136 = scmp.eq.s32.totalorder %s35, 5
      %p137 = por %p135, %p136
      %p139 = scmp.ne.s32.totalorder %s124, %s138
      %p140 = scmp.eq.s32.totalorder %s35, 0
      %p141 = por %p139, %p140
      %s143 = sadd.s32 %s142, 1
      %p146 = scmp.eq.s32.totalorder %s29, 5
      %p147 = scmp.ne.s32.totalorder %s142, %s144
      %p148 = scmp.eq.s32.totalorder %s29, 0
      %p149 = por %p147, %p148
      %p150 = scmp.ne.s32.totalorder %s142, %s144
      %p151 = scmp.eq.s32.totalorder %s34, 5
      %p152 = por %p150, %p151
      %p153 = scmp.ne.s32.totalorder %s144, %s145
      %p154 = scmp.eq.s32.totalorder %s34, 0
      %p155 = por %p153, %p154
      %p156 = scmp.ne.s32.totalorder %s144, %s145
      %p157 = scmp.eq.s32.totalorder %s35, 5
      %p158 = por %p156, %p157
      %p160 = scmp.ne.s32.totalorder %s145, %s159
      %p161 = scmp.eq.s32.totalorder %s35, 0
      %p162 = por %p160, %p161
      %s164 = sadd.s32 %s163, 1
      %p167 = scmp.eq.s32.totalorder %s29, 5
      %p168 = scmp.ne.s32.totalorder %s163, %s165
      %p169 = scmp.eq.s32.totalorder %s29, 0
      %p170 = por %p168, %p169
      %p171 = scmp.ne.s32.totalorder %s163, %s165
      %p172 = scmp.eq.s32.totalorder %s34, 5
      %p173 = por %p171, %p172
      %p174 = scmp.ne.s32.totalorder %s165, %s166
      %p175 = scmp.eq.s32.totalorder %s34, 0
      %p176 = por %p174, %p175
      %p177 = scmp.ne.s32.totalorder %s165, %s166
      %p178 = scmp.eq.s32.totalorder %s35, 5
      %p179 = por %p177, %p178
      %p181 = scmp.ne.s32.totalorder %s166, %s180
      %p182 = scmp.eq.s32.totalorder %s35, 0
      %p183 = por %p181, %p182
      %s185 = sadd.s32 %s184, 1
      %p188 = scmp.eq.s32.totalorder %s29, 5
      %p189 = scmp.ne.s32.totalorder %s184, %s186
      %p190 = scmp.eq.s32.totalorder %s29, 0
      %p191 = por %p189, %p190
      %p192 = scmp.ne.s32.totalorder %s184, %s186
      %p193 = scmp.eq.s32.totalorder %s34, 5
      %p194 = por %p192, %p193
      %p195 = scmp.ne.s32.totalorder %s186, %s187
      %p196 = scmp.eq.s32.totalorder %s34, 0
      %p197 = por %p195, %p196
      %p198 = scmp.ne.s32.totalorder %s186, %s187
      %p199 = scmp.eq.s32.totalorder %s35, 5
      %p200 = por %p198, %p199
      %p202 = scmp.ne.s32.totalorder %s187, %s201
      %p203 = scmp.eq.s32.totalorder %s35, 0
      %p204 = por %p202, %p203
      %s205 = ssub.s32 %s29, %s36
      %p206 = scmp.eq.s32.totalorder %s205, 0
      %s208 = sadd.s32 %s207, 1
      %s209 = scalar_select %p206, %s207, %s208
      %p212 = pneg %p206
      %p213 = scmp.eq.s32.totalorder %s29, 5
      %p214 = por %p212, %p213
      %p215 = scmp.ne.s32.totalorder %s207, %s210
      %p216 = scmp.eq.s32.totalorder %s29, 0
      %p217 = por %p215, %p216
      %p218 = scmp.ne.s32.totalorder %s207, %s210
      %p219 = scmp.eq.s32.totalorder %s34, 5
      %p220 = por %p218, %p219
      %p221 = scmp.ne.s32.totalorder %s210, %s211
      %p222 = scmp.eq.s32.totalorder %s34, 0
      %p223 = por %p221, %p222
      %p224 = scmp.ne.s32.totalorder %s210, %s211
      %p225 = scmp.eq.s32.totalorder %s35, 5
      %p226 = por %p224, %p225
      %p228 = scmp.ne.s32.totalorder %s211, %s227
      %p229 = scmp.eq.s32.totalorder %s35, 0
      %p230 = por %p228, %p229
      %s231 = ssub.s32 %s29, %s36
      %p232 = scmp.eq.s32.totalorder %s231, 0
      %s234 = sadd.s32 %s233, 1
      %s235 = scalar_select %p232, %s233, %s234
      %p238 = pneg %p232
      %p239 = scmp.eq.s32.totalorder %s29, 5
      %p240 = por %p238, %p239
      %p241 = scmp.ne.s32.totalorder %s233, %s236
      %p242 = scmp.eq.s32.totalorder %s29, 0
      %p243 = por %p241, %p242
      %p244 = scmp.ne.s32.totalorder %s233, %s236
      %p245 = scmp.eq.s32.totalorder %s34, 5
      %p246 = por %p244, %p245
      %p247 = scmp.ne.s32.totalorder %s236, %s237
      %p248 = scmp.eq.s32.totalorder %s34, 0
      %p249 = por %p247, %p248
      %p250 = scmp.ne.s32.totalorder %s236, %s237
      %p251 = scmp.eq.s32.totalorder %s35, 5
      %p252 = por %p250, %p251
      %p254 = scmp.ne.s32.totalorder %s237, %s253
      %p255 = scmp.eq.s32.totalorder %s35, 0
      %p256 = por %p254, %p255
      %s257 = ssub.s32 %s29, %s36
      %p258 = scmp.eq.s32.totalorder %s257, 0
      %s260 = sadd.s32 %s259, 1
      %s261 = scalar_select %p258, %s259, %s260
      %p264 = pneg %p258
      %p265 = scmp.eq.s32.totalorder %s29, 5
      %p266 = por %p264, %p265
      %p267 = scmp.ne.s32.totalorder %s259, %s262
      %p268 = scmp.eq.s32.totalorder %s29, 0
      %p269 = por %p267, %p268
      %p270 = scmp.ne.s32.totalorder %s259, %s262
      %p271 = scmp.eq.s32.totalorder %s34, 5
      %p272 = por %p270, %p271
      %p273 = scmp.ne.s32.totalorder %s262, %s263
      %p274 = scmp.eq.s32.totalorder %s34, 0
      %p275 = por %p273, %p274
      %p276 = scmp.ne.s32.totalorder %s262, %s263
      %p277 = scmp.eq.s32.totalorder %s35, 5
      %p278 = por %p276, %p277
      %p280 = scmp.ne.s32.totalorder %s263, %s279
      %p281 = scmp.eq.s32.totalorder %s35, 0
      %p282 = por %p280, %p281
      %s283 = ssub.s32 %s29, %s36
      %p284 = scmp.eq.s32.totalorder %s283, 0
      %s286 = sadd.s32 %s285, 1
      %s287 = scalar_select %p284, %s285, %s286
      %p290 = pneg %p284
      %p291 = scmp.eq.s32.totalorder %s29, 5
      %p292 = por %p290, %p291
      %p293 = scmp.ne.s32.totalorder %s285, %s288
      %p294 = scmp.eq.s32.totalorder %s29, 0
      %p295 = por %p293, %p294
      %p296 = scmp.ne.s32.totalorder %s285, %s288
      %p297 = scmp.eq.s32.totalorder %s34, 5
      %p298 = por %p296, %p297
      %p299 = scmp.ne.s32.totalorder %s288, %s289
      %p300 = scmp.eq.s32.totalorder %s34, 0
      %p301 = por %p299, %p300
      %p302 = scmp.ne.s32.totalorder %s288, %s289
      %p303 = scmp.eq.s32.totalorder %s35, 5
      %p304 = por %p302, %p303
      %p306 = scmp.ne.s32.totalorder %s289, %s305
      %p307 = scmp.eq.s32.totalorder %s35, 0
      %p308 = por %p306, %p307
      %s310 = sadd.s32 %s309, 1
      %p313 = scmp.eq.s32.totalorder %s29, 5
      %p314 = scmp.ne.s32.totalorder %s309, %s311
      %p315 = scmp.eq.s32.totalorder %s29, 0
      %p316 = por %p314, %p315
      %p317 = scmp.ne.s32.totalorder %s309, %s311
      %p318 = scmp.eq.s32.totalorder %s34, 5
      %p319 = por %p317, %p318
      %p320 = scmp.ne.s32.totalorder %s311, %s312
      %p321 = scmp.eq.s32.totalorder %s34, 0
      %p322 = por %p320, %p321
      %p323 = scmp.ne.s32.totalorder %s311, %s312
      %p324 = scmp.eq.s32.totalorder %s35, 5
      %p325 = por %p323, %p324
      %p327 = scmp.ne.s32.totalorder %s312, %s326
      %p328 = scmp.eq.s32.totalorder %s35, 0
      %p329 = por %p327, %p328
      %p330 = scmp.le.s32.totalorder 1, %s29
      %p331 = scmp.lt.s32.totalorder %s29, 7
      %p332 = pnand %p330, %p331
      %p333 = pneg %p332
      // Predicated region
      $region9: #{pallas_transformer_forward.1} parent=5 // pred_check
        _
      $region10: #{pallas_transformer_forward.1} parent=5 // pred_check_branch
        %335 = sbr.rel (%p332) target = $region12
      $region11: #{pallas_transformer_forward.1} parent=5 // pred_region
        %s336 = ssub.s32 %s29, 1
        // Predicated region
        $region13: #{pallas_transformer_forward.1} parent=11 // pred_check
          %p337 = pneg %p50
        $region14: #{pallas_transformer_forward.1} parent=11 // pred_check_branch
          %339 = sbr.rel (%p337) target = $region16
        $region15: #{pallas_transformer_forward.1} parent=11 // pred_region
          %s341 = ssub.s32 256, 256
          %342 = vsyncadd [#allocation4], %s341
          %s343 = sshll.u32 [#allocation3], 4
          %s344 = int_to_ptr.vmem [resolvable:$true] %s343
          %349 = dma.hbm_to_vmem [thread:$0]  %s0, 256, %s344, [#allocation4], 128, 128, 8
        $region16: #{pallas_transformer_forward.1} parent=11 // pred_fallthru
          _
        // Predicated region
        $region17: #{pallas_transformer_forward.1} parent=11 // pred_check
          %p350 = pneg %p71
        $region18: #{pallas_transformer_forward.1} parent=11 // pred_check_branch
          %352 = sbr.rel (%p350) target = $region20
        $region19: #{pallas_transformer_forward.1} parent=11 // pred_region
          _
        $region20: #{pallas_transformer_forward.1} parent=11 // pred_fallthru
          _
        // Predicated region
        $region21: #{pallas_transformer_forward.1} parent=11 // pred_check
          %p353 = pneg %p92
        $region22: #{pallas_transformer_forward.1} parent=11 // pred_check_branch
          %355 = sbr.rel (%p353) target = $region24
        $region23: #{pallas_transformer_forward.1} parent=11 // pred_region
          %s357 = ssub.s32 256, 256
          %358 = vsyncadd [#allocation7], %s357
          %s359 = sshll.u32 [#allocation6], 4
          %s360 = int_to_ptr.vmem [resolvable:$true] %s359
          %365 = dma.hbm_to_vmem [thread:$0]  %s2, 256, %s360, [#allocation7], 128, 128, 8
        $region24: #{pallas_transformer_forward.1} parent=11 // pred_fallthru
          _
        // Predicated region
        $region25: #{pallas_transformer_forward.1} parent=11 // pred_check
          %p366 = pneg %p113
        $region26: #{pallas_transformer_forward.1} parent=11 // pred_check_branch
          %368 = sbr.rel (%p366) target = $region28
        $region27: #{pallas_transformer_forward.1} parent=11 // pred_region
          %s370 = ssub.s32 1024, 1024
          %371 = vsyncadd [#allocation7], %s370
          %s372 = sshll.u32 [#allocation8], 4
          %s373 = int_to_ptr.vmem [resolvable:$true] %s372
          %378 = dma.hbm_to_vmem [thread:$0]  %s3, 1024, %s373, [#allocation7], 128, 128, 8
        $region28: #{pallas_transformer_forward.1} parent=11 // pred_fallthru
          _
        // Predicated region
        $region29: #{pallas_transformer_forward.1} parent=11 // pred_check
          %p379 = pneg %p134
        $region30: #{pallas_transformer_forward.1} parent=11 // pred_check_branch
          %381 = sbr.rel (%p379) target = $region32
        $region31: #{pallas_transformer_forward.1} parent=11 // pred_region
          %s383 = ssub.s32 32, 32
          %384 = vsyncadd [#allocation10], %s383
          %s386 = sshll.u32 [#allocation9], 4
          %s387 = int_to_ptr.vmem [resolvable:$true] %s386
          %389 = dma.hbm_to_vmem [thread:$0]  %s4, 32, %s387, [#allocation10]
        $region32: #{pallas_transformer_forward.1} parent=11 // pred_fallthru
          _
        // Predicated region
        $region33: #{pallas_transformer_forward.1} parent=11 // pred_check
          %p390 = pneg %p155
        $region34: #{pallas_transformer_forward.1} parent=11 // pred_check_branch
          %392 = sbr.rel (%p390) target = $region36
        $region35: #{pallas_transformer_forward.1} parent=11 // pred_region
          %s394 = ssub.s32 32, 32
          %395 = vsyncadd [#allocation10], %s394
          %s397 = sshll.u32 [#allocation11], 4
          %s398 = int_to_ptr.vmem [resolvable:$true] %s397
          %400 = dma.hbm_to_vmem [thread:$0]  %s5, 32, %s398, [#allocation10]
        $region36: #{pallas_transformer_forward.1} parent=11 // pred_fallthru
          _
        // Predicated region
        $region37: #{pallas_transformer_forward.1} parent=11 // pred_check
          %p401 = pneg %p176
        $region38: #{pallas_transformer_forward.1} parent=11 // pred_check_branch
          %403 = sbr.rel (%p401) target = $region40
        $region39: #{pallas_transformer_forward.1} parent=11 // pred_region
          %s405 = ssub.s32 512, 512
          %406 = vsyncadd [#allocation13], %s405
          %s407 = sshll.u32 [#allocation12], 4
          %s408 = int_to_ptr.vmem [resolvable:$true] %s407
          %413 = dma.hbm_to_vmem [thread:$0]  %s6, 512, %s408, [#allocation13], 128, 128, 8
        $region40: #{pallas_transformer_forward.1} parent=11 // pred_fallthru
          _
        // Predicated region
        $region41: #{pallas_transformer_forward.1} parent=11 // pred_check
          %p414 = pneg %p197
        $region42: #{pallas_transformer_forward.1} parent=11 // pred_check_branch
          %416 = sbr.rel (%p414) target = $region44
        $region43: #{pallas_transformer_forward.1} parent=11 // pred_region
          %s418 = ssub.s32 16, 16
          %419 = vsyncadd [#allocation13], %s418
          %s421 = sshll.u32 [#allocation14], 4
          %s422 = int_to_ptr.vmem [resolvable:$true] %s421
          %424 = dma.hbm_to_vmem [thread:$0]  %s7, 16, %s422, [#allocation13]
        $region44: #{pallas_transformer_forward.1} parent=11 // pred_fallthru
          _
      $region12: #{pallas_transformer_forward.1} parent=5 // pred_fallthru
        _
      %p425 = scmp.lt.s32.totalorder %s29, 6
      // Predicated region
      $region45: #{pallas_transformer_forward.1} parent=5 // pred_check
        %p426 = pneg %p425
      $region46: #{pallas_transformer_forward.1} parent=5 // pred_check_branch
        %428 = sbr.rel (%p426) target = $region48
      $region47: #{pallas_transformer_forward.1} parent=5 // pred_region
        // Predicated region
        $region49: #{pallas_transformer_forward.1} parent=47 // pred_check
          %p429 = pneg %p217
        $region50: #{pallas_transformer_forward.1} parent=47 // pred_check_branch
          %431 = sbr.rel (%p429) target = $region52
        $region51: #{pallas_transformer_forward.1} parent=47 // pred_region
          %s432 = sand.u32 %s29, 1
          %s433 = scalar_lea.sflag [#allocation16], %s432
          %s434 = sand.u32 %s207, 1
          %s435 = smul.addr %s434, 32
          %s436 = scalar_lea.vmem [#allocation15], %s435
          %s438 = ssub.s32 512, 512
          %439 = vsyncadd %s433, %s438
          %s440 = smul.addr %s29, 4
          %s441 = smul.addr %s440, 128
          %s442 = scalar_lea.hbm %s8, %s441
          %s443 = sshll.u32 %s436, 4
          %s444 = int_to_ptr.vmem [resolvable:$true] %s443
          %449 = dma.hbm_to_vmem [thread:$0]  %s442, 512, %s444, %s433, 128, 128, 8
        $region52: #{pallas_transformer_forward.1} parent=47 // pred_fallthru
          _
        // Predicated region
        $region53: #{pallas_transformer_forward.1} parent=47 // pred_check
          %p450 = pneg %p243
        $region54: #{pallas_transformer_forward.1} parent=47 // pred_check_branch
          %452 = sbr.rel (%p450) target = $region56
        $region55: #{pallas_transformer_forward.1} parent=47 // pred_region
          %s453 = sand.u32 %s29, 1
          %s454 = scalar_lea.sflag [#allocation16], %s453
          %s455 = sand.u32 %s233, 1
          %s456 = smul.addr %s455, 640
          %s457 = scalar_lea.vmem [#allocation17], %s456
          %s459 = ssub.s32 10240, 10240
          %460 = vsyncadd %s454, %s459
          %s461 = smul.addr %s29, 80
          %s462 = smul.addr %s461, 128
          %s463 = scalar_lea.hbm %s9, %s462
          %s464 = sshll.u32 %s457, 4
          %s465 = int_to_ptr.vmem [resolvable:$true] %s464
          %470 = dma.hbm_to_vmem [thread:$0]  %s463, 10240, %s465, %s454, 2048, 2048, 128
        $region56: #{pallas_transformer_forward.1} parent=47 // pred_fallthru
          _
        // Predicated region
        $region57: #{pallas_transformer_forward.1} parent=47 // pred_check
          %p471 = pneg %p269
        $region58: #{pallas_transformer_forward.1} parent=47 // pred_check_branch
          %473 = sbr.rel (%p471) target = $region60
        $region59: #{pallas_transformer_forward.1} parent=47 // pred_region
          %s474 = sand.u32 %s29, 1
          %s475 = scalar_lea.sflag [#allocation19], %s474
          %s476 = sand.u32 %s259, 1
          %s477 = smul.addr %s476, 512
          %s478 = scalar_lea.vmem [#allocation18], %s477
          %s480 = ssub.s32 8192, 8192
          %481 = vsyncadd %s475, %s480
          %s482 = smul.addr %s29, 64
          %s483 = smul.addr %s482, 128
          %s484 = scalar_lea.hbm %s10, %s483
          %s485 = sshll.u32 %s478, 4
          %s486 = int_to_ptr.vmem [resolvable:$true] %s485
          %491 = dma.hbm_to_vmem [thread:$0]  %s484, 8192, %s486, %s475, 2048, 2048, 128
        $region60: #{pallas_transformer_forward.1} parent=47 // pred_fallthru
          _
        // Predicated region
        $region61: #{pallas_transformer_forward.1} parent=47 // pred_check
          %p492 = pneg %p295
        $region62: #{pallas_transformer_forward.1} parent=47 // pred_check_branch
          %494 = sbr.rel (%p492) target = $region64
        $region63: #{pallas_transformer_forward.1} parent=47 // pred_region
          %s495 = sand.u32 %s29, 1
          %s496 = scalar_lea.sflag [#allocation19], %s495
          %s497 = sand.u32 %s285, 1
          %s498 = smul.addr %s497, 8
          %s499 = scalar_lea.vmem [#allocation20], %s498
          %s501 = ssub.s32 128, 128
          %502 = vsyncadd %s496, %s501
          %s503 = smul.addr %s29, 128
          %s504 = scalar_lea.hbm %s11, %s503
          %s506 = sshll.u32 %s499, 4
          %s507 = int_to_ptr.vmem [resolvable:$true] %s506
          %509 = dma.hbm_to_vmem [thread:$0]  %s504, 128, %s507, %s496
        $region64: #{pallas_transformer_forward.1} parent=47 // pred_fallthru
          _
      $region48: #{pallas_transformer_forward.1} parent=5 // pred_fallthru
        _
      %p510 = scmp.le.s32.totalorder 1, %s29
      %p511 = scmp.lt.s32.totalorder %s29, 7
      %p512 = pnand %p510, %p511
      %p513 = pneg %p512
      // Predicated region
      $region65: #{pallas_transformer_forward.1} parent=5 // pred_check
        _
      $region66: #{pallas_transformer_forward.1} parent=5 // pred_check_branch
        %515 = sbr.rel (%p512) target = $region68
      $region67: #{pallas_transformer_forward.1} parent=5 // pred_region
        %s516 = ssub.s32 %s29, 1
        // Predicated region
        $region69: #{pallas_transformer_forward.1} parent=67 // pred_check
          %p517 = pneg %p50
        $region70: #{pallas_transformer_forward.1} parent=67 // pred_check_branch
          %519 = sbr.rel (%p517) target = $region72
        $region71: #{pallas_transformer_forward.1} parent=67 // pred_region
          %520 = dma.done [#allocation4], 256
        $region72: #{pallas_transformer_forward.1} parent=67 // pred_fallthru
          _
        // Predicated region
        $region73: #{pallas_transformer_forward.1} parent=67 // pred_check
          %p521 = pneg %p92
        $region74: #{pallas_transformer_forward.1} parent=67 // pred_check_branch
          %523 = sbr.rel (%p521) target = $region76
        $region75: #{pallas_transformer_forward.1} parent=67 // pred_region
          %524 = dma.done [#allocation7], 256
        $region76: #{pallas_transformer_forward.1} parent=67 // pred_fallthru
          _
        // Predicated region
        $region77: #{pallas_transformer_forward.1} parent=67 // pred_check
          %p525 = pneg %p113
        $region78: #{pallas_transformer_forward.1} parent=67 // pred_check_branch
          %527 = sbr.rel (%p525) target = $region80
        $region79: #{pallas_transformer_forward.1} parent=67 // pred_region
          %528 = dma.done [#allocation7], 1024
        $region80: #{pallas_transformer_forward.1} parent=67 // pred_fallthru
          _
        // Predicated region
        $region81: #{pallas_transformer_forward.1} parent=67 // pred_check
          %p529 = pneg %p134
        $region82: #{pallas_transformer_forward.1} parent=67 // pred_check_branch
          %531 = sbr.rel (%p529) target = $region84
        $region83: #{pallas_transformer_forward.1} parent=67 // pred_region
          %532 = dma.done [#allocation10], 32
        $region84: #{pallas_transformer_forward.1} parent=67 // pred_fallthru
          _
        // Predicated region
        $region85: #{pallas_transformer_forward.1} parent=67 // pred_check
          %p533 = pneg %p155
        $region86: #{pallas_transformer_forward.1} parent=67 // pred_check_branch
          %535 = sbr.rel (%p533) target = $region88
        $region87: #{pallas_transformer_forward.1} parent=67 // pred_region
          %536 = dma.done [#allocation10], 32
        $region88: #{pallas_transformer_forward.1} parent=67 // pred_fallthru
          _
        // Predicated region
        $region89: #{pallas_transformer_forward.1} parent=67 // pred_check
          %p537 = pneg %p176
        $region90: #{pallas_transformer_forward.1} parent=67 // pred_check_branch
          %539 = sbr.rel (%p537) target = $region92
        $region91: #{pallas_transformer_forward.1} parent=67 // pred_region
          %540 = dma.done [#allocation13], 512
        $region92: #{pallas_transformer_forward.1} parent=67 // pred_fallthru
          _
        // Predicated region
        $region93: #{pallas_transformer_forward.1} parent=67 // pred_check
          %p541 = pneg %p197
        $region94: #{pallas_transformer_forward.1} parent=67 // pred_check_branch
          %543 = sbr.rel (%p541) target = $region96
        $region95: #{pallas_transformer_forward.1} parent=67 // pred_region
          %544 = dma.done [#allocation13], 16
        $region96: #{pallas_transformer_forward.1} parent=67 // pred_fallthru
          _
        %s545 = sand.u32 %s34, 1
        %s546 = scalar_lea.sflag [#allocation16], %s545
        %s547 = sand.u32 %s210, 1
        %s548 = smul.addr %s547, 32
        %s549 = scalar_lea.vmem [#allocation15], %s548
        // Predicated region
        $region97: #{pallas_transformer_forward.1} parent=67 // pred_check
          %p550 = pneg %p223
        $region98: #{pallas_transformer_forward.1} parent=67 // pred_check_branch
          %552 = sbr.rel (%p550) target = $region100
        $region99: #{pallas_transformer_forward.1} parent=67 // pred_region
          %553 = dma.done %s546, 512
        $region100: #{pallas_transformer_forward.1} parent=67 // pred_fallthru
          _
        %s554 = sand.u32 %s34, 1
        %s555 = scalar_lea.sflag [#allocation16], %s554
        %s556 = sand.u32 %s236, 1
        %s557 = smul.addr %s556, 640
        %s558 = scalar_lea.vmem [#allocation17], %s557
        // Predicated region
        $region101: #{pallas_transformer_forward.1} parent=67 // pred_check
          %p559 = pneg %p249
        $region102: #{pallas_transformer_forward.1} parent=67 // pred_check_branch
          %561 = sbr.rel (%p559) target = $region104
        $region103: #{pallas_transformer_forward.1} parent=67 // pred_region
          %562 = dma.done %s555, 10240
        $region104: #{pallas_transformer_forward.1} parent=67 // pred_fallthru
          _
        %s563 = sand.u32 %s34, 1
        %s564 = scalar_lea.sflag [#allocation19], %s563
        %s565 = sand.u32 %s262, 1
        %s566 = smul.addr %s565, 512
        %s567 = scalar_lea.vmem [#allocation18], %s566
        // Predicated region
        $region105: #{pallas_transformer_forward.1} parent=67 // pred_check
          %p568 = pneg %p275
        $region106: #{pallas_transformer_forward.1} parent=67 // pred_check_branch
          %570 = sbr.rel (%p568) target = $region108
        $region107: #{pallas_transformer_forward.1} parent=67 // pred_region
          %571 = dma.done %s564, 8192
        $region108: #{pallas_transformer_forward.1} parent=67 // pred_fallthru
          _
        %s572 = sand.u32 %s34, 1
        %s573 = scalar_lea.sflag [#allocation19], %s572
        %s574 = sand.u32 %s288, 1
        %s575 = smul.addr %s574, 8
        %s576 = scalar_lea.vmem [#allocation20], %s575
        // Predicated region
        $region109: #{pallas_transformer_forward.1} parent=67 // pred_check
          %p577 = pneg %p301
        $region110: #{pallas_transformer_forward.1} parent=67 // pred_check_branch
          %579 = sbr.rel (%p577) target = $region112
        $region111: #{pallas_transformer_forward.1} parent=67 // pred_region
          %580 = dma.done %s573, 128
        $region112: #{pallas_transformer_forward.1} parent=67 // pred_fallthru
          _
        %p581 = pneg %p50
        %p582 = pneg %p47
        %p583 = pneg %p71
        %p584 = pneg %p68
        %p585 = pneg %p92
        %p586 = pneg %p89
        %p587 = pneg %p113
        %p588 = pneg %p110
        %p589 = pneg %p134
        %p590 = pneg %p131
        %p591 = pneg %p155
        %p592 = pneg %p152
        %p593 = pneg %p176
        %p594 = pneg %p173
        %p595 = pneg %p197
        %p596 = pneg %p194
        %s597 = sand.u32 %s34, 1
        %s598 = scalar_lea.sflag [#allocation16], %s597
        %s599 = sand.u32 %s210, 1
        %s600 = smul.addr %s599, 32
        %s601 = scalar_lea.vmem [#allocation15], %s600
        %p602 = pneg %p223
        %p603 = pneg %p220
        %s604 = sand.u32 %s34, 1
        %s605 = scalar_lea.sflag [#allocation16], %s604
        %s606 = sand.u32 %s236, 1
        %s607 = smul.addr %s606, 640
        %s608 = scalar_lea.vmem [#allocation17], %s607
        %p609 = pneg %p249
        %p610 = pneg %p246
        %s611 = sand.u32 %s34, 1
        %s612 = scalar_lea.sflag [#allocation19], %s611
        %s613 = sand.u32 %s262, 1
        %s614 = smul.addr %s613, 512
        %s615 = scalar_lea.vmem [#allocation18], %s614
        %p616 = pneg %p275
        %p617 = pneg %p272
        %s618 = sand.u32 %s34, 1
        %s619 = scalar_lea.sflag [#allocation19], %s618
        %s620 = sand.u32 %s288, 1
        %s621 = smul.addr %s620, 8
        %s622 = scalar_lea.vmem [#allocation20], %s621
        %p623 = pneg %p301
        %p624 = pneg %p298
        %p625 = pneg %p322
        %p626 = pneg %p319
        %p627 = scmp.eq.s32.totalorder %s34, 0
        // Predicated region
        $region113: #{pallas_transformer_forward.1} parent=67 // pred_check
          %p628 = pneg %p627
        $region114: #{pallas_transformer_forward.1} parent=67 // pred_check_branch
          %630 = sbr.rel (%p628) target = $region116
        $region115: #{pallas_transformer_forward.1} parent=67 // pred_region
          %v631 = vld [vmem:[#allocation3] sm:$0xff]
          %v632 = vld [vmem:[#allocation3 + $0x8] sm:$0xff]
          %v633 = vld [vmem:[#allocation6] sm:$0xff]
          %v634 = vld [vmem:[#allocation6 + $0x8] sm:$0xff]
          %v635 = vld [vmem:[%s1] sm:$0xff]
          %v636 = vld [vmem:[%s1 + $0x8] sm:$0xff]
          %vm637 = vcmask 130048
          %v639 = vsel %vm637, %v631, 0
          %v642 = vsel %vm637, %v632, 0
          %644 = vmatprep.subr.mxu0 0.0
          %645 = vmatpush1.msra.mxu0 0.0
          %646 = vmatprep.subr.mxu0 0.0
          %647 = vmatpush1.msra.mxu0 0.0
          %648 = vmatprep.subr.mxu0 0.0
          %649 = vmatpush1.msra.mxu0 0.0
          %650 = vmatprep.subr.mxu0 0.0
          %651 = vmatpush1.msra.mxu0 0.0
          %652 = vmatprep.subr.mxu0 0.0
          %653 = vmatpush1.msra.mxu0 0.0
          %654 = vmatprep.subr.mxu0 0.0
          %655 = vmatpush1.msra.mxu0 0.0
          %656 = vmatprep.subr.mxu0 0.0
          %657 = vmatpush1.msra.mxu0 0.0
          %658 = vmatprep.subr.mxu0 0.0
          %659 = vmatpush1.msra.mxu0 0.0
          %660 = vmatprep.subr.mxu0 0.0
          %661 = vmatpush1.msra.mxu0 0.0
          %662 = vmatprep.subr.mxu0 0.0
          %663 = vmatpush1.msra.mxu0 0.0
          %664 = vmatprep.subr.mxu0 0.0
          %665 = vmatpush1.msra.mxu0 0.0
          %666 = vmatprep.subr.mxu0 0.0
          %667 = vmatpush1.msra.mxu0 0.0
          %668 = vmatprep.subr.mxu0 0.0
          %669 = vmatpush1.msra.mxu0 0.0
          %670 = vmatprep.subr.mxu0 0.0
          %671 = vmatpush1.msra.mxu0 0.0
          %672 = vmatprep.subr.mxu0 0.0
          %673 = vmatpush1.msra.mxu0 %v634
          %674 = vmatprep.subr.mxu0 0.0
          %675 = vmatpush1.msra.mxu0 %v633
          %676 = vmatprep.subr.mxu0 0.0
          %677 = vmatpush2.msra.mxu0 0.0
          %678 = vmatprep.subr.mxu0 0.0
          %679 = vmatpush2.msra.mxu0 0.0
          %680 = vmatprep.subr.mxu0 0.0
          %681 = vmatpush2.msra.mxu0 0.0
          %682 = vmatprep.subr.mxu0 0.0
          %683 = vmatpush2.msra.mxu0 0.0
          %684 = vmatprep.subr.mxu0 0.0
          %685 = vmatpush2.msra.mxu0 0.0
          %686 = vmatprep.subr.mxu0 0.0
          %687 = vmatpush2.msra.mxu0 0.0
          %688 = vmatprep.subr.mxu0 0.0
          %689 = vmatpush2.msra.mxu0 0.0
          %690 = vmatprep.subr.mxu0 0.0
          %691 = vmatpush2.msra.mxu0 0.0
          %692 = vmatprep.subr.mxu0 0.0
          %693 = vmatpush2.msra.mxu0 0.0
          %694 = vmatprep.subr.mxu0 0.0
          %695 = vmatpush2.msra.mxu0 0.0
          %696 = vmatprep.subr.mxu0 0.0
          %697 = vmatpush2.msra.mxu0 0.0
          %698 = vmatprep.subr.mxu0 0.0
          %699 = vmatpush2.msra.mxu0 0.0
          %700 = vmatprep.subr.mxu0 0.0
          %701 = vmatpush2.msra.mxu0 0.0
          %702 = vmatprep.subr.mxu0 0.0
          %703 = vmatpush2.msra.mxu0 0.0
          %704 = vmatprep.subr.mxu0 0.0
          %705 = vmatpush2.msra.mxu0 0.0
          %706 = vmatprep.subr.mxu0 0.0
          %707 = vmatpush2.msra.mxu0 0.0
          %708 = vmatprep.mubr.f32.mxu0 0.0
          %709 = vmatmul.mubr.f32.gmra.mxu0 %v639
          %v710 = vpop.f32.mrf.mxu0
          %v711 = vadd.f32 %v635, %v710
          %v712 = vpop.f32.mrf.mxu0
          %713 = vmatprep.mubr.f32.mxu0 0.0
          %714 = vmatmul.mubr.f32.gmra.mxu0 %v642
          %v715 = vpop.f32.mrf.mxu0
          %v716 = vadd.f32 %v636, %v715
          %v717 = vpop.f32.mrf.mxu0
          %718 = vdwg.mxu0
          %vm719 = vcmask 261120
          %720 = vst.msk [vmem:[#allocation2] sm:$0xff] %vm719, %v711
          %721 = vst.msk [vmem:[#allocation2 + $0x8] sm:$0xff] %vm719, %v716
        $region116: #{pallas_transformer_forward.1} parent=67 // pred_fallthru
          _
        %v722 = vld [vmem:[#allocation2] sm:$0xff]
        %v723 = vld [vmem:[#allocation2 + $0x8] sm:$0xff]
        %v724 = vld [vmem:[%s549] sm:$0xff]
        %v725 = vld [vmem:[%s549 + $0x8] sm:$0xff]
        %v726 = vld [vmem:[%s549 + $0x10] sm:$0xff]
        %v727 = vld [vmem:[%s549 + $0x18] sm:$0xff]
        %v728 = vld [vmem:[%s576] sm:$0xff]
        %v729 = vlaneseq
        %v730 = vshrl.u32 %v729, 7
        %v731 = vsub.s32 0, %v730
        %v732 = vrot.slane %v728, %v731
        %vm733 = vcmask 261120
        %v735 = vsel %vm733, %v722, 0
        %v738 = vsel %vm733, %v723, 0
        %740 = vmatprep.subr.mxu0 0.0
        %741 = vmatpush1.msra.mxu0 0.0
        %742 = vmatprep.subr.mxu0 0.0
        %743 = vmatpush1.msra.mxu0 0.0
        %744 = vmatprep.subr.mxu0 0.0
        %745 = vmatpush1.msra.mxu0 0.0
        %746 = vmatprep.subr.mxu0 0.0
        %747 = vmatpush1.msra.mxu0 0.0
        %748 = vmatprep.subr.mxu0 0.0
        %749 = vmatpush1.msra.mxu0 0.0
        %750 = vmatprep.subr.mxu0 0.0
        %751 = vmatpush1.msra.mxu0 0.0
        %752 = vmatprep.subr.mxu0 0.0
        %753 = vmatpush1.msra.mxu0 0.0
        %754 = vmatprep.subr.mxu0 0.0
        %755 = vmatpush1.msra.mxu0 0.0
        %756 = vmatprep.subr.mxu0 0.0
        %757 = vmatpush1.msra.mxu0 0.0
        %758 = vmatprep.subr.mxu0 0.0
        %759 = vmatpush1.msra.mxu0 0.0
        %760 = vmatprep.subr.mxu0 0.0
        %761 = vmatpush1.msra.mxu0 0.0
        %762 = vmatprep.subr.mxu0 0.0
        %763 = vmatpush1.msra.mxu0 0.0
        %764 = vmatprep.subr.mxu0 0.0
        %765 = vmatpush1.msra.mxu0 %v727
        %766 = vmatprep.subr.mxu0 0.0
        %767 = vmatpush1.msra.mxu0 %v726
        %768 = vmatprep.subr.mxu0 0.0
        %769 = vmatpush1.msra.mxu0 %v725
        %770 = vmatprep.subr.mxu0 0.0
        %771 = vmatpush1.msra.mxu0 %v724
        %772 = vmatprep.subr.mxu0 0.0
        %773 = vmatpush2.msra.mxu0 0.0
        %774 = vmatprep.subr.mxu0 0.0
        %775 = vmatpush2.msra.mxu0 0.0
        %776 = vmatprep.subr.mxu0 0.0
        %777 = vmatpush2.msra.mxu0 0.0
        %778 = vmatprep.subr.mxu0 0.0
        %779 = vmatpush2.msra.mxu0 0.0
        %780 = vmatprep.subr.mxu0 0.0
        %781 = vmatpush2.msra.mxu0 0.0
        %782 = vmatprep.subr.mxu0 0.0
        %783 = vmatpush2.msra.mxu0 0.0
        %784 = vmatprep.subr.mxu0 0.0
        %785 = vmatpush2.msra.mxu0 0.0
        %786 = vmatprep.subr.mxu0 0.0
        %787 = vmatpush2.msra.mxu0 0.0
        %788 = vmatprep.subr.mxu0 0.0
        %789 = vmatpush2.msra.mxu0 0.0
        %790 = vmatprep.subr.mxu0 0.0
        %791 = vmatpush2.msra.mxu0 0.0
        %792 = vmatprep.subr.mxu0 0.0
        %793 = vmatpush2.msra.mxu0 0.0
        %794 = vmatprep.subr.mxu0 0.0
        %795 = vmatpush2.msra.mxu0 0.0
        %796 = vmatprep.subr.mxu0 0.0
        %797 = vmatpush2.msra.mxu0 0.0
        %798 = vmatprep.subr.mxu0 0.0
        %799 = vmatpush2.msra.mxu0 0.0
        %800 = vmatprep.subr.mxu0 0.0
        %801 = vmatpush2.msra.mxu0 0.0
        %802 = vmatprep.subr.mxu0 0.0
        %803 = vmatpush2.msra.mxu0 0.0
        %804 = vmatprep.mubr.f32.mxu0 0.0
        %805 = vmatmul.mubr.f32.gmra.mxu0 %v735
        %v806 = vpop.f32.mrf.mxu0
        %v807 = vadd.f32 %v732, %v806
        %v808 = vpop.f32.mrf.mxu0
        %809 = vmatprep.mubr.f32.mxu0 0.0
        %810 = vmatmul.mubr.f32.gmra.mxu0 %v738
        %v811 = vpop.f32.mrf.mxu0
        %v812 = vadd.f32 %v732, %v811
        %v813 = vpop.f32.mrf.mxu0
        %814 = vdwg.mxu0
        %817 = vrot.lane.b32.xlu0 %v807, 120
        %v818 = vpop.permute.xlu0 %817
        %819 = vrot.lane.b32.xlu0 %v812, 120
        %v820 = vpop.permute.xlu0 %819
        %821 = vrot.lane.b32.xlu0 %v807, 112
        %v822 = vpop.permute.xlu0 %821
        %823 = vrot.lane.b32.xlu0 %v812, 112
        %v824 = vpop.permute.xlu0 %823
        %825 = vrot.lane.b32.xlu0 %v807, 104
        %v826 = vpop.permute.xlu0 %825
        %827 = vrot.lane.b32.xlu0 %v812, 104
        %v828 = vpop.permute.xlu0 %827
        %v829 = vld [vmem:[#allocation8] sm:$0xff]
        %v830 = vld [vmem:[#allocation8 + $0x8] sm:$0xff]
        %v831 = vld [vmem:[#allocation8 + $0x10] sm:$0xff]
        %v832 = vld [vmem:[#allocation8 + $0x18] sm:$0xff]
        %v833 = vld [vmem:[#allocation8 + $0x20] sm:$0xff]
        %v834 = vld [vmem:[#allocation8 + $0x28] sm:$0xff]
        %v835 = vld [vmem:[#allocation8 + $0x30] sm:$0xff]
        %v836 = vld [vmem:[#allocation8 + $0x38] sm:$0xff]
        %837 = vrot.lane.b32.xlu0 %v807, 96
        %v838 = vpop.permute.xlu0 %837
        %839 = vrot.lane.b32.xlu0 %v812, 96
        %v840 = vpop.permute.xlu0 %839
        %841 = vrot.lane.b32.xlu0 %v818, 96
        %v842 = vpop.permute.xlu0 %841
        %843 = vrot.lane.b32.xlu0 %v820, 96
        %v844 = vpop.permute.xlu0 %843
        %845 = vrot.lane.b32.xlu0 %v822, 96
        %v846 = vpop.permute.xlu0 %845
        %847 = vrot.lane.b32.xlu0 %v824, 96
        %v848 = vpop.permute.xlu0 %847
        %849 = vrot.lane.b32.xlu0 %v826, 96
        %v850 = vpop.permute.xlu0 %849
        %851 = vrot.lane.b32.xlu0 %v828, 96
        %v852 = vpop.permute.xlu0 %851
        %vm853 = vcmask 64512
        %v854 = vsel %vm853, %v807, 0
        %v856 = vsel %vm853, %v812, 0
        %v858 = vsel %vm853, %v818, 0
        %v860 = vsel %vm853, %v820, 0
        %v862 = vsel %vm853, %v822, 0
        %v864 = vsel %vm853, %v824, 0
        %v866 = vsel %vm853, %v826, 0
        %v868 = vsel %vm853, %v828, 0
        %v870 = vsel %vm853, %v838, 0
        %v872 = vsel %vm853, %v840, 0
        %v874 = vsel %vm853, %v842, 0
        %v876 = vsel %vm853, %v844, 0
        %v878 = vsel %vm853, %v846, 0
        %v880 = vsel %vm853, %v848, 0
        %v882 = vsel %vm853, %v850, 0
        %v884 = vsel %vm853, %v852, 0
        %886 = vmatprep.subr.mxu0 0.0
        %887 = vmatpush1.xpose.msra.mxu0 0.0
        %888 = vmatprep.subr.mxu0 0.0
        %889 = vmatpush1.xpose.msra.mxu0 0.0
        %890 = vmatprep.subr.mxu0 0.0
        %891 = vmatpush1.xpose.msra.mxu0 0.0
        %892 = vmatprep.subr.mxu0 0.0
        %893 = vmatpush1.xpose.msra.mxu0 0.0
        %894 = vmatprep.subr.mxu0 0.0
        %895 = vmatpush1.xpose.msra.mxu0 0.0
        %896 = vmatprep.subr.mxu0 0.0
        %897 = vmatpush1.xpose.msra.mxu0 0.0
        %898 = vmatprep.subr.mxu0 0.0
        %899 = vmatpush1.xpose.msra.mxu0 0.0
        %900 = vmatprep.subr.mxu0 0.0
        %901 = vmatpush1.xpose.msra.mxu0 0.0
        %902 = vmatprep.subr.mxu0 0.0
        %903 = vmatpush1.xpose.msra.mxu0 %v884
        %904 = vmatprep.subr.mxu0 0.0
        %905 = vmatpush1.xpose.msra.mxu0 %v882
        %906 = vmatprep.subr.mxu0 0.0
        %907 = vmatpush1.xpose.msra.mxu0 %v880
        %908 = vmatprep.subr.mxu0 0.0
        %909 = vmatpush1.xpose.msra.mxu0 %v878
        %910 = vmatprep.subr.mxu0 0.0
        %911 = vmatpush1.xpose.msra.mxu0 %v876
        %912 = vmatprep.subr.mxu0 0.0
        %913 = vmatpush1.xpose.msra.mxu0 %v874
        %914 = vmatprep.subr.mxu0 0.0
        %915 = vmatpush1.xpose.msra.mxu0 %v872
        %916 = vmatprep.subr.mxu0 0.0
        %917 = vmatpush1.xpose.msra.mxu0 %v870
        %918 = vmatprep.subr.mxu0 0.0
        %919 = vmatpush2.xpose.msra.mxu0 0.0
        %920 = vmatprep.subr.mxu0 0.0
        %921 = vmatpush2.xpose.msra.mxu0 0.0
        %922 = vmatprep.subr.mxu0 0.0
        %923 = vmatpush2.xpose.msra.mxu0 0.0
        %924 = vmatprep.subr.mxu0 0.0
        %925 = vmatpush2.xpose.msra.mxu0 0.0
        %926 = vmatprep.subr.mxu0 0.0
        %927 = vmatpush2.xpose.msra.mxu0 0.0
        %928 = vmatprep.subr.mxu0 0.0
        %929 = vmatpush2.xpose.msra.mxu0 0.0
        %930 = vmatprep.subr.mxu0 0.0
        %931 = vmatpush2.xpose.msra.mxu0 0.0
        %932 = vmatprep.subr.mxu0 0.0
        %933 = vmatpush2.xpose.msra.mxu0 0.0
        %934 = vmatprep.subr.mxu0 0.0
        %935 = vmatpush2.xpose.msra.mxu0 0.0
        %936 = vmatprep.subr.mxu0 0.0
        %937 = vmatpush2.xpose.msra.mxu0 0.0
        %938 = vmatprep.subr.mxu0 0.0
        %939 = vmatpush2.xpose.msra.mxu0 0.0
        %940 = vmatprep.subr.mxu0 0.0
        %941 = vmatpush2.xpose.msra.mxu0 0.0
        %942 = vmatprep.subr.mxu0 0.0
        %943 = vmatpush2.xpose.msra.mxu0 0.0
        %944 = vmatprep.subr.mxu0 0.0
        %945 = vmatpush2.xpose.msra.mxu0 0.0
        %946 = vmatprep.subr.mxu0 0.0
        %947 = vmatpush2.xpose.msra.mxu0 0.0
        %948 = vmatprep.subr.mxu0 0.0
        %949 = vmatpush2.xpose.msra.mxu0 0.0
        %950 = vmatprep.mubr.f32.mxu0 0.0
        %951 = vmatmul.mubr.f32.gmra.mxu0 %v854
        %v952 = vpop.f32.mrf.mxu0
        %v953 = vadd.f32 %v829, %v952
        %v954 = vpop.f32.mrf.mxu0
        %955 = vmatprep.mubr.f32.mxu0 0.0
        %956 = vmatmul.mubr.f32.gmra.mxu0 %v856
        %v957 = vpop.f32.mrf.mxu0
        %v958 = vadd.f32 %v830, %v957
        %v959 = vpop.f32.mrf.mxu0
        %960 = vmatprep.mubr.f32.mxu0 0.0
        %961 = vmatmul.mubr.f32.gmra.mxu0 %v858
        %v962 = vpop.f32.mrf.mxu0
        %v963 = vadd.f32 %v831, %v962
        %v964 = vpop.f32.mrf.mxu0
        %965 = vmatprep.mubr.f32.mxu0 0.0
        %966 = vmatmul.mubr.f32.gmra.mxu0 %v860
        %v967 = vpop.f32.mrf.mxu0
        %v968 = vadd.f32 %v832, %v967
        %v969 = vpop.f32.mrf.mxu0
        %970 = vmatprep.mubr.f32.mxu0 0.0
        %971 = vmatmul.mubr.f32.gmra.mxu0 %v862
        %v972 = vpop.f32.mrf.mxu0
        %v973 = vadd.f32 %v833, %v972
        %v974 = vpop.f32.mrf.mxu0
        %975 = vmatprep.mubr.f32.mxu0 0.0
        %976 = vmatmul.mubr.f32.gmra.mxu0 %v864
        %v977 = vpop.f32.mrf.mxu0
        %v978 = vadd.f32 %v834, %v977
        %v979 = vpop.f32.mrf.mxu0
        %980 = vmatprep.mubr.f32.mxu0 0.0
        %981 = vmatmul.mubr.f32.gmra.mxu0 %v866
        %v982 = vpop.f32.mrf.mxu0
        %v983 = vadd.f32 %v835, %v982
        %v984 = vpop.f32.mrf.mxu0
        %985 = vmatprep.mubr.f32.mxu0 0.0
        %986 = vmatmul.mubr.f32.gmra.mxu0 %v868
        %v987 = vpop.f32.mrf.mxu0
        %v988 = vadd.f32 %v836, %v987
        %v989 = vpop.f32.mrf.mxu0
        %990 = vdwg.mxu0
        %vm991 = vcmask 523264
        %v992 = vsel %vm991, %v953, -inf
        %993 = vmax.xlane.f32.xlu0 %v992
        %v994 = vpop.xlane.xlu0 %993
        %v995 = vsel %vm991, %v958, -inf
        %996 = vmax.xlane.f32.xlu0 %v995
        %v997 = vpop.xlane.xlu0 %996
        %v998 = vsel %vm991, %v963, -inf
        %999 = vmax.xlane.f32.xlu0 %v998
        %v1000 = vpop.xlane.xlu0 %999
        %v1001 = vsel %vm991, %v968, -inf
        %1002 = vmax.xlane.f32.xlu0 %v1001
        %v1003 = vpop.xlane.xlu0 %1002
        %v1004 = vsel %vm991, %v973, -inf
        %1005 = vmax.xlane.f32.xlu0 %v1004
        %v1006 = vpop.xlane.xlu0 %1005
        %v1007 = vsel %vm991, %v978, -inf
        %1008 = vmax.xlane.f32.xlu0 %v1007
        %v1009 = vpop.xlane.xlu0 %1008
        %v1010 = vsel %vm991, %v983, -inf
        %1011 = vmax.xlane.f32.xlu0 %v1010
        %v1012 = vpop.xlane.xlu0 %1011
        %v1013 = vsel %vm991, %v988, -inf
        %1014 = vmax.xlane.f32.xlu0 %v1013
        %v1015 = vpop.xlane.xlu0 %1014
        %v1016 = vsub.f32 %v953, %v994
        %v1017 = vsub.f32 %v958, %v997
        %v1018 = vsub.f32 %v963, %v1000
        %v1019 = vsub.f32 %v968, %v1003
        %v1020 = vsub.f32 %v973, %v1006
        %v1021 = vsub.f32 %v978, %v1009
        %v1022 = vsub.f32 %v983, %v1012
        %v1023 = vsub.f32 %v988, %v1015
        %v1024 = vmul.f32 %v1016, 1.442695
        %v1025 = vpow.pop %v1024
        %v1026 = vmul.f32 %v1017, 1.442695
        %v1027 = vpow.pop %v1026
        %v1028 = vmul.f32 %v1018, 1.442695
        %v1029 = vpow.pop %v1028
        %v1030 = vmul.f32 %v1019, 1.442695
        %v1031 = vpow.pop %v1030
        %v1032 = vmul.f32 %v1020, 1.442695
        %v1033 = vpow.pop %v1032
        %v1034 = vmul.f32 %v1021, 1.442695
        %v1035 = vpow.pop %v1034
        %v1036 = vmul.f32 %v1022, 1.442695
        %v1037 = vpow.pop %v1036
        %v1038 = vmul.f32 %v1023, 1.442695
        %v1039 = vpow.pop %v1038
        %v1040 = vsel %vm991, %v1025, 0.0
        %1041 = vadd.xlane.f32.xlu0 %v1040
        %v1042 = vpop.xlane.xlu0 %1041
        %v1043 = vsel %vm991, %v1027, 0.0
        %1044 = vadd.xlane.f32.xlu0 %v1043
        %v1045 = vpop.xlane.xlu0 %1044
        %v1046 = vsel %vm991, %v1029, 0.0
        %1047 = vadd.xlane.f32.xlu0 %v1046
        %v1048 = vpop.xlane.xlu0 %1047
        %v1049 = vsel %vm991, %v1031, 0.0
        %1050 = vadd.xlane.f32.xlu0 %v1049
        %v1051 = vpop.xlane.xlu0 %1050
        %v1052 = vsel %vm991, %v1033, 0.0
        %1053 = vadd.xlane.f32.xlu0 %v1052
        %v1054 = vpop.xlane.xlu0 %1053
        %v1055 = vsel %vm991, %v1035, 0.0
        %1056 = vadd.xlane.f32.xlu0 %v1055
        %v1057 = vpop.xlane.xlu0 %1056
        %v1058 = vsel %vm991, %v1037, 0.0
        %1059 = vadd.xlane.f32.xlu0 %v1058
        %v1060 = vpop.xlane.xlu0 %1059
        %v1061 = vsel %vm991, %v1039, 0.0
        %1062 = vadd.xlane.f32.xlu0 %v1061
        %v1063 = vpop.xlane.xlu0 %1062
        %v1064 = vrcp.pop %v1042
        %v1065 = vrcp.pop %v1045
        %v1066 = vrcp.pop %v1048
        %v1067 = vrcp.pop %v1051
        %v1068 = vrcp.pop %v1054
        %v1069 = vrcp.pop %v1057
        %v1070 = vrcp.pop %v1060
        %v1071 = vrcp.pop %v1063
        %v1072 = vmul.f32 %v1025, %v1064
        %v1073 = vmul.f32 %v1027, %v1065
        %v1074 = vmul.f32 %v1029, %v1066
        %v1075 = vmul.f32 %v1031, %v1067
        %v1076 = vmul.f32 %v1033, %v1068
        %v1077 = vmul.f32 %v1035, %v1069
        %v1078 = vmul.f32 %v1037, %v1070
        %v1079 = vmul.f32 %v1039, %v1071
        %1080 = vrot.lane.b32.xlu0 %v807, 64
        %v1081 = vpop.permute.xlu0 %1080
        %1082 = vrot.lane.b32.xlu0 %v812, 64
        %v1083 = vpop.permute.xlu0 %1082
        %1084 = vrot.lane.b32.xlu0 %v818, 64
        %v1085 = vpop.permute.xlu0 %1084
        %1086 = vrot.lane.b32.xlu0 %v820, 64
        %v1087 = vpop.permute.xlu0 %1086
        %1088 = vrot.lane.b32.xlu0 %v822, 64
        %v1089 = vpop.permute.xlu0 %1088
        %1090 = vrot.lane.b32.xlu0 %v824, 64
        %v1091 = vpop.permute.xlu0 %1090
        %1092 = vrot.lane.b32.xlu0 %v826, 64
        %v1093 = vpop.permute.xlu0 %1092
        %1094 = vrot.lane.b32.xlu0 %v828, 64
        %v1095 = vpop.permute.xlu0 %1094
        %v1105 = vsel %vm991, %v1072, 0
        %v1108 = vsel %vm991, %v1073, 0
        %v1111 = vsel %vm991, %v1074, 0
        %v1114 = vsel %vm991, %v1075, 0
        %v1117 = vsel %vm991, %v1076, 0
        %v1120 = vsel %vm991, %v1077, 0
        %v1123 = vsel %vm991, %v1078, 0
        %v1126 = vsel %vm991, %v1079, 0
        %1128 = vmatprep.subr.mxu0 0.0
        %1129 = vmatpush1.msra.mxu0 0.0
        %1130 = vmatprep.subr.mxu0 0.0
        %1131 = vmatpush1.msra.mxu0 0.0
        %1132 = vmatprep.subr.mxu0 0.0
        %1133 = vmatpush1.msra.mxu0 0.0
        %1134 = vmatprep.subr.mxu0 0.0
        %1135 = vmatpush1.msra.mxu0 0.0
        %1136 = vmatprep.subr.mxu0 0.0
        %1137 = vmatpush1.msra.mxu0 0.0
        %1138 = vmatprep.subr.mxu0 0.0
        %1139 = vmatpush1.msra.mxu0 0.0
        %1140 = vmatprep.subr.mxu0 0.0
        %1141 = vmatpush1.msra.mxu0 0.0
        %1142 = vmatprep.subr.mxu0 0.0
        %1143 = vmatpush1.msra.mxu0 0.0
        %1144 = vmatprep.subr.mxu0 0.0
        %1145 = vmatpush1.msra.mxu0 %v1095
        %1146 = vmatprep.subr.mxu0 0.0
        %1147 = vmatpush1.msra.mxu0 %v1093
        %1148 = vmatprep.subr.mxu0 0.0
        %1149 = vmatpush1.msra.mxu0 %v1091
        %1150 = vmatprep.subr.mxu0 0.0
        %1151 = vmatpush1.msra.mxu0 %v1089
        %1152 = vmatprep.subr.mxu0 0.0
        %1153 = vmatpush1.msra.mxu0 %v1087
        %1154 = vmatprep.subr.mxu0 0.0
        %1155 = vmatpush1.msra.mxu0 %v1085
        %1156 = vmatprep.subr.mxu0 0.0
        %1157 = vmatpush1.msra.mxu0 %v1083
        %1158 = vmatprep.subr.mxu0 0.0
        %1159 = vmatpush1.msra.mxu0 %v1081
        %1160 = vmatprep.subr.mxu0 0.0
        %1161 = vmatpush2.msra.mxu0 0.0
        %1162 = vmatprep.subr.mxu0 0.0
        %1163 = vmatpush2.msra.mxu0 0.0
        %1164 = vmatprep.subr.mxu0 0.0
        %1165 = vmatpush2.msra.mxu0 0.0
        %1166 = vmatprep.subr.mxu0 0.0
        %1167 = vmatpush2.msra.mxu0 0.0
        %1168 = vmatprep.subr.mxu0 0.0
        %1169 = vmatpush2.msra.mxu0 0.0
        %1170 = vmatprep.subr.mxu0 0.0
        %1171 = vmatpush2.msra.mxu0 0.0
        %1172 = vmatprep.subr.mxu0 0.0
        %1173 = vmatpush2.msra.mxu0 0.0
        %1174 = vmatprep.subr.mxu0 0.0
        %1175 = vmatpush2.msra.mxu0 0.0
        %1176 = vmatprep.subr.mxu0 0.0
        %1177 = vmatpush2.msra.mxu0 0.0
        %1178 = vmatprep.subr.mxu0 0.0
        %1179 = vmatpush2.msra.mxu0 0.0
        %1180 = vmatprep.subr.mxu0 0.0
        %1181 = vmatpush2.msra.mxu0 0.0
        %1182 = vmatprep.subr.mxu0 0.0
        %1183 = vmatpush2.msra.mxu0 0.0
        %1184 = vmatprep.subr.mxu0 0.0
        %1185 = vmatpush2.msra.mxu0 0.0
        %1186 = vmatprep.subr.mxu0 0.0
        %1187 = vmatpush2.msra.mxu0 0.0
        %1188 = vmatprep.subr.mxu0 0.0
        %1189 = vmatpush2.msra.mxu0 0.0
        %1190 = vmatprep.subr.mxu0 0.0
        %1191 = vmatpush2.msra.mxu0 0.0
        %1192 = vmatprep.mubr.f32.mxu0 0.0
        %1193 = vmatmul.mubr.f32.gmra.mxu0 %v1105
        %v1194 = vpop.f32.mrf.mxu0
        %v1195 = vadd.f32 0.0, %v1194
        %v1196 = vpop.f32.mrf.mxu0
        %1197 = vmatprep.mubr.f32.mxu0 0.0
        %1198 = vmatmul.mubr.f32.gmra.mxu0 %v1108
        %v1199 = vpop.f32.mrf.mxu0
        %v1200 = vadd.f32 0.0, %v1199
        %v1201 = vpop.f32.mrf.mxu0
        %1202 = vmatprep.mubr.f32.mxu0 0.0
        %1203 = vmatmul.mubr.f32.gmra.mxu0 %v1111
        %v1204 = vpop.f32.mrf.mxu0
        %v1205 = vadd.f32 0.0, %v1204
        %v1206 = vpop.f32.mrf.mxu0
        %1207 = vmatprep.mubr.f32.mxu0 0.0
        %1208 = vmatmul.mubr.f32.gmra.mxu0 %v1114
        %v1209 = vpop.f32.mrf.mxu0
        %v1210 = vadd.f32 0.0, %v1209
        %v1211 = vpop.f32.mrf.mxu0
        %1212 = vmatprep.mubr.f32.mxu0 0.0
        %1213 = vmatmul.mubr.f32.gmra.mxu0 %v1117
        %v1214 = vpop.f32.mrf.mxu0
        %v1215 = vadd.f32 0.0, %v1214
        %v1216 = vpop.f32.mrf.mxu0
        %1217 = vmatprep.mubr.f32.mxu0 0.0
        %1218 = vmatmul.mubr.f32.gmra.mxu0 %v1120
        %v1219 = vpop.f32.mrf.mxu0
        %v1220 = vadd.f32 0.0, %v1219
        %v1221 = vpop.f32.mrf.mxu0
        %1222 = vmatprep.mubr.f32.mxu0 0.0
        %1223 = vmatmul.mubr.f32.gmra.mxu0 %v1123
        %v1224 = vpop.f32.mrf.mxu0
        %v1225 = vadd.f32 0.0, %v1224
        %v1226 = vpop.f32.mrf.mxu0
        %1227 = vmatprep.mubr.f32.mxu0 0.0
        %1228 = vmatmul.mubr.f32.gmra.mxu0 %v1126
        %v1229 = vpop.f32.mrf.mxu0
        %v1230 = vadd.f32 0.0, %v1229
        %v1231 = vpop.f32.mrf.mxu0
        %1232 = vdwg.mxu0
        %1235 = vrot.lane.b32.xlu0 %v1205, 8
        %v1236 = vpop.permute.xlu0 %1235
        %1237 = vrot.lane.b32.xlu0 %v1210, 8
        %v1238 = vpop.permute.xlu0 %1237
        %1243 = vrot.lane.b32.xlu0 %v1215, 16
        %v1244 = vpop.permute.xlu0 %1243
        %1245 = vrot.lane.b32.xlu0 %v1220, 16
        %v1246 = vpop.permute.xlu0 %1245
        %1251 = vrot.lane.b32.xlu0 %v1225, 24
        %v1252 = vpop.permute.xlu0 %1251
        %1253 = vrot.lane.b32.xlu0 %v1230, 24
        %v1254 = vpop.permute.xlu0 %1253
        %v1257 = vsel %vm853, %v1195, %v1236
        %v1258 = vsel %vm853, %v1200, %v1238
        %vm1259 = vcmask 130048
        %v1260 = vsel %vm1259, %v1257, %v1244
        %v1261 = vsel %vm1259, %v1258, %v1246
        %vm1262 = vcmask 195584
        %v1263 = vsel %vm1262, %v1260, %v1252
        %v1264 = vsel %vm1262, %v1261, %v1254
        %v1265 = vlaneseq
        %v1266 = vshrl.u32 %v1265, 7
        %v1267 = vsub.s32 1, %v1266
        %v1268 = vrot.slane %v728, %v1267
        %1273 = vrot.lane.b32.xlu0 %v724, 32
        %v1274 = vpop.permute.xlu0 %1273
        %1275 = vrot.lane.b32.xlu0 %v725, 32
        %v1276 = vpop.permute.xlu0 %1275
        %1277 = vrot.lane.b32.xlu0 %v726, 32
        %v1278 = vpop.permute.xlu0 %1277
        %1279 = vrot.lane.b32.xlu0 %v727, 32
        %v1280 = vpop.permute.xlu0 %1279
        %v1286 = vsel %vm733, %v1263, 0
        %v1289 = vsel %vm733, %v1264, 0
        %1291 = vmatprep.subr.mxu0 0.0
        %1292 = vmatpush1.msra.mxu0 0.0
        %1293 = vmatprep.subr.mxu0 0.0
        %1294 = vmatpush1.msra.mxu0 0.0
        %1295 = vmatprep.subr.mxu0 0.0
        %1296 = vmatpush1.msra.mxu0 0.0
        %1297 = vmatprep.subr.mxu0 0.0
        %1298 = vmatpush1.msra.mxu0 0.0
        %1299 = vmatprep.subr.mxu0 0.0
        %1300 = vmatpush1.msra.mxu0 0.0
        %1301 = vmatprep.subr.mxu0 0.0
        %1302 = vmatpush1.msra.mxu0 0.0
        %1303 = vmatprep.subr.mxu0 0.0
        %1304 = vmatpush1.msra.mxu0 0.0
        %1305 = vmatprep.subr.mxu0 0.0
        %1306 = vmatpush1.msra.mxu0 0.0
        %1307 = vmatprep.subr.mxu0 0.0
        %1308 = vmatpush1.msra.mxu0 0.0
        %1309 = vmatprep.subr.mxu0 0.0
        %1310 = vmatpush1.msra.mxu0 0.0
        %1311 = vmatprep.subr.mxu0 0.0
        %1312 = vmatpush1.msra.mxu0 0.0
        %1313 = vmatprep.subr.mxu0 0.0
        %1314 = vmatpush1.msra.mxu0 0.0
        %1315 = vmatprep.subr.mxu0 0.0
        %1316 = vmatpush1.msra.mxu0 %v1280
        %1317 = vmatprep.subr.mxu0 0.0
        %1318 = vmatpush1.msra.mxu0 %v1278
        %1319 = vmatprep.subr.mxu0 0.0
        %1320 = vmatpush1.msra.mxu0 %v1276
        %1321 = vmatprep.subr.mxu0 0.0
        %1322 = vmatpush1.msra.mxu0 %v1274
        %1323 = vmatprep.subr.mxu0 0.0
        %1324 = vmatpush2.msra.mxu0 0.0
        %1325 = vmatprep.subr.mxu0 0.0
        %1326 = vmatpush2.msra.mxu0 0.0
        %1327 = vmatprep.subr.mxu0 0.0
        %1328 = vmatpush2.msra.mxu0 0.0
        %1329 = vmatprep.subr.mxu0 0.0
        %1330 = vmatpush2.msra.mxu0 0.0
        %1331 = vmatprep.subr.mxu0 0.0
        %1332 = vmatpush2.msra.mxu0 0.0
        %1333 = vmatprep.subr.mxu0 0.0
        %1334 = vmatpush2.msra.mxu0 0.0
        %1335 = vmatprep.subr.mxu0 0.0
        %1336 = vmatpush2.msra.mxu0 0.0
        %1337 = vmatprep.subr.mxu0 0.0
        %1338 = vmatpush2.msra.mxu0 0.0
        %1339 = vmatprep.subr.mxu0 0.0
        %1340 = vmatpush2.msra.mxu0 0.0
        %1341 = vmatprep.subr.mxu0 0.0
        %1342 = vmatpush2.msra.mxu0 0.0
        %1343 = vmatprep.subr.mxu0 0.0
        %1344 = vmatpush2.msra.mxu0 0.0
        %1345 = vmatprep.subr.mxu0 0.0
        %1346 = vmatpush2.msra.mxu0 0.0
        %1347 = vmatprep.subr.mxu0 0.0
        %1348 = vmatpush2.msra.mxu0 0.0
        %1349 = vmatprep.subr.mxu0 0.0
        %1350 = vmatpush2.msra.mxu0 0.0
        %1351 = vmatprep.subr.mxu0 0.0
        %1352 = vmatpush2.msra.mxu0 0.0
        %1353 = vmatprep.subr.mxu0 0.0
        %1354 = vmatpush2.msra.mxu0 0.0
        %1355 = vmatprep.mubr.f32.mxu0 0.0
        %1356 = vmatmul.mubr.f32.gmra.mxu0 %v1286
        %v1357 = vpop.f32.mrf.mxu0
        %v1358 = vadd.f32 %v1268, %v1357
        %v1359 = vpop.f32.mrf.mxu0
        %1360 = vmatprep.mubr.f32.mxu0 0.0
        %1361 = vmatmul.mubr.f32.gmra.mxu0 %v1289
        %v1362 = vpop.f32.mrf.mxu0
        %v1363 = vadd.f32 %v1268, %v1362
        %v1364 = vpop.f32.mrf.mxu0
        %1365 = vdwg.mxu0
        %v1366 = vadd.f32 %v722, %v1358
        %v1367 = vadd.f32 %v723, %v1363
        %v1368 = vsel %vm733, %v1366, 0.0
        %1369 = vadd.xlane.f32.xlu0 %v1368
        %v1370 = vpop.xlane.xlu0 %1369
        %v1371 = vsel %vm733, %v1367, 0.0
        %1372 = vadd.xlane.f32.xlu0 %v1371
        %v1373 = vpop.xlane.xlu0 %1372
        %v1374 = vrcp.pop 32.0
        %v1375 = vmul.f32 %v1370, %v1374
        %v1376 = vmul.f32 %v1373, %v1374
        %v1377 = vsub.f32 %v1366, %v1375
        %v1378 = vsub.f32 %v1367, %v1376
        %v1379 = vmul.f32 %v1377, %v1377
        %v1380 = vmul.f32 %v1378, %v1378
        %v1381 = vsel %vm733, %v1379, 0.0
        %1382 = vadd.xlane.f32.xlu0 %v1381
        %v1383 = vpop.xlane.xlu0 %1382
        %v1384 = vsel %vm733, %v1380, 0.0
        %1385 = vadd.xlane.f32.xlu0 %v1384
        %v1386 = vpop.xlane.xlu0 %1385
        %v1387 = vmul.f32 %v1383, %v1374
        %v1388 = vmul.f32 %v1386, %v1374
        %v1389 = vadd.f32 %v1387, 1e-05
        %v1390 = vadd.f32 %v1388, 1e-05
        %v1391 = vrsqrt.pop %v1389
        %v1392 = vrsqrt.pop %v1390
        %v1393 = vmul.f32 %v1377, %v1391
        %v1394 = vmul.f32 %v1378, %v1392
        %1396 = vrot.lane.b32.xlu0 %v1268, 96
        %v1397 = vpop.permute.xlu0 %1396
        %v1399 = vmul.f32 %v1393, %v1397
        %v1400 = vmul.f32 %v1394, %v1397
        %1401 = vrot.lane.b32.xlu0 %v1268, 64
        %v1402 = vpop.permute.xlu0 %1401
        %v1404 = vadd.f32 %v1399, %v1402
        %v1405 = vadd.f32 %v1400, %v1402
        %v1406 = vld [vmem:[%s558] sm:$0xff]
        %v1407 = vld [vmem:[%s558 + $0x8] sm:$0xff]
        %v1408 = vld [vmem:[%s558 + $0x10] sm:$0xff]
        %v1409 = vld [vmem:[%s558 + $0x18] sm:$0xff]
        %v1410 = vld [vmem:[%s558 + $0x20] sm:$0xff]
        %v1411 = vld [vmem:[%s558 + $0x28] sm:$0xff]
        %v1412 = vld [vmem:[%s558 + $0x30] sm:$0xff]
        %v1413 = vld [vmem:[%s558 + $0x38] sm:$0xff]
        %v1414 = vld [vmem:[%s558 + $0x40] sm:$0xff]
        %v1415 = vld [vmem:[%s558 + $0x48] sm:$0xff]
        %v1416 = vld [vmem:[%s558 + $0x50] sm:$0xff]
        %v1417 = vld [vmem:[%s558 + $0x58] sm:$0xff]
        %v1418 = vld [vmem:[%s558 + $0x60] sm:$0xff]
        %v1419 = vld [vmem:[%s558 + $0x68] sm:$0xff]
        %v1420 = vld [vmem:[%s558 + $0x70] sm:$0xff]
        %v1421 = vld [vmem:[%s558 + $0x78] sm:$0xff]
        %v1422 = vld [vmem:[%s558 + $0x80] sm:$0xff]
        %v1423 = vld [vmem:[%s558 + $0x88] sm:$0xff]
        %v1424 = vld [vmem:[%s558 + $0x90] sm:$0xff]
        %v1425 = vld [vmem:[%s558 + $0x98] sm:$0xff]
        %v1426 = vld [vmem:[%s558 + $0xa0] sm:$0xff]
        %v1427 = vld [vmem:[%s558 + $0xa8] sm:$0xff]
        %v1428 = vld [vmem:[%s558 + $0xb0] sm:$0xff]
        %v1429 = vld [vmem:[%s558 + $0xb8] sm:$0xff]
        %v1430 = vld [vmem:[%s558 + $0xc0] sm:$0xff]
        %v1431 = vld [vmem:[%s558 + $0xc8] sm:$0xff]
        %v1432 = vld [vmem:[%s558 + $0xd0] sm:$0xff]
        %v1433 = vld [vmem:[%s558 + $0xd8] sm:$0xff]
        %v1434 = vld [vmem:[%s558 + $0xe0] sm:$0xff]
        %v1435 = vld [vmem:[%s558 + $0xe8] sm:$0xff]
        %v1436 = vld [vmem:[%s558 + $0xf0] sm:$0xff]
        %v1437 = vld [vmem:[%s558 + $0xf8] sm:$0xff]
        %v1438 = vld [vmem:[%s558 + $0x100] sm:$0xff]
        %v1439 = vld [vmem:[%s558 + $0x108] sm:$0xff]
        %v1440 = vld [vmem:[%s558 + $0x110] sm:$0xff]
        %v1441 = vld [vmem:[%s558 + $0x118] sm:$0xff]
        %v1442 = vld [vmem:[%s558 + $0x120] sm:$0xff]
        %v1443 = vld [vmem:[%s558 + $0x128] sm:$0xff]
        %v1444 = vld [vmem:[%s558 + $0x130] sm:$0xff]
        %v1445 = vld [vmem:[%s558 + $0x138] sm:$0xff]
        %v1446 = vld [vmem:[%s558 + $0x140] sm:$0xff]
        %v1447 = vld [vmem:[%s558 + $0x148] sm:$0xff]
        %v1448 = vld [vmem:[%s558 + $0x150] sm:$0xff]
        %v1449 = vld [vmem:[%s558 + $0x158] sm:$0xff]
        %v1450 = vld [vmem:[%s558 + $0x160] sm:$0xff]
        %v1451 = vld [vmem:[%s558 + $0x168] sm:$0xff]
        %v1452 = vld [vmem:[%s558 + $0x170] sm:$0xff]
        %v1453 = vld [vmem:[%s558 + $0x178] sm:$0xff]
        %v1454 = vld [vmem:[%s558 + $0x180] sm:$0xff]
        %v1455 = vld [vmem:[%s558 + $0x188] sm:$0xff]
        %v1456 = vld [vmem:[%s558 + $0x190] sm:$0xff]
        %v1457 = vld [vmem:[%s558 + $0x198] sm:$0xff]
        %v1458 = vld [vmem:[%s558 + $0x1a0] sm:$0xff]
        %v1459 = vld [vmem:[%s558 + $0x1a8] sm:$0xff]
        %v1460 = vld [vmem:[%s558 + $0x1b0] sm:$0xff]
        %v1461 = vld [vmem:[%s558 + $0x1b8] sm:$0xff]
        %v1462 = vld [vmem:[%s558 + $0x1c0] sm:$0xff]
        %v1463 = vld [vmem:[%s558 + $0x1c8] sm:$0xff]
        %v1464 = vld [vmem:[%s558 + $0x1d0] sm:$0xff]
        %v1465 = vld [vmem:[%s558 + $0x1d8] sm:$0xff]
        %v1466 = vld [vmem:[%s558 + $0x1e0] sm:$0xff]
        %v1467 = vld [vmem:[%s558 + $0x1e8] sm:$0xff]
        %v1468 = vld [vmem:[%s558 + $0x1f0] sm:$0xff]
        %v1469 = vld [vmem:[%s558 + $0x1f8] sm:$0xff]
        %v1470 = vld [vmem:[%s558 + $0x200] sm:$0x1]
        %v1471 = vld [vmem:[%s558 + $0x208] sm:$0x1]
        %v1472 = vld [vmem:[%s558 + $0x210] sm:$0x1]
        %v1473 = vld [vmem:[%s558 + $0x218] sm:$0x1]
        %v1474 = vld [vmem:[%s558 + $0x220] sm:$0x1]
        %v1475 = vld [vmem:[%s558 + $0x228] sm:$0x1]
        %v1476 = vld [vmem:[%s558 + $0x230] sm:$0x1]
        %v1477 = vld [vmem:[%s558 + $0x238] sm:$0x1]
        %v1478 = vld [vmem:[%s558 + $0x240] sm:$0x1]
        %v1479 = vld [vmem:[%s558 + $0x248] sm:$0x1]
        %v1480 = vld [vmem:[%s558 + $0x250] sm:$0x1]
        %v1481 = vld [vmem:[%s558 + $0x258] sm:$0x1]
        %v1482 = vld [vmem:[%s558 + $0x260] sm:$0x1]
        %v1483 = vld [vmem:[%s558 + $0x268] sm:$0x1]
        %v1484 = vld [vmem:[%s558 + $0x270] sm:$0x1]
        %v1485 = vld [vmem:[%s558 + $0x278] sm:$0x1]
        %v1486 = vlaneseq
        %v1487 = vshrl.u32 %v1486, 7
        %v1488 = vsub.s32 0, %v1487
        %v1489 = vrot.slane %v1470, %v1488
        %v1490 = vlaneseq
        %v1491 = vshrl.u32 %v1490, 7
        %v1492 = vsub.s32 0, %v1491
        %v1493 = vrot.slane %v1471, %v1492
        %v1494 = vlaneseq
        %v1495 = vshrl.u32 %v1494, 7
        %v1496 = vsub.s32 0, %v1495
        %v1497 = vrot.slane %v1472, %v1496
        %v1498 = vlaneseq
        %v1499 = vshrl.u32 %v1498, 7
        %v1500 = vsub.s32 0, %v1499
        %v1501 = vrot.slane %v1473, %v1500
        %v1502 = vlaneseq
        %v1503 = vshrl.u32 %v1502, 7
        %v1504 = vsub.s32 0, %v1503
        %v1505 = vrot.slane %v1474, %v1504
        %v1506 = vlaneseq
        %v1507 = vshrl.u32 %v1506, 7
        %v1508 = vsub.s32 0, %v1507
        %v1509 = vrot.slane %v1475, %v1508
        %v1510 = vlaneseq
        %v1511 = vshrl.u32 %v1510, 7
        %v1512 = vsub.s32 0, %v1511
        %v1513 = vrot.slane %v1476, %v1512
        %v1514 = vlaneseq
        %v1515 = vshrl.u32 %v1514, 7
        %v1516 = vsub.s32 0, %v1515
        %v1517 = vrot.slane %v1477, %v1516
        %v1518 = vlaneseq
        %v1519 = vshrl.u32 %v1518, 7
        %v1520 = vsub.s32 0, %v1519
        %v1521 = vrot.slane %v1478, %v1520
        %v1522 = vlaneseq
        %v1523 = vshrl.u32 %v1522, 7
        %v1524 = vsub.s32 0, %v1523
        %v1525 = vrot.slane %v1479, %v1524
        %v1526 = vlaneseq
        %v1527 = vshrl.u32 %v1526, 7
        %v1528 = vsub.s32 0, %v1527
        %v1529 = vrot.slane %v1480, %v1528
        %v1530 = vlaneseq
        %v1531 = vshrl.u32 %v1530, 7
        %v1532 = vsub.s32 0, %v1531
        %v1533 = vrot.slane %v1481, %v1532
        %v1534 = vlaneseq
        %v1535 = vshrl.u32 %v1534, 7
        %v1536 = vsub.s32 0, %v1535
        %v1537 = vrot.slane %v1482, %v1536
        %v1538 = vlaneseq
        %v1539 = vshrl.u32 %v1538, 7
        %v1540 = vsub.s32 0, %v1539
        %v1541 = vrot.slane %v1483, %v1540
        %v1542 = vlaneseq
        %v1543 = vshrl.u32 %v1542, 7
        %v1544 = vsub.s32 0, %v1543
        %v1545 = vrot.slane %v1484, %v1544
        %v1546 = vlaneseq
        %v1547 = vshrl.u32 %v1546, 7
        %v1548 = vsub.s32 0, %v1547
        %v1549 = vrot.slane %v1485, %v1548
        %v1551 = vsel %vm733, %v1404, 0
        %v1554 = vsel %vm733, %v1405, 0
        %1556 = vmatprep.subr.mxu0 0.0
        %1557 = vmatpush1.msra.mxu0 0.0
        %1558 = vmatprep.subr.mxu0 0.0
        %1559 = vmatpush1.msra.mxu0 0.0
        %1560 = vmatprep.subr.mxu0 0.0
        %1561 = vmatpush1.msra.mxu0 0.0
        %1562 = vmatprep.subr.mxu0 0.0
        %1563 = vmatpush1.msra.mxu0 0.0
        %1564 = vmatprep.subr.mxu0 0.0
        %1565 = vmatpush1.msra.mxu0 0.0
        %1566 = vmatprep.subr.mxu0 0.0
        %1567 = vmatpush1.msra.mxu0 0.0
        %1568 = vmatprep.subr.mxu0 0.0
        %1569 = vmatpush1.msra.mxu0 0.0
        %1570 = vmatprep.subr.mxu0 0.0
        %1571 = vmatpush1.msra.mxu0 0.0
        %1572 = vmatprep.subr.mxu0 0.0
        %1573 = vmatpush1.msra.mxu0 0.0
        %1574 = vmatprep.subr.mxu0 0.0
        %1575 = vmatpush1.msra.mxu0 0.0
        %1576 = vmatprep.subr.mxu0 0.0
        %1577 = vmatpush1.msra.mxu0 0.0
        %1578 = vmatprep.subr.mxu0 0.0
        %1579 = vmatpush1.msra.mxu0 0.0
        %1580 = vmatprep.subr.mxu0 %v1455
        %1581 = vmatpush1.msra.mxu0 %v1454
        %1582 = vmatprep.subr.mxu0 %v1439
        %1583 = vmatpush1.msra.mxu0 %v1438
        %1584 = vmatprep.subr.mxu0 %v1423
        %1585 = vmatpush1.msra.mxu0 %v1422
        %1586 = vmatprep.subr.mxu0 %v1407
        %1587 = vmatpush1.msra.mxu0 %v1406
        %1588 = vmatprep.subr.mxu0 0.0
        %1589 = vmatpush2.msra.mxu0 0.0
        %1590 = vmatprep.subr.mxu0 0.0
        %1591 = vmatpush2.msra.mxu0 0.0
        %1592 = vmatprep.subr.mxu0 0.0
        %1593 = vmatpush2.msra.mxu0 0.0
        %1594 = vmatprep.subr.mxu0 0.0
        %1595 = vmatpush2.msra.mxu0 0.0
        %1596 = vmatprep.subr.mxu0 0.0
        %1597 = vmatpush2.msra.mxu0 0.0
        %1598 = vmatprep.subr.mxu0 0.0
        %1599 = vmatpush2.msra.mxu0 0.0
        %1600 = vmatprep.subr.mxu0 0.0
        %1601 = vmatpush2.msra.mxu0 0.0
        %1602 = vmatprep.subr.mxu0 0.0
        %1603 = vmatpush2.msra.mxu0 0.0
        %1604 = vmatprep.subr.mxu0 0.0
        %1605 = vmatpush2.msra.mxu0 0.0
        %1606 = vmatprep.subr.mxu0 0.0
        %1607 = vmatpush2.msra.mxu0 0.0
        %1608 = vmatprep.subr.mxu0 0.0
        %1609 = vmatpush2.msra.mxu0 0.0
        %1610 = vmatprep.subr.mxu0 0.0
        %1611 = vmatpush2.msra.mxu0 0.0
        %1612 = vmatprep.subr.mxu0 0.0
        %1613 = vmatpush2.msra.mxu0 0.0
        %1614 = vmatprep.subr.mxu0 0.0
        %1615 = vmatpush2.msra.mxu0 0.0
        %1616 = vmatprep.subr.mxu0 0.0
        %1617 = vmatpush2.msra.mxu0 0.0
        %1618 = vmatprep.subr.mxu0 0.0
        %1619 = vmatpush2.msra.mxu0 0.0
        %1620 = vmatprep.mubr.f32.mxu0 0.0
        %1621 = vmatmul.mubr.f32.gmra.mxu0 %v1551
        %v1622 = vpop.f32.mrf.mxu0
        %v1623 = vadd.f32 %v1489, %v1622
        %v1624 = vpop.f32.mrf.mxu0
        %v1625 = vadd.f32 %v1493, %v1624
        %1626 = vmatprep.mubr.f32.mxu0 0.0
        %1627 = vmatmul.mubr.f32.gmra.mxu0 %v1554
        %v1628 = vpop.f32.mrf.mxu0
        %v1629 = vadd.f32 %v1489, %v1628
        %v1630 = vpop.f32.mrf.mxu0
        %v1631 = vadd.f32 %v1493, %v1630
        %1632 = vdwg.mxu0
        %1633 = vmatprep.subr.mxu0 0.0
        %1634 = vmatpush1.msra.mxu0 0.0
        %1635 = vmatprep.subr.mxu0 0.0
        %1636 = vmatpush1.msra.mxu0 0.0
        %1637 = vmatprep.subr.mxu0 0.0
        %1638 = vmatpush1.msra.mxu0 0.0
        %1639 = vmatprep.subr.mxu0 0.0
        %1640 = vmatpush1.msra.mxu0 0.0
        %1641 = vmatprep.subr.mxu0 0.0
        %1642 = vmatpush1.msra.mxu0 0.0
        %1643 = vmatprep.subr.mxu0 0.0
        %1644 = vmatpush1.msra.mxu0 0.0
        %1645 = vmatprep.subr.mxu0 0.0
        %1646 = vmatpush1.msra.mxu0 0.0
        %1647 = vmatprep.subr.mxu0 0.0
        %1648 = vmatpush1.msra.mxu0 0.0
        %1649 = vmatprep.subr.mxu0 0.0
        %1650 = vmatpush1.msra.mxu0 0.0
        %1651 = vmatprep.subr.mxu0 0.0
        %1652 = vmatpush1.msra.mxu0 0.0
        %1653 = vmatprep.subr.mxu0 0.0
        %1654 = vmatpush1.msra.mxu0 0.0
        %1655 = vmatprep.subr.mxu0 0.0
        %1656 = vmatpush1.msra.mxu0 0.0
        %1657 = vmatprep.subr.mxu0 %v1457
        %1658 = vmatpush1.msra.mxu0 %v1456
        %1659 = vmatprep.subr.mxu0 %v1441
        %1660 = vmatpush1.msra.mxu0 %v1440
        %1661 = vmatprep.subr.mxu0 %v1425
        %1662 = vmatpush1.msra.mxu0 %v1424
        %1663 = vmatprep.subr.mxu0 %v1409
        %1664 = vmatpush1.msra.mxu0 %v1408
        %1665 = vmatprep.subr.mxu0 0.0
        %1666 = vmatpush2.msra.mxu0 0.0
        %1667 = vmatprep.subr.mxu0 0.0
        %1668 = vmatpush2.msra.mxu0 0.0
        %1669 = vmatprep.subr.mxu0 0.0
        %1670 = vmatpush2.msra.mxu0 0.0
        %1671 = vmatprep.subr.mxu0 0.0
        %1672 = vmatpush2.msra.mxu0 0.0
        %1673 = vmatprep.subr.mxu0 0.0
        %1674 = vmatpush2.msra.mxu0 0.0
        %1675 = vmatprep.subr.mxu0 0.0
        %1676 = vmatpush2.msra.mxu0 0.0
        %1677 = vmatprep.subr.mxu0 0.0
        %1678 = vmatpush2.msra.mxu0 0.0
        %1679 = vmatprep.subr.mxu0 0.0
        %1680 = vmatpush2.msra.mxu0 0.0
        %1681 = vmatprep.subr.mxu0 0.0
        %1682 = vmatpush2.msra.mxu0 0.0
        %1683 = vmatprep.subr.mxu0 0.0
        %1684 = vmatpush2.msra.mxu0 0.0
        %1685 = vmatprep.subr.mxu0 0.0
        %1686 = vmatpush2.msra.mxu0 0.0
        %1687 = vmatprep.subr.mxu0 0.0
        %1688 = vmatpush2.msra.mxu0 0.0
        %1689 = vmatprep.subr.mxu0 0.0
        %1690 = vmatpush2.msra.mxu0 0.0
        %1691 = vmatprep.subr.mxu0 0.0
        %1692 = vmatpush2.msra.mxu0 0.0
        %1693 = vmatprep.subr.mxu0 0.0
        %1694 = vmatpush2.msra.mxu0 0.0
        %1695 = vmatprep.subr.mxu0 0.0
        %1696 = vmatpush2.msra.mxu0 0.0
        %1697 = vmatprep.mubr.f32.mxu0 0.0
        %1698 = vmatmul.mubr.f32.gmra.mxu0 %v1551
        %v1699 = vpop.f32.mrf.mxu0
        %v1700 = vadd.f32 %v1497, %v1699
        %v1701 = vpop.f32.mrf.mxu0
        %v1702 = vadd.f32 %v1501, %v1701
        %1703 = vmatprep.mubr.f32.mxu0 0.0
        %1704 = vmatmul.mubr.f32.gmra.mxu0 %v1554
        %v1705 = vpop.f32.mrf.mxu0
        %v1706 = vadd.f32 %v1497, %v1705
        %v1707 = vpop.f32.mrf.mxu0
        %v1708 = vadd.f32 %v1501, %v1707
        %1709 = vdwg.mxu0
        %1710 = vmatprep.subr.mxu0 0.0
        %1711 = vmatpush1.msra.mxu0 0.0
        %1712 = vmatprep.subr.mxu0 0.0
        %1713 = vmatpush1.msra.mxu0 0.0
        %1714 = vmatprep.subr.mxu0 0.0
        %1715 = vmatpush1.msra.mxu0 0.0
        %1716 = vmatprep.subr.mxu0 0.0
        %1717 = vmatpush1.msra.mxu0 0.0
        %1718 = vmatprep.subr.mxu0 0.0
        %1719 = vmatpush1.msra.mxu0 0.0
        %1720 = vmatprep.subr.mxu0 0.0
        %1721 = vmatpush1.msra.mxu0 0.0
        %1722 = vmatprep.subr.mxu0 0.0
        %1723 = vmatpush1.msra.mxu0 0.0
        %1724 = vmatprep.subr.mxu0 0.0
        %1725 = vmatpush1.msra.mxu0 0.0
        %1726 = vmatprep.subr.mxu0 0.0
        %1727 = vmatpush1.msra.mxu0 0.0
        %1728 = vmatprep.subr.mxu0 0.0
        %1729 = vmatpush1.msra.mxu0 0.0
        %1730 = vmatprep.subr.mxu0 0.0
        %1731 = vmatpush1.msra.mxu0 0.0
        %1732 = vmatprep.subr.mxu0 0.0
        %1733 = vmatpush1.msra.mxu0 0.0
        %1734 = vmatprep.subr.mxu0 %v1459
        %1735 = vmatpush1.msra.mxu0 %v1458
        %1736 = vmatprep.subr.mxu0 %v1443
        %1737 = vmatpush1.msra.mxu0 %v1442
        %1738 = vmatprep.subr.mxu0 %v1427
        %1739 = vmatpush1.msra.mxu0 %v1426
        %1740 = vmatprep.subr.mxu0 %v1411
        %1741 = vmatpush1.msra.mxu0 %v1410
        %1742 = vmatprep.subr.mxu0 0.0
        %1743 = vmatpush2.msra.mxu0 0.0
        %1744 = vmatprep.subr.mxu0 0.0
        %1745 = vmatpush2.msra.mxu0 0.0
        %1746 = vmatprep.subr.mxu0 0.0
        %1747 = vmatpush2.msra.mxu0 0.0
        %1748 = vmatprep.subr.mxu0 0.0
        %1749 = vmatpush2.msra.mxu0 0.0
        %1750 = vmatprep.subr.mxu0 0.0
        %1751 = vmatpush2.msra.mxu0 0.0
        %1752 = vmatprep.subr.mxu0 0.0
        %1753 = vmatpush2.msra.mxu0 0.0
        %1754 = vmatprep.subr.mxu0 0.0
        %1755 = vmatpush2.msra.mxu0 0.0
        %1756 = vmatprep.subr.mxu0 0.0
        %1757 = vmatpush2.msra.mxu0 0.0
        %1758 = vmatprep.subr.mxu0 0.0
        %1759 = vmatpush2.msra.mxu0 0.0
        %1760 = vmatprep.subr.mxu0 0.0
        %1761 = vmatpush2.msra.mxu0 0.0
        %1762 = vmatprep.subr.mxu0 0.0
        %1763 = vmatpush2.msra.mxu0 0.0
        %1764 = vmatprep.subr.mxu0 0.0
        %1765 = vmatpush2.msra.mxu0 0.0
        %1766 = vmatprep.subr.mxu0 0.0
        %1767 = vmatpush2.msra.mxu0 0.0
        %1768 = vmatprep.subr.mxu0 0.0
        %1769 = vmatpush2.msra.mxu0 0.0
        %1770 = vmatprep.subr.mxu0 0.0
        %1771 = vmatpush2.msra.mxu0 0.0
        %1772 = vmatprep.subr.mxu0 0.0
        %1773 = vmatpush2.msra.mxu0 0.0
        %1774 = vmatprep.mubr.f32.mxu0 0.0
        %1775 = vmatmul.mubr.f32.gmra.mxu0 %v1551
        %v1776 = vpop.f32.mrf.mxu0
        %v1777 = vadd.f32 %v1505, %v1776
        %v1778 = vpop.f32.mrf.mxu0
        %v1779 = vadd.f32 %v1509, %v1778
        %1780 = vmatprep.mubr.f32.mxu0 0.0
        %1781 = vmatmul.mubr.f32.gmra.mxu0 %v1554
        %v1782 = vpop.f32.mrf.mxu0
        %v1783 = vadd.f32 %v1505, %v1782
        %v1784 = vpop.f32.mrf.mxu0
        %v1785 = vadd.f32 %v1509, %v1784
        %1786 = vdwg.mxu0
        %1787 = vmatprep.subr.mxu0 0.0
        %1788 = vmatpush1.msra.mxu0 0.0
        %1789 = vmatprep.subr.mxu0 0.0
        %1790 = vmatpush1.msra.mxu0 0.0
        %1791 = vmatprep.subr.mxu0 0.0
        %1792 = vmatpush1.msra.mxu0 0.0
        %1793 = vmatprep.subr.mxu0 0.0
        %1794 = vmatpush1.msra.mxu0 0.0
        %1795 = vmatprep.subr.mxu0 0.0
        %1796 = vmatpush1.msra.mxu0 0.0
        %1797 = vmatprep.subr.mxu0 0.0
        %1798 = vmatpush1.msra.mxu0 0.0
        %1799 = vmatprep.subr.mxu0 0.0
        %1800 = vmatpush1.msra.mxu0 0.0
        %1801 = vmatprep.subr.mxu0 0.0
        %1802 = vmatpush1.msra.mxu0 0.0
        %1803 = vmatprep.subr.mxu0 0.0
        %1804 = vmatpush1.msra.mxu0 0.0
        %1805 = vmatprep.subr.mxu0 0.0
        %1806 = vmatpush1.msra.mxu0 0.0
        %1807 = vmatprep.subr.mxu0 0.0
        %1808 = vmatpush1.msra.mxu0 0.0
        %1809 = vmatprep.subr.mxu0 0.0
        %1810 = vmatpush1.msra.mxu0 0.0
        %1811 = vmatprep.subr.mxu0 %v1461
        %1812 = vmatpush1.msra.mxu0 %v1460
        %1813 = vmatprep.subr.mxu0 %v1445
        %1814 = vmatpush1.msra.mxu0 %v1444
        %1815 = vmatprep.subr.mxu0 %v1429
        %1816 = vmatpush1.msra.mxu0 %v1428
        %1817 = vmatprep.subr.mxu0 %v1413
        %1818 = vmatpush1.msra.mxu0 %v1412
        %1819 = vmatprep.subr.mxu0 0.0
        %1820 = vmatpush2.msra.mxu0 0.0
        %1821 = vmatprep.subr.mxu0 0.0
        %1822 = vmatpush2.msra.mxu0 0.0
        %1823 = vmatprep.subr.mxu0 0.0
        %1824 = vmatpush2.msra.mxu0 0.0
        %1825 = vmatprep.subr.mxu0 0.0
        %1826 = vmatpush2.msra.mxu0 0.0
        %1827 = vmatprep.subr.mxu0 0.0
        %1828 = vmatpush2.msra.mxu0 0.0
        %1829 = vmatprep.subr.mxu0 0.0
        %1830 = vmatpush2.msra.mxu0 0.0
        %1831 = vmatprep.subr.mxu0 0.0
        %1832 = vmatpush2.msra.mxu0 0.0
        %1833 = vmatprep.subr.mxu0 0.0
        %1834 = vmatpush2.msra.mxu0 0.0
        %1835 = vmatprep.subr.mxu0 0.0
        %1836 = vmatpush2.msra.mxu0 0.0
        %1837 = vmatprep.subr.mxu0 0.0
        %1838 = vmatpush2.msra.mxu0 0.0
        %1839 = vmatprep.subr.mxu0 0.0
        %1840 = vmatpush2.msra.mxu0 0.0
        %1841 = vmatprep.subr.mxu0 0.0
        %1842 = vmatpush2.msra.mxu0 0.0
        %1843 = vmatprep.subr.mxu0 0.0
        %1844 = vmatpush2.msra.mxu0 0.0
        %1845 = vmatprep.subr.mxu0 0.0
        %1846 = vmatpush2.msra.mxu0 0.0
        %1847 = vmatprep.subr.mxu0 0.0
        %1848 = vmatpush2.msra.mxu0 0.0
        %1849 = vmatprep.subr.mxu0 0.0
        %1850 = vmatpush2.msra.mxu0 0.0
        %1851 = vmatprep.mubr.f32.mxu0 0.0
        %1852 = vmatmul.mubr.f32.gmra.mxu0 %v1551
        %v1853 = vpop.f32.mrf.mxu0
        %v1854 = vadd.f32 %v1513, %v1853
        %v1855 = vpop.f32.mrf.mxu0
        %v1856 = vadd.f32 %v1517, %v1855
        %1857 = vmatprep.mubr.f32.mxu0 0.0
        %1858 = vmatmul.mubr.f32.gmra.mxu0 %v1554
        %v1859 = vpop.f32.mrf.mxu0
        %v1860 = vadd.f32 %v1513, %v1859
        %v1861 = vpop.f32.mrf.mxu0
        %v1862 = vadd.f32 %v1517, %v1861
        %1863 = vdwg.mxu0
        %1864 = vmatprep.subr.mxu0 0.0
        %1865 = vmatpush1.msra.mxu0 0.0
        %1866 = vmatprep.subr.mxu0 0.0
        %1867 = vmatpush1.msra.mxu0 0.0
        %1868 = vmatprep.subr.mxu0 0.0
        %1869 = vmatpush1.msra.mxu0 0.0
        %1870 = vmatprep.subr.mxu0 0.0
        %1871 = vmatpush1.msra.mxu0 0.0
        %1872 = vmatprep.subr.mxu0 0.0
        %1873 = vmatpush1.msra.mxu0 0.0
        %1874 = vmatprep.subr.mxu0 0.0
        %1875 = vmatpush1.msra.mxu0 0.0
        %1876 = vmatprep.subr.mxu0 0.0
        %1877 = vmatpush1.msra.mxu0 0.0
        %1878 = vmatprep.subr.mxu0 0.0
        %1879 = vmatpush1.msra.mxu0 0.0
        %1880 = vmatprep.subr.mxu0 0.0
        %1881 = vmatpush1.msra.mxu0 0.0
        %1882 = vmatprep.subr.mxu0 0.0
        %1883 = vmatpush1.msra.mxu0 0.0
        %1884 = vmatprep.subr.mxu0 0.0
        %1885 = vmatpush1.msra.mxu0 0.0
        %1886 = vmatprep.subr.mxu0 0.0
        %1887 = vmatpush1.msra.mxu0 0.0
        %1888 = vmatprep.subr.mxu0 %v1463
        %1889 = vmatpush1.msra.mxu0 %v1462
        %1890 = vmatprep.subr.mxu0 %v1447
        %1891 = vmatpush1.msra.mxu0 %v1446
        %1892 = vmatprep.subr.mxu0 %v1431
        %1893 = vmatpush1.msra.mxu0 %v1430
        %1894 = vmatprep.subr.mxu0 %v1415
        %1895 = vmatpush1.msra.mxu0 %v1414
        %1896 = vmatprep.subr.mxu0 0.0
        %1897 = vmatpush2.msra.mxu0 0.0
        %1898 = vmatprep.subr.mxu0 0.0
        %1899 = vmatpush2.msra.mxu0 0.0
        %1900 = vmatprep.subr.mxu0 0.0
        %1901 = vmatpush2.msra.mxu0 0.0
        %1902 = vmatprep.subr.mxu0 0.0
        %1903 = vmatpush2.msra.mxu0 0.0
        %1904 = vmatprep.subr.mxu0 0.0
        %1905 = vmatpush2.msra.mxu0 0.0
        %1906 = vmatprep.subr.mxu0 0.0
        %1907 = vmatpush2.msra.mxu0 0.0
        %1908 = vmatprep.subr.mxu0 0.0
        %1909 = vmatpush2.msra.mxu0 0.0
        %1910 = vmatprep.subr.mxu0 0.0
        %1911 = vmatpush2.msra.mxu0 0.0
        %1912 = vmatprep.subr.mxu0 0.0
        %1913 = vmatpush2.msra.mxu0 0.0
        %1914 = vmatprep.subr.mxu0 0.0
        %1915 = vmatpush2.msra.mxu0 0.0
        %1916 = vmatprep.subr.mxu0 0.0
        %1917 = vmatpush2.msra.mxu0 0.0
        %1918 = vmatprep.subr.mxu0 0.0
        %1919 = vmatpush2.msra.mxu0 0.0
        %1920 = vmatprep.subr.mxu0 0.0
        %1921 = vmatpush2.msra.mxu0 0.0
        %1922 = vmatprep.subr.mxu0 0.0
        %1923 = vmatpush2.msra.mxu0 0.0
        %1924 = vmatprep.subr.mxu0 0.0
        %1925 = vmatpush2.msra.mxu0 0.0
        %1926 = vmatprep.subr.mxu0 0.0
        %1927 = vmatpush2.msra.mxu0 0.0
        %1928 = vmatprep.mubr.f32.mxu0 0.0
        %1929 = vmatmul.mubr.f32.gmra.mxu0 %v1551
        %v1930 = vpop.f32.mrf.mxu0
        %v1931 = vadd.f32 %v1521, %v1930
        %v1932 = vpop.f32.mrf.mxu0
        %v1933 = vadd.f32 %v1525, %v1932
        %1934 = vmatprep.mubr.f32.mxu0 0.0
        %1935 = vmatmul.mubr.f32.gmra.mxu0 %v1554
        %v1936 = vpop.f32.mrf.mxu0
        %v1937 = vadd.f32 %v1521, %v1936
        %v1938 = vpop.f32.mrf.mxu0
        %v1939 = vadd.f32 %v1525, %v1938
        %1940 = vdwg.mxu0
        %1941 = vmatprep.subr.mxu0 0.0
        %1942 = vmatpush1.msra.mxu0 0.0
        %1943 = vmatprep.subr.mxu0 0.0
        %1944 = vmatpush1.msra.mxu0 0.0
        %1945 = vmatprep.subr.mxu0 0.0
        %1946 = vmatpush1.msra.mxu0 0.0
        %1947 = vmatprep.subr.mxu0 0.0
        %1948 = vmatpush1.msra.mxu0 0.0
        %1949 = vmatprep.subr.mxu0 0.0
        %1950 = vmatpush1.msra.mxu0 0.0
        %1951 = vmatprep.subr.mxu0 0.0
        %1952 = vmatpush1.msra.mxu0 0.0
        %1953 = vmatprep.subr.mxu0 0.0
        %1954 = vmatpush1.msra.mxu0 0.0
        %1955 = vmatprep.subr.mxu0 0.0
        %1956 = vmatpush1.msra.mxu0 0.0
        %1957 = vmatprep.subr.mxu0 0.0
        %1958 = vmatpush1.msra.mxu0 0.0
        %1959 = vmatprep.subr.mxu0 0.0
        %1960 = vmatpush1.msra.mxu0 0.0
        %1961 = vmatprep.subr.mxu0 0.0
        %1962 = vmatpush1.msra.mxu0 0.0
        %1963 = vmatprep.subr.mxu0 0.0
        %1964 = vmatpush1.msra.mxu0 0.0
        %1965 = vmatprep.subr.mxu0 %v1465
        %1966 = vmatpush1.msra.mxu0 %v1464
        %1967 = vmatprep.subr.mxu0 %v1449
        %1968 = vmatpush1.msra.mxu0 %v1448
        %1969 = vmatprep.subr.mxu0 %v1433
        %1970 = vmatpush1.msra.mxu0 %v1432
        %1971 = vmatprep.subr.mxu0 %v1417
        %1972 = vmatpush1.msra.mxu0 %v1416
        %1973 = vmatprep.subr.mxu0 0.0
        %1974 = vmatpush2.msra.mxu0 0.0
        %1975 = vmatprep.subr.mxu0 0.0
        %1976 = vmatpush2.msra.mxu0 0.0
        %1977 = vmatprep.subr.mxu0 0.0
        %1978 = vmatpush2.msra.mxu0 0.0
        %1979 = vmatprep.subr.mxu0 0.0
        %1980 = vmatpush2.msra.mxu0 0.0
        %1981 = vmatprep.subr.mxu0 0.0
        %1982 = vmatpush2.msra.mxu0 0.0
        %1983 = vmatprep.subr.mxu0 0.0
        %1984 = vmatpush2.msra.mxu0 0.0
        %1985 = vmatprep.subr.mxu0 0.0
        %1986 = vmatpush2.msra.mxu0 0.0
        %1987 = vmatprep.subr.mxu0 0.0
        %1988 = vmatpush2.msra.mxu0 0.0
        %1989 = vmatprep.subr.mxu0 0.0
        %1990 = vmatpush2.msra.mxu0 0.0
        %1991 = vmatprep.subr.mxu0 0.0
        %1992 = vmatpush2.msra.mxu0 0.0
        %1993 = vmatprep.subr.mxu0 0.0
        %1994 = vmatpush2.msra.mxu0 0.0
        %1995 = vmatprep.subr.mxu0 0.0
        %1996 = vmatpush2.msra.mxu0 0.0
        %1997 = vmatprep.subr.mxu0 0.0
        %1998 = vmatpush2.msra.mxu0 0.0
        %1999 = vmatprep.subr.mxu0 0.0
        %2000 = vmatpush2.msra.mxu0 0.0
        %2001 = vmatprep.subr.mxu0 0.0
        %2002 = vmatpush2.msra.mxu0 0.0
        %2003 = vmatprep.subr.mxu0 0.0
        %2004 = vmatpush2.msra.mxu0 0.0
        %2005 = vmatprep.mubr.f32.mxu0 0.0
        %2006 = vmatmul.mubr.f32.gmra.mxu0 %v1551
        %v2007 = vpop.f32.mrf.mxu0
        %v2008 = vadd.f32 %v1529, %v2007
        %v2009 = vpop.f32.mrf.mxu0
        %v2010 = vadd.f32 %v1533, %v2009
        %2011 = vmatprep.mubr.f32.mxu0 0.0
        %2012 = vmatmul.mubr.f32.gmra.mxu0 %v1554
        %v2013 = vpop.f32.mrf.mxu0
        %v2014 = vadd.f32 %v1529, %v2013
        %v2015 = vpop.f32.mrf.mxu0
        %v2016 = vadd.f32 %v1533, %v2015
        %2017 = vdwg.mxu0
        %2018 = vmatprep.subr.mxu0 0.0
        %2019 = vmatpush1.msra.mxu0 0.0
        %2020 = vmatprep.subr.mxu0 0.0
        %2021 = vmatpush1.msra.mxu0 0.0
        %2022 = vmatprep.subr.mxu0 0.0
        %2023 = vmatpush1.msra.mxu0 0.0
        %2024 = vmatprep.subr.mxu0 0.0
        %2025 = vmatpush1.msra.mxu0 0.0
        %2026 = vmatprep.subr.mxu0 0.0
        %2027 = vmatpush1.msra.mxu0 0.0
        %2028 = vmatprep.subr.mxu0 0.0
        %2029 = vmatpush1.msra.mxu0 0.0
        %2030 = vmatprep.subr.mxu0 0.0
        %2031 = vmatpush1.msra.mxu0 0.0
        %2032 = vmatprep.subr.mxu0 0.0
        %2033 = vmatpush1.msra.mxu0 0.0
        %2034 = vmatprep.subr.mxu0 0.0
        %2035 = vmatpush1.msra.mxu0 0.0
        %2036 = vmatprep.subr.mxu0 0.0
        %2037 = vmatpush1.msra.mxu0 0.0
        %2038 = vmatprep.subr.mxu0 0.0
        %2039 = vmatpush1.msra.mxu0 0.0
        %2040 = vmatprep.subr.mxu0 0.0
        %2041 = vmatpush1.msra.mxu0 0.0
        %2042 = vmatprep.subr.mxu0 %v1467
        %2043 = vmatpush1.msra.mxu0 %v1466
        %2044 = vmatprep.subr.mxu0 %v1451
        %2045 = vmatpush1.msra.mxu0 %v1450
        %2046 = vmatprep.subr.mxu0 %v1435
        %2047 = vmatpush1.msra.mxu0 %v1434
        %2048 = vmatprep.subr.mxu0 %v1419
        %2049 = vmatpush1.msra.mxu0 %v1418
        %2050 = vmatprep.subr.mxu0 0.0
        %2051 = vmatpush2.msra.mxu0 0.0
        %2052 = vmatprep.subr.mxu0 0.0
        %2053 = vmatpush2.msra.mxu0 0.0
        %2054 = vmatprep.subr.mxu0 0.0
        %2055 = vmatpush2.msra.mxu0 0.0
        %2056 = vmatprep.subr.mxu0 0.0
        %2057 = vmatpush2.msra.mxu0 0.0
        %2058 = vmatprep.subr.mxu0 0.0
        %2059 = vmatpush2.msra.mxu0 0.0
        %2060 = vmatprep.subr.mxu0 0.0
        %2061 = vmatpush2.msra.mxu0 0.0
        %2062 = vmatprep.subr.mxu0 0.0
        %2063 = vmatpush2.msra.mxu0 0.0
        %2064 = vmatprep.subr.mxu0 0.0
        %2065 = vmatpush2.msra.mxu0 0.0
        %2066 = vmatprep.subr.mxu0 0.0
        %2067 = vmatpush2.msra.mxu0 0.0
        %2068 = vmatprep.subr.mxu0 0.0
        %2069 = vmatpush2.msra.mxu0 0.0
        %2070 = vmatprep.subr.mxu0 0.0
        %2071 = vmatpush2.msra.mxu0 0.0
        %2072 = vmatprep.subr.mxu0 0.0
        %2073 = vmatpush2.msra.mxu0 0.0
        %2074 = vmatprep.subr.mxu0 0.0
        %2075 = vmatpush2.msra.mxu0 0.0
        %2076 = vmatprep.subr.mxu0 0.0
        %2077 = vmatpush2.msra.mxu0 0.0
        %2078 = vmatprep.subr.mxu0 0.0
        %2079 = vmatpush2.msra.mxu0 0.0
        %2080 = vmatprep.subr.mxu0 0.0
        %2081 = vmatpush2.msra.mxu0 0.0
        %2082 = vmatprep.mubr.f32.mxu0 0.0
        %2083 = vmatmul.mubr.f32.gmra.mxu0 %v1551
        %v2084 = vpop.f32.mrf.mxu0
        %v2085 = vadd.f32 %v1537, %v2084
        %v2086 = vpop.f32.mrf.mxu0
        %v2087 = vadd.f32 %v1541, %v2086
        %2088 = vmatprep.mubr.f32.mxu0 0.0
        %2089 = vmatmul.mubr.f32.gmra.mxu0 %v1554
        %v2090 = vpop.f32.mrf.mxu0
        %v2091 = vadd.f32 %v1537, %v2090
        %v2092 = vpop.f32.mrf.mxu0
        %v2093 = vadd.f32 %v1541, %v2092
        %2094 = vdwg.mxu0
        %2095 = vmatprep.subr.mxu0 0.0
        %2096 = vmatpush1.msra.mxu0 0.0
        %2097 = vmatprep.subr.mxu0 0.0
        %2098 = vmatpush1.msra.mxu0 0.0
        %2099 = vmatprep.subr.mxu0 0.0
        %2100 = vmatpush1.msra.mxu0 0.0
        %2101 = vmatprep.subr.mxu0 0.0
        %2102 = vmatpush1.msra.mxu0 0.0
        %2103 = vmatprep.subr.mxu0 0.0
        %2104 = vmatpush1.msra.mxu0 0.0
        %2105 = vmatprep.subr.mxu0 0.0
        %2106 = vmatpush1.msra.mxu0 0.0
        %2107 = vmatprep.subr.mxu0 0.0
        %2108 = vmatpush1.msra.mxu0 0.0
        %2109 = vmatprep.subr.mxu0 0.0
        %2110 = vmatpush1.msra.mxu0 0.0
        %2111 = vmatprep.subr.mxu0 0.0
        %2112 = vmatpush1.msra.mxu0 0.0
        %2113 = vmatprep.subr.mxu0 0.0
        %2114 = vmatpush1.msra.mxu0 0.0
        %2115 = vmatprep.subr.mxu0 0.0
        %2116 = vmatpush1.msra.mxu0 0.0
        %2117 = vmatprep.subr.mxu0 0.0
        %2118 = vmatpush1.msra.mxu0 0.0
        %2119 = vmatprep.subr.mxu0 %v1469
        %2120 = vmatpush1.msra.mxu0 %v1468
        %2121 = vmatprep.subr.mxu0 %v1453
        %2122 = vmatpush1.msra.mxu0 %v1452
        %2123 = vmatprep.subr.mxu0 %v1437
        %2124 = vmatpush1.msra.mxu0 %v1436
        %2125 = vmatprep.subr.mxu0 %v1421
        %2126 = vmatpush1.msra.mxu0 %v1420
        %2127 = vmatprep.subr.mxu0 0.0
        %2128 = vmatpush2.msra.mxu0 0.0
        %2129 = vmatprep.subr.mxu0 0.0
        %2130 = vmatpush2.msra.mxu0 0.0
        %2131 = vmatprep.subr.mxu0 0.0
        %2132 = vmatpush2.msra.mxu0 0.0
        %2133 = vmatprep.subr.mxu0 0.0
        %2134 = vmatpush2.msra.mxu0 0.0
        %2135 = vmatprep.subr.mxu0 0.0
        %2136 = vmatpush2.msra.mxu0 0.0
        %2137 = vmatprep.subr.mxu0 0.0
        %2138 = vmatpush2.msra.mxu0 0.0
        %2139 = vmatprep.subr.mxu0 0.0
        %2140 = vmatpush2.msra.mxu0 0.0
        %2141 = vmatprep.subr.mxu0 0.0
        %2142 = vmatpush2.msra.mxu0 0.0
        %2143 = vmatprep.subr.mxu0 0.0
        %2144 = vmatpush2.msra.mxu0 0.0
        %2145 = vmatprep.subr.mxu0 0.0
        %2146 = vmatpush2.msra.mxu0 0.0
        %2147 = vmatprep.subr.mxu0 0.0
        %2148 = vmatpush2.msra.mxu0 0.0
        %2149 = vmatprep.subr.mxu0 0.0
        %2150 = vmatpush2.msra.mxu0 0.0
        %2151 = vmatprep.subr.mxu0 0.0
        %2152 = vmatpush2.msra.mxu0 0.0
        %2153 = vmatprep.subr.mxu0 0.0
        %2154 = vmatpush2.msra.mxu0 0.0
        %2155 = vmatprep.subr.mxu0 0.0
        %2156 = vmatpush2.msra.mxu0 0.0
        %2157 = vmatprep.subr.mxu0 0.0
        %2158 = vmatpush2.msra.mxu0 0.0
        %2159 = vmatprep.mubr.f32.mxu0 0.0
        %2160 = vmatmul.mubr.f32.gmra.mxu0 %v1551
        %v2161 = vpop.f32.mrf.mxu0
        %v2162 = vadd.f32 %v1545, %v2161
        %v2163 = vpop.f32.mrf.mxu0
        %v2164 = vadd.f32 %v1549, %v2163
        %2165 = vmatprep.mubr.f32.mxu0 0.0
        %2166 = vmatmul.mubr.f32.gmra.mxu0 %v1554
        %v2167 = vpop.f32.mrf.mxu0
        %v2168 = vadd.f32 %v1545, %v2167
        %v2169 = vpop.f32.mrf.mxu0
        %v2170 = vadd.f32 %v1549, %v2169
        %2171 = vdwg.mxu0
        %v2172 = vmul.f32 %v1623, 0.5
        %v2173 = vmul.f32 %v1625, 0.5
        %v2174 = vmul.f32 %v1700, 0.5
        %v2175 = vmul.f32 %v1702, 0.5
        %v2176 = vmul.f32 %v1777, 0.5
        %v2177 = vmul.f32 %v1779, 0.5
        %v2178 = vmul.f32 %v1854, 0.5
        %v2179 = vmul.f32 %v1856, 0.5
        %v2180 = vmul.f32 %v1931, 0.5
        %v2181 = vmul.f32 %v1933, 0.5
        %v2182 = vmul.f32 %v2008, 0.5
        %v2183 = vmul.f32 %v2010, 0.5
        %v2184 = vmul.f32 %v2085, 0.5
        %v2185 = vmul.f32 %v2087, 0.5
        %v2186 = vmul.f32 %v2162, 0.5
        %v2187 = vmul.f32 %v2164, 0.5
        %v2188 = vmul.f32 %v1629, 0.5
        %v2189 = vmul.f32 %v1631, 0.5
        %v2190 = vmul.f32 %v1706, 0.5
        %v2191 = vmul.f32 %v1708, 0.5
        %v2192 = vmul.f32 %v1783, 0.5
        %v2193 = vmul.f32 %v1785, 0.5
        %v2194 = vmul.f32 %v1860, 0.5
        %v2195 = vmul.f32 %v1862, 0.5
        %v2196 = vmul.f32 %v1937, 0.5
        %v2197 = vmul.f32 %v1939, 0.5
        %v2198 = vmul.f32 %v2014, 0.5
        %v2199 = vmul.f32 %v2016, 0.5
        %v2200 = vmul.f32 %v2091, 0.5
        %v2201 = vmul.f32 %v2093, 0.5
        %v2202 = vmul.f32 %v2168, 0.5
        %v2203 = vmul.f32 %v2170, 0.5
        %v2204 = vmul.f32 %v1623, 0.70710677
        %v2205 = vmul.f32 %v1625, 0.70710677
        %v2206 = vmul.f32 %v1700, 0.70710677
        %v2207 = vmul.f32 %v1702, 0.70710677
        %v2208 = vmul.f32 %v1777, 0.70710677
        %v2209 = vmul.f32 %v1779, 0.70710677
        %v2210 = vmul.f32 %v1854, 0.70710677
        %v2211 = vmul.f32 %v1856, 0.70710677
        %v2212 = vmul.f32 %v1931, 0.70710677
        %v2213 = vmul.f32 %v1933, 0.70710677
        %v2214 = vmul.f32 %v2008, 0.70710677
        %v2215 = vmul.f32 %v2010, 0.70710677
        %v2216 = vmul.f32 %v2085, 0.70710677
        %v2217 = vmul.f32 %v2087, 0.70710677
        %v2218 = vmul.f32 %v2162, 0.70710677
        %v2219 = vmul.f32 %v2164, 0.70710677
        %v2220 = vmul.f32 %v1629, 0.70710677
        %v2221 = vmul.f32 %v1631, 0.70710677
        %v2222 = vmul.f32 %v1706, 0.70710677
        %v2223 = vmul.f32 %v1708, 0.70710677
        %v2224 = vmul.f32 %v1783, 0.70710677
        %v2225 = vmul.f32 %v1785, 0.70710677
        %v2226 = vmul.f32 %v1860, 0.70710677
        %v2227 = vmul.f32 %v1862, 0.70710677
        %v2228 = vmul.f32 %v1937, 0.70710677
        %v2229 = vmul.f32 %v1939, 0.70710677
        %v2230 = vmul.f32 %v2014, 0.70710677
        %v2231 = vmul.f32 %v2016, 0.70710677
        %v2232 = vmul.f32 %v2091, 0.70710677
        %v2233 = vmul.f32 %v2093, 0.70710677
        %v2234 = vmul.f32 %v2168, 0.70710677
        %v2235 = vmul.f32 %v2170, 0.70710677
        %vm2236 = vcmp.ge.f32.partialorder %v2204, 0.0
        %vm2237 = vcmp.ge.f32.partialorder %v2205, 0.0
        %vm2238 = vcmp.ge.f32.partialorder %v2206, 0.0
        %vm2239 = vcmp.ge.f32.partialorder %v2207, 0.0
        %vm2240 = vcmp.ge.f32.partialorder %v2208, 0.0
        %vm2241 = vcmp.ge.f32.partialorder %v2209, 0.0
        %vm2242 = vcmp.ge.f32.partialorder %v2210, 0.0
        %vm2243 = vcmp.ge.f32.partialorder %v2211, 0.0
        %vm2244 = vcmp.ge.f32.partialorder %v2212, 0.0
        %vm2245 = vcmp.ge.f32.partialorder %v2213, 0.0
        %vm2246 = vcmp.ge.f32.partialorder %v2214, 0.0
        %vm2247 = vcmp.ge.f32.partialorder %v2215, 0.0
        %vm2248 = vcmp.ge.f32.partialorder %v2216, 0.0
        %vm2249 = vcmp.ge.f32.partialorder %v2217, 0.0
        %vm2250 = vcmp.ge.f32.partialorder %v2218, 0.0
        %vm2251 = vcmp.ge.f32.partialorder %v2219, 0.0
        %vm2252 = vcmp.ge.f32.partialorder %v2220, 0.0
        %vm2253 = vcmp.ge.f32.partialorder %v2221, 0.0
        %vm2254 = vcmp.ge.f32.partialorder %v2222, 0.0
        %vm2255 = vcmp.ge.f32.partialorder %v2223, 0.0
        %vm2256 = vcmp.ge.f32.partialorder %v2224, 0.0
        %vm2257 = vcmp.ge.f32.partialorder %v2225, 0.0
        %vm2258 = vcmp.ge.f32.partialorder %v2226, 0.0
        %vm2259 = vcmp.ge.f32.partialorder %v2227, 0.0
        %vm2260 = vcmp.ge.f32.partialorder %v2228, 0.0
        %vm2261 = vcmp.ge.f32.partialorder %v2229, 0.0
        %vm2262 = vcmp.ge.f32.partialorder %v2230, 0.0
        %vm2263 = vcmp.ge.f32.partialorder %v2231, 0.0
        %vm2264 = vcmp.ge.f32.partialorder %v2232, 0.0
        %vm2265 = vcmp.ge.f32.partialorder %v2233, 0.0
        %vm2266 = vcmp.ge.f32.partialorder %v2234, 0.0
        %vm2267 = vcmp.ge.f32.partialorder %v2235, 0.0
        %v2268 = vsel %vm2236, 1.0, -1.0
        %v2269 = vsel %vm2237, 1.0, -1.0
        %v2270 = vsel %vm2238, 1.0, -1.0
        %v2271 = vsel %vm2239, 1.0, -1.0
        %v2272 = vsel %vm2240, 1.0, -1.0
        %v2273 = vsel %vm2241, 1.0, -1.0
        %v2274 = vsel %vm2242, 1.0, -1.0
        %v2275 = vsel %vm2243, 1.0, -1.0
        %v2276 = vsel %vm2244, 1.0, -1.0
        %v2277 = vsel %vm2245, 1.0, -1.0
        %v2278 = vsel %vm2246, 1.0, -1.0
        %v2279 = vsel %vm2247, 1.0, -1.0
        %v2280 = vsel %vm2248, 1.0, -1.0
        %v2281 = vsel %vm2249, 1.0, -1.0
        %v2282 = vsel %vm2250, 1.0, -1.0
        %v2283 = vsel %vm2251, 1.0, -1.0
        %v2284 = vsel %vm2252, 1.0, -1.0
        %v2285 = vsel %vm2253, 1.0, -1.0
        %v2286 = vsel %vm2254, 1.0, -1.0
        %v2287 = vsel %vm2255, 1.0, -1.0
        %v2288 = vsel %vm2256, 1.0, -1.0
        %v2289 = vsel %vm2257, 1.0, -1.0
        %v2290 = vsel %vm2258, 1.0, -1.0
        %v2291 = vsel %vm2259, 1.0, -1.0
        %v2292 = vsel %vm2260, 1.0, -1.0
        %v2293 = vsel %vm2261, 1.0, -1.0
        %v2294 = vsel %vm2262, 1.0, -1.0
        %v2295 = vsel %vm2263, 1.0, -1.0
        %v2296 = vsel %vm2264, 1.0, -1.0
        %v2297 = vsel %vm2265, 1.0, -1.0
        %v2298 = vsel %vm2266, 1.0, -1.0
        %v2299 = vsel %vm2267, 1.0, -1.0
        %v2300 = vand.u32 2147483647, %v2204
        %v2301 = vand.u32 2147483647, %v2205
        %v2302 = vand.u32 2147483647, %v2206
        %v2303 = vand.u32 2147483647, %v2207
        %v2304 = vand.u32 2147483647, %v2208
        %v2305 = vand.u32 2147483647, %v2209
        %v2306 = vand.u32 2147483647, %v2210
        %v2307 = vand.u32 2147483647, %v2211
        %v2308 = vand.u32 2147483647, %v2212
        %v2309 = vand.u32 2147483647, %v2213
        %v2310 = vand.u32 2147483647, %v2214
        %v2311 = vand.u32 2147483647, %v2215
        %v2312 = vand.u32 2147483647, %v2216
        %v2313 = vand.u32 2147483647, %v2217
        %v2314 = vand.u32 2147483647, %v2218
        %v2315 = vand.u32 2147483647, %v2219
        %v2316 = vand.u32 2147483647, %v2220
        %v2317 = vand.u32 2147483647, %v2221
        %v2318 = vand.u32 2147483647, %v2222
        %v2319 = vand.u32 2147483647, %v2223
        %v2320 = vand.u32 2147483647, %v2224
        %v2321 = vand.u32 2147483647, %v2225
        %v2322 = vand.u32 2147483647, %v2226
        %v2323 = vand.u32 2147483647, %v2227
        %v2324 = vand.u32 2147483647, %v2228
        %v2325 = vand.u32 2147483647, %v2229
        %v2326 = vand.u32 2147483647, %v2230
        %v2327 = vand.u32 2147483647, %v2231
        %v2328 = vand.u32 2147483647, %v2232
        %v2329 = vand.u32 2147483647, %v2233
        %v2330 = vand.u32 2147483647, %v2234
        %v2331 = vand.u32 2147483647, %v2235
        %v2332 = vmul.f32 %v2300, 0.3275911
        %v2333 = vmul.f32 %v2301, 0.3275911
        %v2334 = vmul.f32 %v2302, 0.3275911
        %v2335 = vmul.f32 %v2303, 0.3275911
        %v2336 = vmul.f32 %v2304, 0.3275911
        %v2337 = vmul.f32 %v2305, 0.3275911
        %v2338 = vmul.f32 %v2306, 0.3275911
        %v2339 = vmul.f32 %v2307, 0.3275911
        %v2340 = vmul.f32 %v2308, 0.3275911
        %v2341 = vmul.f32 %v2309, 0.3275911
        %v2342 = vmul.f32 %v2310, 0.3275911
        %v2343 = vmul.f32 %v2311, 0.3275911
        %v2344 = vmul.f32 %v2312, 0.3275911
        %v2345 = vmul.f32 %v2313, 0.3275911
        %v2346 = vmul.f32 %v2314, 0.3275911
        %v2347 = vmul.f32 %v2315, 0.3275911
        %v2348 = vmul.f32 %v2316, 0.3275911
        %v2349 = vmul.f32 %v2317, 0.3275911
        %v2350 = vmul.f32 %v2318, 0.3275911
        %v2351 = vmul.f32 %v2319, 0.3275911
        %v2352 = vmul.f32 %v2320, 0.3275911
        %v2353 = vmul.f32 %v2321, 0.3275911
        %v2354 = vmul.f32 %v2322, 0.3275911
        %v2355 = vmul.f32 %v2323, 0.3275911
        %v2356 = vmul.f32 %v2324, 0.3275911
        %v2357 = vmul.f32 %v2325, 0.3275911
        %v2358 = vmul.f32 %v2326, 0.3275911
        %v2359 = vmul.f32 %v2327, 0.3275911
        %v2360 = vmul.f32 %v2328, 0.3275911
        %v2361 = vmul.f32 %v2329, 0.3275911
        %v2362 = vmul.f32 %v2330, 0.3275911
        %v2363 = vmul.f32 %v2331, 0.3275911
        %v2364 = vadd.f32 %v2332, 1.0
        %v2365 = vadd.f32 %v2333, 1.0
        %v2366 = vadd.f32 %v2334, 1.0
        %v2367 = vadd.f32 %v2335, 1.0
        %v2368 = vadd.f32 %v2336, 1.0
        %v2369 = vadd.f32 %v2337, 1.0
        %v2370 = vadd.f32 %v2338, 1.0
        %v2371 = vadd.f32 %v2339, 1.0
        %v2372 = vadd.f32 %v2340, 1.0
        %v2373 = vadd.f32 %v2341, 1.0
        %v2374 = vadd.f32 %v2342, 1.0
        %v2375 = vadd.f32 %v2343, 1.0
        %v2376 = vadd.f32 %v2344, 1.0
        %v2377 = vadd.f32 %v2345, 1.0
        %v2378 = vadd.f32 %v2346, 1.0
        %v2379 = vadd.f32 %v2347, 1.0
        %v2380 = vadd.f32 %v2348, 1.0
        %v2381 = vadd.f32 %v2349, 1.0
        %v2382 = vadd.f32 %v2350, 1.0
        %v2383 = vadd.f32 %v2351, 1.0
        %v2384 = vadd.f32 %v2352, 1.0
        %v2385 = vadd.f32 %v2353, 1.0
        %v2386 = vadd.f32 %v2354, 1.0
        %v2387 = vadd.f32 %v2355, 1.0
        %v2388 = vadd.f32 %v2356, 1.0
        %v2389 = vadd.f32 %v2357, 1.0
        %v2390 = vadd.f32 %v2358, 1.0
        %v2391 = vadd.f32 %v2359, 1.0
        %v2392 = vadd.f32 %v2360, 1.0
        %v2393 = vadd.f32 %v2361, 1.0
        %v2394 = vadd.f32 %v2362, 1.0
        %v2395 = vadd.f32 %v2363, 1.0
        %v2396 = vrcp.pop %v2364
        %v2397 = vmul.f32 1.0, %v2396
        %v2398 = vrcp.pop %v2365
        %v2399 = vmul.f32 1.0, %v2398
        %v2400 = vrcp.pop %v2366
        %v2401 = vmul.f32 1.0, %v2400
        %v2402 = vrcp.pop %v2367
        %v2403 = vmul.f32 1.0, %v2402
        %v2404 = vrcp.pop %v2368
        %v2405 = vmul.f32 1.0, %v2404
        %v2406 = vrcp.pop %v2369
        %v2407 = vmul.f32 1.0, %v2406
        %v2408 = vrcp.pop %v2370
        %v2409 = vmul.f32 1.0, %v2408
        %v2410 = vrcp.pop %v2371
        %v2411 = vmul.f32 1.0, %v2410
        %v2412 = vrcp.pop %v2372
        %v2413 = vmul.f32 1.0, %v2412
        %v2414 = vrcp.pop %v2373
        %v2415 = vmul.f32 1.0, %v2414
        %v2416 = vrcp.pop %v2374
        %v2417 = vmul.f32 1.0, %v2416
        %v2418 = vrcp.pop %v2375
        %v2419 = vmul.f32 1.0, %v2418
        %v2420 = vrcp.pop %v2376
        %v2421 = vmul.f32 1.0, %v2420
        %v2422 = vrcp.pop %v2377
        %v2423 = vmul.f32 1.0, %v2422
        %v2424 = vrcp.pop %v2378
        %v2425 = vmul.f32 1.0, %v2424
        %v2426 = vrcp.pop %v2379
        %v2427 = vmul.f32 1.0, %v2426
        %v2428 = vrcp.pop %v2380
        %v2429 = vmul.f32 1.0, %v2428
        %v2430 = vrcp.pop %v2381
        %v2431 = vmul.f32 1.0, %v2430
        %v2432 = vrcp.pop %v2382
        %v2433 = vmul.f32 1.0, %v2432
        %v2434 = vrcp.pop %v2383
        %v2435 = vmul.f32 1.0, %v2434
        %v2436 = vrcp.pop %v2384
        %v2437 = vmul.f32 1.0, %v2436
        %v2438 = vrcp.pop %v2385
        %v2439 = vmul.f32 1.0, %v2438
        %v2440 = vrcp.pop %v2386
        %v2441 = vmul.f32 1.0, %v2440
        %v2442 = vrcp.pop %v2387
        %v2443 = vmul.f32 1.0, %v2442
        %v2444 = vrcp.pop %v2388
        %v2445 = vmul.f32 1.0, %v2444
        %v2446 = vrcp.pop %v2389
        %v2447 = vmul.f32 1.0, %v2446
        %v2448 = vrcp.pop %v2390
        %v2449 = vmul.f32 1.0, %v2448
        %v2450 = vrcp.pop %v2391
        %v2451 = vmul.f32 1.0, %v2450
        %v2452 = vrcp.pop %v2392
        %v2453 = vmul.f32 1.0, %v2452
        %v2454 = vrcp.pop %v2393
        %v2455 = vmul.f32 1.0, %v2454
        %v2456 = vrcp.pop %v2394
        %v2457 = vmul.f32 1.0, %v2456
        %v2458 = vrcp.pop %v2395
        %v2459 = vmul.f32 1.0, %v2458
        %v2460 = vmul.f32 %v2397, 1.0614054
        %v2461 = vmul.f32 %v2399, 1.0614054
        %v2462 = vmul.f32 %v2401, 1.0614054
        %v2463 = vmul.f32 %v2403, 1.0614054
        %v2464 = vmul.f32 %v2405, 1.0614054
        %v2465 = vmul.f32 %v2407, 1.0614054
        %v2466 = vmul.f32 %v2409, 1.0614054
        %v2467 = vmul.f32 %v2411, 1.0614054
        %v2468 = vmul.f32 %v2413, 1.0614054
        %v2469 = vmul.f32 %v2415, 1.0614054
        %v2470 = vmul.f32 %v2417, 1.0614054
        %v2471 = vmul.f32 %v2419, 1.0614054
        %v2472 = vmul.f32 %v2421, 1.0614054
        %v2473 = vmul.f32 %v2423, 1.0614054
        %v2474 = vmul.f32 %v2425, 1.0614054
        %v2475 = vmul.f32 %v2427, 1.0614054
        %v2476 = vmul.f32 %v2429, 1.0614054
        %v2477 = vmul.f32 %v2431, 1.0614054
        %v2478 = vmul.f32 %v2433, 1.0614054
        %v2479 = vmul.f32 %v2435, 1.0614054
        %v2480 = vmul.f32 %v2437, 1.0614054
        %v2481 = vmul.f32 %v2439, 1.0614054
        %v2482 = vmul.f32 %v2441, 1.0614054
        %v2483 = vmul.f32 %v2443, 1.0614054
        %v2484 = vmul.f32 %v2445, 1.0614054
        %v2485 = vmul.f32 %v2447, 1.0614054
        %v2486 = vmul.f32 %v2449, 1.0614054
        %v2487 = vmul.f32 %v2451, 1.0614054
        %v2488 = vmul.f32 %v2453, 1.0614054
        %v2489 = vmul.f32 %v2455, 1.0614054
        %v2490 = vmul.f32 %v2457, 1.0614054
        %v2491 = vmul.f32 %v2459, 1.0614054
        %v2492 = vadd.f32 %v2460, -1.4531521
        %v2493 = vadd.f32 %v2461, -1.4531521
        %v2494 = vadd.f32 %v2462, -1.4531521
        %v2495 = vadd.f32 %v2463, -1.4531521
        %v2496 = vadd.f32 %v2464, -1.4531521
        %v2497 = vadd.f32 %v2465, -1.4531521
        %v2498 = vadd.f32 %v2466, -1.4531521
        %v2499 = vadd.f32 %v2467, -1.4531521
        %v2500 = vadd.f32 %v2468, -1.4531521
        %v2501 = vadd.f32 %v2469, -1.4531521
        %v2502 = vadd.f32 %v2470, -1.4531521
        %v2503 = vadd.f32 %v2471, -1.4531521
        %v2504 = vadd.f32 %v2472, -1.4531521
        %v2505 = vadd.f32 %v2473, -1.4531521
        %v2506 = vadd.f32 %v2474, -1.4531521
        %v2507 = vadd.f32 %v2475, -1.4531521
        %v2508 = vadd.f32 %v2476, -1.4531521
        %v2509 = vadd.f32 %v2477, -1.4531521
        %v2510 = vadd.f32 %v2478, -1.4531521
        %v2511 = vadd.f32 %v2479, -1.4531521
        %v2512 = vadd.f32 %v2480, -1.4531521
        %v2513 = vadd.f32 %v2481, -1.4531521
        %v2514 = vadd.f32 %v2482, -1.4531521
        %v2515 = vadd.f32 %v2483, -1.4531521
        %v2516 = vadd.f32 %v2484, -1.4531521
        %v2517 = vadd.f32 %v2485, -1.4531521
        %v2518 = vadd.f32 %v2486, -1.4531521
        %v2519 = vadd.f32 %v2487, -1.4531521
        %v2520 = vadd.f32 %v2488, -1.4531521
        %v2521 = vadd.f32 %v2489, -1.4531521
        %v2522 = vadd.f32 %v2490, -1.4531521
        %v2523 = vadd.f32 %v2491, -1.4531521
        %v2524 = vmul.f32 %v2492, %v2397
        %v2525 = vmul.f32 %v2493, %v2399
        %v2526 = vmul.f32 %v2494, %v2401
        %v2527 = vmul.f32 %v2495, %v2403
        %v2528 = vmul.f32 %v2496, %v2405
        %v2529 = vmul.f32 %v2497, %v2407
        %v2530 = vmul.f32 %v2498, %v2409
        %v2531 = vmul.f32 %v2499, %v2411
        %v2532 = vmul.f32 %v2500, %v2413
        %v2533 = vmul.f32 %v2501, %v2415
        %v2534 = vmul.f32 %v2502, %v2417
        %v2535 = vmul.f32 %v2503, %v2419
        %v2536 = vmul.f32 %v2504, %v2421
        %v2537 = vmul.f32 %v2505, %v2423
        %v2538 = vmul.f32 %v2506, %v2425
        %v2539 = vmul.f32 %v2507, %v2427
        %v2540 = vmul.f32 %v2508, %v2429
        %v2541 = vmul.f32 %v2509, %v2431
        %v2542 = vmul.f32 %v2510, %v2433
        %v2543 = vmul.f32 %v2511, %v2435
        %v2544 = vmul.f32 %v2512, %v2437
        %v2545 = vmul.f32 %v2513, %v2439
        %v2546 = vmul.f32 %v2514, %v2441
        %v2547 = vmul.f32 %v2515, %v2443
        %v2548 = vmul.f32 %v2516, %v2445
        %v2549 = vmul.f32 %v2517, %v2447
        %v2550 = vmul.f32 %v2518, %v2449
        %v2551 = vmul.f32 %v2519, %v2451
        %v2552 = vmul.f32 %v2520, %v2453
        %v2553 = vmul.f32 %v2521, %v2455
        %v2554 = vmul.f32 %v2522, %v2457
        %v2555 = vmul.f32 %v2523, %v2459
        %v2556 = vadd.f32 %v2524, 1.4214138
        %v2557 = vadd.f32 %v2525, 1.4214138
        %v2558 = vadd.f32 %v2526, 1.4214138
        %v2559 = vadd.f32 %v2527, 1.4214138
        %v2560 = vadd.f32 %v2528, 1.4214138
        %v2561 = vadd.f32 %v2529, 1.4214138
        %v2562 = vadd.f32 %v2530, 1.4214138
        %v2563 = vadd.f32 %v2531, 1.4214138
        %v2564 = vadd.f32 %v2532, 1.4214138
        %v2565 = vadd.f32 %v2533, 1.4214138
        %v2566 = vadd.f32 %v2534, 1.4214138
        %v2567 = vadd.f32 %v2535, 1.4214138
        %v2568 = vadd.f32 %v2536, 1.4214138
        %v2569 = vadd.f32 %v2537, 1.4214138
        %v2570 = vadd.f32 %v2538, 1.4214138
        %v2571 = vadd.f32 %v2539, 1.4214138
        %v2572 = vadd.f32 %v2540, 1.4214138
        %v2573 = vadd.f32 %v2541, 1.4214138
        %v2574 = vadd.f32 %v2542, 1.4214138
        %v2575 = vadd.f32 %v2543, 1.4214138
        %v2576 = vadd.f32 %v2544, 1.4214138
        %v2577 = vadd.f32 %v2545, 1.4214138
        %v2578 = vadd.f32 %v2546, 1.4214138
        %v2579 = vadd.f32 %v2547, 1.4214138
        %v2580 = vadd.f32 %v2548, 1.4214138
        %v2581 = vadd.f32 %v2549, 1.4214138
        %v2582 = vadd.f32 %v2550, 1.4214138
        %v2583 = vadd.f32 %v2551, 1.4214138
        %v2584 = vadd.f32 %v2552, 1.4214138
        %v2585 = vadd.f32 %v2553, 1.4214138
        %v2586 = vadd.f32 %v2554, 1.4214138
        %v2587 = vadd.f32 %v2555, 1.4214138
        %v2588 = vmul.f32 %v2556, %v2397
        %v2589 = vmul.f32 %v2557, %v2399
        %v2590 = vmul.f32 %v2558, %v2401
        %v2591 = vmul.f32 %v2559, %v2403
        %v2592 = vmul.f32 %v2560, %v2405
        %v2593 = vmul.f32 %v2561, %v2407
        %v2594 = vmul.f32 %v2562, %v2409
        %v2595 = vmul.f32 %v2563, %v2411
        %v2596 = vmul.f32 %v2564, %v2413
        %v2597 = vmul.f32 %v2565, %v2415
        %v2598 = vmul.f32 %v2566, %v2417
        %v2599 = vmul.f32 %v2567, %v2419
        %v2600 = vmul.f32 %v2568, %v2421
        %v2601 = vmul.f32 %v2569, %v2423
        %v2602 = vmul.f32 %v2570, %v2425
        %v2603 = vmul.f32 %v2571, %v2427
        %v2604 = vmul.f32 %v2572, %v2429
        %v2605 = vmul.f32 %v2573, %v2431
        %v2606 = vmul.f32 %v2574, %v2433
        %v2607 = vmul.f32 %v2575, %v2435
        %v2608 = vmul.f32 %v2576, %v2437
        %v2609 = vmul.f32 %v2577, %v2439
        %v2610 = vmul.f32 %v2578, %v2441
        %v2611 = vmul.f32 %v2579, %v2443
        %v2612 = vmul.f32 %v2580, %v2445
        %v2613 = vmul.f32 %v2581, %v2447
        %v2614 = vmul.f32 %v2582, %v2449
        %v2615 = vmul.f32 %v2583, %v2451
        %v2616 = vmul.f32 %v2584, %v2453
        %v2617 = vmul.f32 %v2585, %v2455
        %v2618 = vmul.f32 %v2586, %v2457
        %v2619 = vmul.f32 %v2587, %v2459
        %v2620 = vadd.f32 %v2588, -0.28449672
        %v2621 = vadd.f32 %v2589, -0.28449672
        %v2622 = vadd.f32 %v2590, -0.28449672
        %v2623 = vadd.f32 %v2591, -0.28449672
        %v2624 = vadd.f32 %v2592, -0.28449672
        %v2625 = vadd.f32 %v2593, -0.28449672
        %v2626 = vadd.f32 %v2594, -0.28449672
        %v2627 = vadd.f32 %v2595, -0.28449672
        %v2628 = vadd.f32 %v2596, -0.28449672
        %v2629 = vadd.f32 %v2597, -0.28449672
        %v2630 = vadd.f32 %v2598, -0.28449672
        %v2631 = vadd.f32 %v2599, -0.28449672
        %v2632 = vadd.f32 %v2600, -0.28449672
        %v2633 = vadd.f32 %v2601, -0.28449672
        %v2634 = vadd.f32 %v2602, -0.28449672
        %v2635 = vadd.f32 %v2603, -0.28449672
        %v2636 = vadd.f32 %v2604, -0.28449672
        %v2637 = vadd.f32 %v2605, -0.28449672
        %v2638 = vadd.f32 %v2606, -0.28449672
        %v2639 = vadd.f32 %v2607, -0.28449672
        %v2640 = vadd.f32 %v2608, -0.28449672
        %v2641 = vadd.f32 %v2609, -0.28449672
        %v2642 = vadd.f32 %v2610, -0.28449672
        %v2643 = vadd.f32 %v2611, -0.28449672
        %v2644 = vadd.f32 %v2612, -0.28449672
        %v2645 = vadd.f32 %v2613, -0.28449672
        %v2646 = vadd.f32 %v2614, -0.28449672
        %v2647 = vadd.f32 %v2615, -0.28449672
        %v2648 = vadd.f32 %v2616, -0.28449672
        %v2649 = vadd.f32 %v2617, -0.28449672
        %v2650 = vadd.f32 %v2618, -0.28449672
        %v2651 = vadd.f32 %v2619, -0.28449672
        %v2652 = vmul.f32 %v2620, %v2397
        %v2653 = vmul.f32 %v2621, %v2399
        %v2654 = vmul.f32 %v2622, %v2401
        %v2655 = vmul.f32 %v2623, %v2403
        %v2656 = vmul.f32 %v2624, %v2405
        %v2657 = vmul.f32 %v2625, %v2407
        %v2658 = vmul.f32 %v2626, %v2409
        %v2659 = vmul.f32 %v2627, %v2411
        %v2660 = vmul.f32 %v2628, %v2413
        %v2661 = vmul.f32 %v2629, %v2415
        %v2662 = vmul.f32 %v2630, %v2417
        %v2663 = vmul.f32 %v2631, %v2419
        %v2664 = vmul.f32 %v2632, %v2421
        %v2665 = vmul.f32 %v2633, %v2423
        %v2666 = vmul.f32 %v2634, %v2425
        %v2667 = vmul.f32 %v2635, %v2427
        %v2668 = vmul.f32 %v2636, %v2429
        %v2669 = vmul.f32 %v2637, %v2431
        %v2670 = vmul.f32 %v2638, %v2433
        %v2671 = vmul.f32 %v2639, %v2435
        %v2672 = vmul.f32 %v2640, %v2437
        %v2673 = vmul.f32 %v2641, %v2439
        %v2674 = vmul.f32 %v2642, %v2441
        %v2675 = vmul.f32 %v2643, %v2443
        %v2676 = vmul.f32 %v2644, %v2445
        %v2677 = vmul.f32 %v2645, %v2447
        %v2678 = vmul.f32 %v2646, %v2449
        %v2679 = vmul.f32 %v2647, %v2451
        %v2680 = vmul.f32 %v2648, %v2453
        %v2681 = vmul.f32 %v2649, %v2455
        %v2682 = vmul.f32 %v2650, %v2457
        %v2683 = vmul.f32 %v2651, %v2459
        %v2684 = vadd.f32 %v2652, 0.2548296
        %v2685 = vadd.f32 %v2653, 0.2548296
        %v2686 = vadd.f32 %v2654, 0.2548296
        %v2687 = vadd.f32 %v2655, 0.2548296
        %v2688 = vadd.f32 %v2656, 0.2548296
        %v2689 = vadd.f32 %v2657, 0.2548296
        %v2690 = vadd.f32 %v2658, 0.2548296
        %v2691 = vadd.f32 %v2659, 0.2548296
        %v2692 = vadd.f32 %v2660, 0.2548296
        %v2693 = vadd.f32 %v2661, 0.2548296
        %v2694 = vadd.f32 %v2662, 0.2548296
        %v2695 = vadd.f32 %v2663, 0.2548296
        %v2696 = vadd.f32 %v2664, 0.2548296
        %v2697 = vadd.f32 %v2665, 0.2548296
        %v2698 = vadd.f32 %v2666, 0.2548296
        %v2699 = vadd.f32 %v2667, 0.2548296
        %v2700 = vadd.f32 %v2668, 0.2548296
        %v2701 = vadd.f32 %v2669, 0.2548296
        %v2702 = vadd.f32 %v2670, 0.2548296
        %v2703 = vadd.f32 %v2671, 0.2548296
        %v2704 = vadd.f32 %v2672, 0.2548296
        %v2705 = vadd.f32 %v2673, 0.2548296
        %v2706 = vadd.f32 %v2674, 0.2548296
        %v2707 = vadd.f32 %v2675, 0.2548296
        %v2708 = vadd.f32 %v2676, 0.2548296
        %v2709 = vadd.f32 %v2677, 0.2548296
        %v2710 = vadd.f32 %v2678, 0.2548296
        %v2711 = vadd.f32 %v2679, 0.2548296
        %v2712 = vadd.f32 %v2680, 0.2548296
        %v2713 = vadd.f32 %v2681, 0.2548296
        %v2714 = vadd.f32 %v2682, 0.2548296
        %v2715 = vadd.f32 %v2683, 0.2548296
        %v2716 = vmul.f32 %v2684, %v2397
        %v2717 = vmul.f32 %v2685, %v2399
        %v2718 = vmul.f32 %v2686, %v2401
        %v2719 = vmul.f32 %v2687, %v2403
        %v2720 = vmul.f32 %v2688, %v2405
        %v2721 = vmul.f32 %v2689, %v2407
        %v2722 = vmul.f32 %v2690, %v2409
        %v2723 = vmul.f32 %v2691, %v2411
        %v2724 = vmul.f32 %v2692, %v2413
        %v2725 = vmul.f32 %v2693, %v2415
        %v2726 = vmul.f32 %v2694, %v2417
        %v2727 = vmul.f32 %v2695, %v2419
        %v2728 = vmul.f32 %v2696, %v2421
        %v2729 = vmul.f32 %v2697, %v2423
        %v2730 = vmul.f32 %v2698, %v2425
        %v2731 = vmul.f32 %v2699, %v2427
        %v2732 = vmul.f32 %v2700, %v2429
        %v2733 = vmul.f32 %v2701, %v2431
        %v2734 = vmul.f32 %v2702, %v2433
        %v2735 = vmul.f32 %v2703, %v2435
        %v2736 = vmul.f32 %v2704, %v2437
        %v2737 = vmul.f32 %v2705, %v2439
        %v2738 = vmul.f32 %v2706, %v2441
        %v2739 = vmul.f32 %v2707, %v2443
        %v2740 = vmul.f32 %v2708, %v2445
        %v2741 = vmul.f32 %v2709, %v2447
        %v2742 = vmul.f32 %v2710, %v2449
        %v2743 = vmul.f32 %v2711, %v2451
        %v2744 = vmul.f32 %v2712, %v2453
        %v2745 = vmul.f32 %v2713, %v2455
        %v2746 = vmul.f32 %v2714, %v2457
        %v2747 = vmul.f32 %v2715, %v2459
        %v2748 = vsub.f32 0.0, %v2300
        %v2749 = vsub.f32 0.0, %v2301
        %v2750 = vsub.f32 0.0, %v2302
        %v2751 = vsub.f32 0.0, %v2303
        %v2752 = vsub.f32 0.0, %v2304
        %v2753 = vsub.f32 0.0, %v2305
        %v2754 = vsub.f32 0.0, %v2306
        %v2755 = vsub.f32 0.0, %v2307
        %v2756 = vsub.f32 0.0, %v2308
        %v2757 = vsub.f32 0.0, %v2309
        %v2758 = vsub.f32 0.0, %v2310
        %v2759 = vsub.f32 0.0, %v2311
        %v2760 = vsub.f32 0.0, %v2312
        %v2761 = vsub.f32 0.0, %v2313
        %v2762 = vsub.f32 0.0, %v2314
        %v2763 = vsub.f32 0.0, %v2315
        %v2764 = vsub.f32 0.0, %v2316
        %v2765 = vsub.f32 0.0, %v2317
        %v2766 = vsub.f32 0.0, %v2318
        %v2767 = vsub.f32 0.0, %v2319
        %v2768 = vsub.f32 0.0, %v2320
        %v2769 = vsub.f32 0.0, %v2321
        %v2770 = vsub.f32 0.0, %v2322
        %v2771 = vsub.f32 0.0, %v2323
        %v2772 = vsub.f32 0.0, %v2324
        %v2773 = vsub.f32 0.0, %v2325
        %v2774 = vsub.f32 0.0, %v2326
        %v2775 = vsub.f32 0.0, %v2327
        %v2776 = vsub.f32 0.0, %v2328
        %v2777 = vsub.f32 0.0, %v2329
        %v2778 = vsub.f32 0.0, %v2330
        %v2779 = vsub.f32 0.0, %v2331
        %v2780 = vmul.f32 %v2748, %v2300
        %v2781 = vmul.f32 %v2749, %v2301
        %v2782 = vmul.f32 %v2750, %v2302
        %v2783 = vmul.f32 %v2751, %v2303
        %v2784 = vmul.f32 %v2752, %v2304
        %v2785 = vmul.f32 %v2753, %v2305
        %v2786 = vmul.f32 %v2754, %v2306
        %v2787 = vmul.f32 %v2755, %v2307
        %v2788 = vmul.f32 %v2756, %v2308
        %v2789 = vmul.f32 %v2757, %v2309
        %v2790 = vmul.f32 %v2758, %v2310
        %v2791 = vmul.f32 %v2759, %v2311
        %v2792 = vmul.f32 %v2760, %v2312
        %v2793 = vmul.f32 %v2761, %v2313
        %v2794 = vmul.f32 %v2762, %v2314
        %v2795 = vmul.f32 %v2763, %v2315
        %v2796 = vmul.f32 %v2764, %v2316
        %v2797 = vmul.f32 %v2765, %v2317
        %v2798 = vmul.f32 %v2766, %v2318
        %v2799 = vmul.f32 %v2767, %v2319
        %v2800 = vmul.f32 %v2768, %v2320
        %v2801 = vmul.f32 %v2769, %v2321
        %v2802 = vmul.f32 %v2770, %v2322
        %v2803 = vmul.f32 %v2771, %v2323
        %v2804 = vmul.f32 %v2772, %v2324
        %v2805 = vmul.f32 %v2773, %v2325
        %v2806 = vmul.f32 %v2774, %v2326
        %v2807 = vmul.f32 %v2775, %v2327
        %v2808 = vmul.f32 %v2776, %v2328
        %v2809 = vmul.f32 %v2777, %v2329
        %v2810 = vmul.f32 %v2778, %v2330
        %v2811 = vmul.f32 %v2779, %v2331
        %v2812 = vmul.f32 %v2780, 1.442695
        %v2813 = vpow.pop %v2812
        %v2814 = vmul.f32 %v2781, 1.442695
        %v2815 = vpow.pop %v2814
        %v2816 = vmul.f32 %v2782, 1.442695
        %v2817 = vpow.pop %v2816
        %v2818 = vmul.f32 %v2783, 1.442695
        %v2819 = vpow.pop %v2818
        %v2820 = vmul.f32 %v2784, 1.442695
        %v2821 = vpow.pop %v2820
        %v2822 = vmul.f32 %v2785, 1.442695
        %v2823 = vpow.pop %v2822
        %v2824 = vmul.f32 %v2786, 1.442695
        %v2825 = vpow.pop %v2824
        %v2826 = vmul.f32 %v2787, 1.442695
        %v2827 = vpow.pop %v2826
        %v2828 = vmul.f32 %v2788, 1.442695
        %v2829 = vpow.pop %v2828
        %v2830 = vmul.f32 %v2789, 1.442695
        %v2831 = vpow.pop %v2830
        %v2832 = vmul.f32 %v2790, 1.442695
        %v2833 = vpow.pop %v2832
        %v2834 = vmul.f32 %v2791, 1.442695
        %v2835 = vpow.pop %v2834
        %v2836 = vmul.f32 %v2792, 1.442695
        %v2837 = vpow.pop %v2836
        %v2838 = vmul.f32 %v2793, 1.442695
        %v2839 = vpow.pop %v2838
        %v2840 = vmul.f32 %v2794, 1.442695
        %v2841 = vpow.pop %v2840
        %v2842 = vmul.f32 %v2795, 1.442695
        %v2843 = vpow.pop %v2842
        %v2844 = vmul.f32 %v2796, 1.442695
        %v2845 = vpow.pop %v2844
        %v2846 = vmul.f32 %v2797, 1.442695
        %v2847 = vpow.pop %v2846
        %v2848 = vmul.f32 %v2798, 1.442695
        %v2849 = vpow.pop %v2848
        %v2850 = vmul.f32 %v2799, 1.442695
        %v2851 = vpow.pop %v2850
        %v2852 = vmul.f32 %v2800, 1.442695
        %v2853 = vpow.pop %v2852
        %v2854 = vmul.f32 %v2801, 1.442695
        %v2855 = vpow.pop %v2854
        %v2856 = vmul.f32 %v2802, 1.442695
        %v2857 = vpow.pop %v2856
        %v2858 = vmul.f32 %v2803, 1.442695
        %v2859 = vpow.pop %v2858
        %v2860 = vmul.f32 %v2804, 1.442695
        %v2861 = vpow.pop %v2860
        %v2862 = vmul.f32 %v2805, 1.442695
        %v2863 = vpow.pop %v2862
        %v2864 = vmul.f32 %v2806, 1.442695
        %v2865 = vpow.pop %v2864
        %v2866 = vmul.f32 %v2807, 1.442695
        %v2867 = vpow.pop %v2866
        %v2868 = vmul.f32 %v2808, 1.442695
        %v2869 = vpow.pop %v2868
        %v2870 = vmul.f32 %v2809, 1.442695
        %v2871 = vpow.pop %v2870
        %v2872 = vmul.f32 %v2810, 1.442695
        %v2873 = vpow.pop %v2872
        %v2874 = vmul.f32 %v2811, 1.442695
        %v2875 = vpow.pop %v2874
        %v2876 = vmul.f32 %v2716, %v2813
        %v2877 = vmul.f32 %v2717, %v2815
        %v2878 = vmul.f32 %v2718, %v2817
        %v2879 = vmul.f32 %v2719, %v2819
        %v2880 = vmul.f32 %v2720, %v2821
        %v2881 = vmul.f32 %v2721, %v2823
        %v2882 = vmul.f32 %v2722, %v2825
        %v2883 = vmul.f32 %v2723, %v2827
        %v2884 = vmul.f32 %v2724, %v2829
        %v2885 = vmul.f32 %v2725, %v2831
        %v2886 = vmul.f32 %v2726, %v2833
        %v2887 = vmul.f32 %v2727, %v2835
        %v2888 = vmul.f32 %v2728, %v2837
        %v2889 = vmul.f32 %v2729, %v2839
        %v2890 = vmul.f32 %v2730, %v2841
        %v2891 = vmul.f32 %v2731, %v2843
        %v2892 = vmul.f32 %v2732, %v2845
        %v2893 = vmul.f32 %v2733, %v2847
        %v2894 = vmul.f32 %v2734, %v2849
        %v2895 = vmul.f32 %v2735, %v2851
        %v2896 = vmul.f32 %v2736, %v2853
        %v2897 = vmul.f32 %v2737, %v2855
        %v2898 = vmul.f32 %v2738, %v2857
        %v2899 = vmul.f32 %v2739, %v2859
        %v2900 = vmul.f32 %v2740, %v2861
        %v2901 = vmul.f32 %v2741, %v2863
        %v2902 = vmul.f32 %v2742, %v2865
        %v2903 = vmul.f32 %v2743, %v2867
        %v2904 = vmul.f32 %v2744, %v2869
        %v2905 = vmul.f32 %v2745, %v2871
        %v2906 = vmul.f32 %v2746, %v2873
        %v2907 = vmul.f32 %v2747, %v2875
        %v2908 = vsub.f32 1.0, %v2876
        %v2909 = vsub.f32 1.0, %v2877
        %v2910 = vsub.f32 1.0, %v2878
        %v2911 = vsub.f32 1.0, %v2879
        %v2912 = vsub.f32 1.0, %v2880
        %v2913 = vsub.f32 1.0, %v2881
        %v2914 = vsub.f32 1.0, %v2882
        %v2915 = vsub.f32 1.0, %v2883
        %v2916 = vsub.f32 1.0, %v2884
        %v2917 = vsub.f32 1.0, %v2885
        %v2918 = vsub.f32 1.0, %v2886
        %v2919 = vsub.f32 1.0, %v2887
        %v2920 = vsub.f32 1.0, %v2888
        %v2921 = vsub.f32 1.0, %v2889
        %v2922 = vsub.f32 1.0, %v2890
        %v2923 = vsub.f32 1.0, %v2891
        %v2924 = vsub.f32 1.0, %v2892
        %v2925 = vsub.f32 1.0, %v2893
        %v2926 = vsub.f32 1.0, %v2894
        %v2927 = vsub.f32 1.0, %v2895
        %v2928 = vsub.f32 1.0, %v2896
        %v2929 = vsub.f32 1.0, %v2897
        %v2930 = vsub.f32 1.0, %v2898
        %v2931 = vsub.f32 1.0, %v2899
        %v2932 = vsub.f32 1.0, %v2900
        %v2933 = vsub.f32 1.0, %v2901
        %v2934 = vsub.f32 1.0, %v2902
        %v2935 = vsub.f32 1.0, %v2903
        %v2936 = vsub.f32 1.0, %v2904
        %v2937 = vsub.f32 1.0, %v2905
        %v2938 = vsub.f32 1.0, %v2906
        %v2939 = vsub.f32 1.0, %v2907
        %v2940 = vmul.f32 %v2268, %v2908
        %v2941 = vmul.f32 %v2269, %v2909
        %v2942 = vmul.f32 %v2270, %v2910
        %v2943 = vmul.f32 %v2271, %v2911
        %v2944 = vmul.f32 %v2272, %v2912
        %v2945 = vmul.f32 %v2273, %v2913
        %v2946 = vmul.f32 %v2274, %v2914
        %v2947 = vmul.f32 %v2275, %v2915
        %v2948 = vmul.f32 %v2276, %v2916
        %v2949 = vmul.f32 %v2277, %v2917
        %v2950 = vmul.f32 %v2278, %v2918
        %v2951 = vmul.f32 %v2279, %v2919
        %v2952 = vmul.f32 %v2280, %v2920
        %v2953 = vmul.f32 %v2281, %v2921
        %v2954 = vmul.f32 %v2282, %v2922
        %v2955 = vmul.f32 %v2283, %v2923
        %v2956 = vmul.f32 %v2284, %v2924
        %v2957 = vmul.f32 %v2285, %v2925
        %v2958 = vmul.f32 %v2286, %v2926
        %v2959 = vmul.f32 %v2287, %v2927
        %v2960 = vmul.f32 %v2288, %v2928
        %v2961 = vmul.f32 %v2289, %v2929
        %v2962 = vmul.f32 %v2290, %v2930
        %v2963 = vmul.f32 %v2291, %v2931
        %v2964 = vmul.f32 %v2292, %v2932
        %v2965 = vmul.f32 %v2293, %v2933
        %v2966 = vmul.f32 %v2294, %v2934
        %v2967 = vmul.f32 %v2295, %v2935
        %v2968 = vmul.f32 %v2296, %v2936
        %v2969 = vmul.f32 %v2297, %v2937
        %v2970 = vmul.f32 %v2298, %v2938
        %v2971 = vmul.f32 %v2299, %v2939
        %v2972 = vadd.f32 %v2940, 1.0
        %v2973 = vadd.f32 %v2941, 1.0
        %v2974 = vadd.f32 %v2942, 1.0
        %v2975 = vadd.f32 %v2943, 1.0
        %v2976 = vadd.f32 %v2944, 1.0
        %v2977 = vadd.f32 %v2945, 1.0
        %v2978 = vadd.f32 %v2946, 1.0
        %v2979 = vadd.f32 %v2947, 1.0
        %v2980 = vadd.f32 %v2948, 1.0
        %v2981 = vadd.f32 %v2949, 1.0
        %v2982 = vadd.f32 %v2950, 1.0
        %v2983 = vadd.f32 %v2951, 1.0
        %v2984 = vadd.f32 %v2952, 1.0
        %v2985 = vadd.f32 %v2953, 1.0
        %v2986 = vadd.f32 %v2954, 1.0
        %v2987 = vadd.f32 %v2955, 1.0
        %v2988 = vadd.f32 %v2956, 1.0
        %v2989 = vadd.f32 %v2957, 1.0
        %v2990 = vadd.f32 %v2958, 1.0
        %v2991 = vadd.f32 %v2959, 1.0
        %v2992 = vadd.f32 %v2960, 1.0
        %v2993 = vadd.f32 %v2961, 1.0
        %v2994 = vadd.f32 %v2962, 1.0
        %v2995 = vadd.f32 %v2963, 1.0
        %v2996 = vadd.f32 %v2964, 1.0
        %v2997 = vadd.f32 %v2965, 1.0
        %v2998 = vadd.f32 %v2966, 1.0
        %v2999 = vadd.f32 %v2967, 1.0
        %v3000 = vadd.f32 %v2968, 1.0
        %v3001 = vadd.f32 %v2969, 1.0
        %v3002 = vadd.f32 %v2970, 1.0
        %v3003 = vadd.f32 %v2971, 1.0
        %v3004 = vmul.f32 %v2172, %v2972
        %v3005 = vmul.f32 %v2173, %v2973
        %v3006 = vmul.f32 %v2174, %v2974
        %v3007 = vmul.f32 %v2175, %v2975
        %v3008 = vmul.f32 %v2176, %v2976
        %v3009 = vmul.f32 %v2177, %v2977
        %v3010 = vmul.f32 %v2178, %v2978
        %v3011 = vmul.f32 %v2179, %v2979
        %v3012 = vmul.f32 %v2180, %v2980
        %v3013 = vmul.f32 %v2181, %v2981
        %v3014 = vmul.f32 %v2182, %v2982
        %v3015 = vmul.f32 %v2183, %v2983
        %v3016 = vmul.f32 %v2184, %v2984
        %v3017 = vmul.f32 %v2185, %v2985
        %v3018 = vmul.f32 %v2186, %v2986
        %v3019 = vmul.f32 %v2187, %v2987
        %v3020 = vmul.f32 %v2188, %v2988
        %v3021 = vmul.f32 %v2189, %v2989
        %v3022 = vmul.f32 %v2190, %v2990
        %v3023 = vmul.f32 %v2191, %v2991
        %v3024 = vmul.f32 %v2192, %v2992
        %v3025 = vmul.f32 %v2193, %v2993
        %v3026 = vmul.f32 %v2194, %v2994
        %v3027 = vmul.f32 %v2195, %v2995
        %v3028 = vmul.f32 %v2196, %v2996
        %v3029 = vmul.f32 %v2197, %v2997
        %v3030 = vmul.f32 %v2198, %v2998
        %v3031 = vmul.f32 %v2199, %v2999
        %v3032 = vmul.f32 %v2200, %v3000
        %v3033 = vmul.f32 %v2201, %v3001
        %v3034 = vmul.f32 %v2202, %v3002
        %v3035 = vmul.f32 %v2203, %v3003
        %v3036 = vld [vmem:[%s567] sm:$0xff]
        %v3037 = vld [vmem:[%s567 + $0x8] sm:$0xff]
        %v3038 = vld [vmem:[%s567 + $0x10] sm:$0xff]
        %v3039 = vld [vmem:[%s567 + $0x18] sm:$0xff]
        %v3040 = vld [vmem:[%s567 + $0x20] sm:$0xff]
        %v3041 = vld [vmem:[%s567 + $0x28] sm:$0xff]
        %v3042 = vld [vmem:[%s567 + $0x30] sm:$0xff]
        %v3043 = vld [vmem:[%s567 + $0x38] sm:$0xff]
        %v3044 = vld [vmem:[%s567 + $0x40] sm:$0xff]
        %v3045 = vld [vmem:[%s567 + $0x48] sm:$0xff]
        %v3046 = vld [vmem:[%s567 + $0x50] sm:$0xff]
        %v3047 = vld [vmem:[%s567 + $0x58] sm:$0xff]
        %v3048 = vld [vmem:[%s567 + $0x60] sm:$0xff]
        %v3049 = vld [vmem:[%s567 + $0x68] sm:$0xff]
        %v3050 = vld [vmem:[%s567 + $0x70] sm:$0xff]
        %v3051 = vld [vmem:[%s567 + $0x78] sm:$0xff]
        %v3052 = vld [vmem:[%s567 + $0x80] sm:$0xff]
        %v3053 = vld [vmem:[%s567 + $0x88] sm:$0xff]
        %v3054 = vld [vmem:[%s567 + $0x90] sm:$0xff]
        %v3055 = vld [vmem:[%s567 + $0x98] sm:$0xff]
        %v3056 = vld [vmem:[%s567 + $0xa0] sm:$0xff]
        %v3057 = vld [vmem:[%s567 + $0xa8] sm:$0xff]
        %v3058 = vld [vmem:[%s567 + $0xb0] sm:$0xff]
        %v3059 = vld [vmem:[%s567 + $0xb8] sm:$0xff]
        %v3060 = vld [vmem:[%s567 + $0xc0] sm:$0xff]
        %v3061 = vld [vmem:[%s567 + $0xc8] sm:$0xff]
        %v3062 = vld [vmem:[%s567 + $0xd0] sm:$0xff]
        %v3063 = vld [vmem:[%s567 + $0xd8] sm:$0xff]
        %v3064 = vld [vmem:[%s567 + $0xe0] sm:$0xff]
        %v3065 = vld [vmem:[%s567 + $0xe8] sm:$0xff]
        %v3066 = vld [vmem:[%s567 + $0xf0] sm:$0xff]
        %v3067 = vld [vmem:[%s567 + $0xf8] sm:$0xff]
        %v3068 = vld [vmem:[%s567 + $0x100] sm:$0xff]
        %v3069 = vld [vmem:[%s567 + $0x108] sm:$0xff]
        %v3070 = vld [vmem:[%s567 + $0x110] sm:$0xff]
        %v3071 = vld [vmem:[%s567 + $0x118] sm:$0xff]
        %v3072 = vld [vmem:[%s567 + $0x120] sm:$0xff]
        %v3073 = vld [vmem:[%s567 + $0x128] sm:$0xff]
        %v3074 = vld [vmem:[%s567 + $0x130] sm:$0xff]
        %v3075 = vld [vmem:[%s567 + $0x138] sm:$0xff]
        %v3076 = vld [vmem:[%s567 + $0x140] sm:$0xff]
        %v3077 = vld [vmem:[%s567 + $0x148] sm:$0xff]
        %v3078 = vld [vmem:[%s567 + $0x150] sm:$0xff]
        %v3079 = vld [vmem:[%s567 + $0x158] sm:$0xff]
        %v3080 = vld [vmem:[%s567 + $0x160] sm:$0xff]
        %v3081 = vld [vmem:[%s567 + $0x168] sm:$0xff]
        %v3082 = vld [vmem:[%s567 + $0x170] sm:$0xff]
        %v3083 = vld [vmem:[%s567 + $0x178] sm:$0xff]
        %v3084 = vld [vmem:[%s567 + $0x180] sm:$0xff]
        %v3085 = vld [vmem:[%s567 + $0x188] sm:$0xff]
        %v3086 = vld [vmem:[%s567 + $0x190] sm:$0xff]
        %v3087 = vld [vmem:[%s567 + $0x198] sm:$0xff]
        %v3088 = vld [vmem:[%s567 + $0x1a0] sm:$0xff]
        %v3089 = vld [vmem:[%s567 + $0x1a8] sm:$0xff]
        %v3090 = vld [vmem:[%s567 + $0x1b0] sm:$0xff]
        %v3091 = vld [vmem:[%s567 + $0x1b8] sm:$0xff]
        %v3092 = vld [vmem:[%s567 + $0x1c0] sm:$0xff]
        %v3093 = vld [vmem:[%s567 + $0x1c8] sm:$0xff]
        %v3094 = vld [vmem:[%s567 + $0x1d0] sm:$0xff]
        %v3095 = vld [vmem:[%s567 + $0x1d8] sm:$0xff]
        %v3096 = vld [vmem:[%s567 + $0x1e0] sm:$0xff]
        %v3097 = vld [vmem:[%s567 + $0x1e8] sm:$0xff]
        %v3098 = vld [vmem:[%s567 + $0x1f0] sm:$0xff]
        %v3099 = vld [vmem:[%s567 + $0x1f8] sm:$0xff]
        %3100 = vrot.lane.b32.xlu0 %v1268, 32
        %v3101 = vpop.permute.xlu0 %3100
        %3103 = vmatprep.subr.mxu0 0.0
        %3104 = vmatpush1.xpose.msra.mxu0 0.0
        %3105 = vmatprep.subr.mxu0 0.0
        %3106 = vmatpush1.xpose.msra.mxu0 0.0
        %3107 = vmatprep.subr.mxu0 0.0
        %3108 = vmatpush1.xpose.msra.mxu0 0.0
        %3109 = vmatprep.subr.mxu0 0.0
        %3110 = vmatpush1.xpose.msra.mxu0 0.0
        %3111 = vmatprep.subr.mxu0 0.0
        %3112 = vmatpush1.xpose.msra.mxu0 0.0
        %3113 = vmatprep.subr.mxu0 0.0
        %3114 = vmatpush1.xpose.msra.mxu0 0.0
        %3115 = vmatprep.subr.mxu0 0.0
        %3116 = vmatpush1.xpose.msra.mxu0 0.0
        %3117 = vmatprep.subr.mxu0 0.0
        %3118 = vmatpush1.xpose.msra.mxu0 0.0
        %3119 = vmatprep.subr.mxu0 0.0
        %3120 = vmatpush1.xpose.msra.mxu0 0.0
        %3121 = vmatprep.subr.mxu0 0.0
        %3122 = vmatpush1.xpose.msra.mxu0 0.0
        %3123 = vmatprep.subr.mxu0 0.0
        %3124 = vmatpush1.xpose.msra.mxu0 0.0
        %3125 = vmatprep.subr.mxu0 0.0
        %3126 = vmatpush1.xpose.msra.mxu0 0.0
        %3127 = vmatprep.subr.mxu0 %v3085
        %3128 = vmatpush1.xpose.msra.mxu0 %v3084
        %3129 = vmatprep.subr.mxu0 %v3069
        %3130 = vmatpush1.xpose.msra.mxu0 %v3068
        %3131 = vmatprep.subr.mxu0 %v3053
        %3132 = vmatpush1.xpose.msra.mxu0 %v3052
        %3133 = vmatprep.subr.mxu0 %v3037
        %3134 = vmatpush1.xpose.msra.mxu0 %v3036
        %3135 = vmatprep.subr.mxu0 0.0
        %3136 = vmatpush2.xpose.msra.mxu0 0.0
        %3137 = vmatprep.subr.mxu0 0.0
        %3138 = vmatpush2.xpose.msra.mxu0 0.0
        %3139 = vmatprep.subr.mxu0 0.0
        %3140 = vmatpush2.xpose.msra.mxu0 0.0
        %3141 = vmatprep.subr.mxu0 0.0
        %3142 = vmatpush2.xpose.msra.mxu0 0.0
        %3143 = vmatprep.subr.mxu0 0.0
        %3144 = vmatpush2.xpose.msra.mxu0 0.0
        %3145 = vmatprep.subr.mxu0 0.0
        %3146 = vmatpush2.xpose.msra.mxu0 0.0
        %3147 = vmatprep.subr.mxu0 0.0
        %3148 = vmatpush2.xpose.msra.mxu0 0.0
        %3149 = vmatprep.subr.mxu0 0.0
        %3150 = vmatpush2.xpose.msra.mxu0 0.0
        %3151 = vmatprep.subr.mxu0 0.0
        %3152 = vmatpush2.xpose.msra.mxu0 0.0
        %3153 = vmatprep.subr.mxu0 0.0
        %3154 = vmatpush2.xpose.msra.mxu0 0.0
        %3155 = vmatprep.subr.mxu0 0.0
        %3156 = vmatpush2.xpose.msra.mxu0 0.0
        %3157 = vmatprep.subr.mxu0 0.0
        %3158 = vmatpush2.xpose.msra.mxu0 0.0
        %3159 = vmatprep.subr.mxu0 0.0
        %3160 = vmatpush2.xpose.msra.mxu0 0.0
        %3161 = vmatprep.subr.mxu0 0.0
        %3162 = vmatpush2.xpose.msra.mxu0 0.0
        %3163 = vmatprep.subr.mxu0 0.0
        %3164 = vmatpush2.xpose.msra.mxu0 0.0
        %3165 = vmatprep.subr.mxu0 0.0
        %3166 = vmatpush2.xpose.msra.mxu0 0.0
        %3167 = vmatprep.mubr.f32.mxu0 %v3005
        %3168 = vmatmul.mubr.f32.gmra.mxu0 %v3004
        %v3169 = vpop.f32.mrf.mxu0
        %v3170 = vadd.f32 %v3101, %v3169
        %v3171 = vpop.f32.mrf.mxu0
        %3172 = vmatprep.mubr.f32.mxu0 %v3021
        %3173 = vmatmul.mubr.f32.gmra.mxu0 %v3020
        %v3174 = vpop.f32.mrf.mxu0
        %v3175 = vadd.f32 %v3101, %v3174
        %v3176 = vpop.f32.mrf.mxu0
        %3177 = vdwg.mxu0
        %3178 = vmatprep.subr.mxu0 0.0
        %3179 = vmatpush1.xpose.msra.mxu0 0.0
        %3180 = vmatprep.subr.mxu0 0.0
        %3181 = vmatpush1.xpose.msra.mxu0 0.0
        %3182 = vmatprep.subr.mxu0 0.0
        %3183 = vmatpush1.xpose.msra.mxu0 0.0
        %3184 = vmatprep.subr.mxu0 0.0
        %3185 = vmatpush1.xpose.msra.mxu0 0.0
        %3186 = vmatprep.subr.mxu0 0.0
        %3187 = vmatpush1.xpose.msra.mxu0 0.0
        %3188 = vmatprep.subr.mxu0 0.0
        %3189 = vmatpush1.xpose.msra.mxu0 0.0
        %3190 = vmatprep.subr.mxu0 0.0
        %3191 = vmatpush1.xpose.msra.mxu0 0.0
        %3192 = vmatprep.subr.mxu0 0.0
        %3193 = vmatpush1.xpose.msra.mxu0 0.0
        %3194 = vmatprep.subr.mxu0 0.0
        %3195 = vmatpush1.xpose.msra.mxu0 0.0
        %3196 = vmatprep.subr.mxu0 0.0
        %3197 = vmatpush1.xpose.msra.mxu0 0.0
        %3198 = vmatprep.subr.mxu0 0.0
        %3199 = vmatpush1.xpose.msra.mxu0 0.0
        %3200 = vmatprep.subr.mxu0 0.0
        %3201 = vmatpush1.xpose.msra.mxu0 0.0
        %3202 = vmatprep.subr.mxu0 %v3087
        %3203 = vmatpush1.xpose.msra.mxu0 %v3086
        %3204 = vmatprep.subr.mxu0 %v3071
        %3205 = vmatpush1.xpose.msra.mxu0 %v3070
        %3206 = vmatprep.subr.mxu0 %v3055
        %3207 = vmatpush1.xpose.msra.mxu0 %v3054
        %3208 = vmatprep.subr.mxu0 %v3039
        %3209 = vmatpush1.xpose.msra.mxu0 %v3038
        %3210 = vmatprep.subr.mxu0 0.0
        %3211 = vmatpush2.xpose.msra.mxu0 0.0
        %3212 = vmatprep.subr.mxu0 0.0
        %3213 = vmatpush2.xpose.msra.mxu0 0.0
        %3214 = vmatprep.subr.mxu0 0.0
        %3215 = vmatpush2.xpose.msra.mxu0 0.0
        %3216 = vmatprep.subr.mxu0 0.0
        %3217 = vmatpush2.xpose.msra.mxu0 0.0
        %3218 = vmatprep.subr.mxu0 0.0
        %3219 = vmatpush2.xpose.msra.mxu0 0.0
        %3220 = vmatprep.subr.mxu0 0.0
        %3221 = vmatpush2.xpose.msra.mxu0 0.0
        %3222 = vmatprep.subr.mxu0 0.0
        %3223 = vmatpush2.xpose.msra.mxu0 0.0
        %3224 = vmatprep.subr.mxu0 0.0
        %3225 = vmatpush2.xpose.msra.mxu0 0.0
        %3226 = vmatprep.subr.mxu0 0.0
        %3227 = vmatpush2.xpose.msra.mxu0 0.0
        %3228 = vmatprep.subr.mxu0 0.0
        %3229 = vmatpush2.xpose.msra.mxu0 0.0
        %3230 = vmatprep.subr.mxu0 0.0
        %3231 = vmatpush2.xpose.msra.mxu0 0.0
        %3232 = vmatprep.subr.mxu0 0.0
        %3233 = vmatpush2.xpose.msra.mxu0 0.0
        %3234 = vmatprep.subr.mxu0 0.0
        %3235 = vmatpush2.xpose.msra.mxu0 0.0
        %3236 = vmatprep.subr.mxu0 0.0
        %3237 = vmatpush2.xpose.msra.mxu0 0.0
        %3238 = vmatprep.subr.mxu0 0.0
        %3239 = vmatpush2.xpose.msra.mxu0 0.0
        %3240 = vmatprep.subr.mxu0 0.0
        %3241 = vmatpush2.xpose.msra.mxu0 0.0
        %3242 = vmatprep.mubr.f32.mxu0 %v3007
        %3243 = vmatmul.mubr.f32.gmra.mxu0 %v3006
        %v3244 = vpop.f32.mrf.mxu0
        %v3245 = vadd.f32 %v3170, %v3244
        %v3246 = vpop.f32.mrf.mxu0
        %3247 = vmatprep.mubr.f32.mxu0 %v3023
        %3248 = vmatmul.mubr.f32.gmra.mxu0 %v3022
        %v3249 = vpop.f32.mrf.mxu0
        %v3250 = vadd.f32 %v3175, %v3249
        %v3251 = vpop.f32.mrf.mxu0
        %3252 = vdwg.mxu0
        %3253 = vmatprep.subr.mxu0 0.0
        %3254 = vmatpush1.xpose.msra.mxu0 0.0
        %3255 = vmatprep.subr.mxu0 0.0
        %3256 = vmatpush1.xpose.msra.mxu0 0.0
        %3257 = vmatprep.subr.mxu0 0.0
        %3258 = vmatpush1.xpose.msra.mxu0 0.0
        %3259 = vmatprep.subr.mxu0 0.0
        %3260 = vmatpush1.xpose.msra.mxu0 0.0
        %3261 = vmatprep.subr.mxu0 0.0
        %3262 = vmatpush1.xpose.msra.mxu0 0.0
        %3263 = vmatprep.subr.mxu0 0.0
        %3264 = vmatpush1.xpose.msra.mxu0 0.0
        %3265 = vmatprep.subr.mxu0 0.0
        %3266 = vmatpush1.xpose.msra.mxu0 0.0
        %3267 = vmatprep.subr.mxu0 0.0
        %3268 = vmatpush1.xpose.msra.mxu0 0.0
        %3269 = vmatprep.subr.mxu0 0.0
        %3270 = vmatpush1.xpose.msra.mxu0 0.0
        %3271 = vmatprep.subr.mxu0 0.0
        %3272 = vmatpush1.xpose.msra.mxu0 0.0
        %3273 = vmatprep.subr.mxu0 0.0
        %3274 = vmatpush1.xpose.msra.mxu0 0.0
        %3275 = vmatprep.subr.mxu0 0.0
        %3276 = vmatpush1.xpose.msra.mxu0 0.0
        %3277 = vmatprep.subr.mxu0 %v3089
        %3278 = vmatpush1.xpose.msra.mxu0 %v3088
        %3279 = vmatprep.subr.mxu0 %v3073
        %3280 = vmatpush1.xpose.msra.mxu0 %v3072
        %3281 = vmatprep.subr.mxu0 %v3057
        %3282 = vmatpush1.xpose.msra.mxu0 %v3056
        %3283 = vmatprep.subr.mxu0 %v3041
        %3284 = vmatpush1.xpose.msra.mxu0 %v3040
        %3285 = vmatprep.subr.mxu0 0.0
        %3286 = vmatpush2.xpose.msra.mxu0 0.0
        %3287 = vmatprep.subr.mxu0 0.0
        %3288 = vmatpush2.xpose.msra.mxu0 0.0
        %3289 = vmatprep.subr.mxu0 0.0
        %3290 = vmatpush2.xpose.msra.mxu0 0.0
        %3291 = vmatprep.subr.mxu0 0.0
        %3292 = vmatpush2.xpose.msra.mxu0 0.0
        %3293 = vmatprep.subr.mxu0 0.0
        %3294 = vmatpush2.xpose.msra.mxu0 0.0
        %3295 = vmatprep.subr.mxu0 0.0
        %3296 = vmatpush2.xpose.msra.mxu0 0.0
        %3297 = vmatprep.subr.mxu0 0.0
        %3298 = vmatpush2.xpose.msra.mxu0 0.0
        %3299 = vmatprep.subr.mxu0 0.0
        %3300 = vmatpush2.xpose.msra.mxu0 0.0
        %3301 = vmatprep.subr.mxu0 0.0
        %3302 = vmatpush2.xpose.msra.mxu0 0.0
        %3303 = vmatprep.subr.mxu0 0.0
        %3304 = vmatpush2.xpose.msra.mxu0 0.0
        %3305 = vmatprep.subr.mxu0 0.0
        %3306 = vmatpush2.xpose.msra.mxu0 0.0
        %3307 = vmatprep.subr.mxu0 0.0
        %3308 = vmatpush2.xpose.msra.mxu0 0.0
        %3309 = vmatprep.subr.mxu0 0.0
        %3310 = vmatpush2.xpose.msra.mxu0 0.0
        %3311 = vmatprep.subr.mxu0 0.0
        %3312 = vmatpush2.xpose.msra.mxu0 0.0
        %3313 = vmatprep.subr.mxu0 0.0
        %3314 = vmatpush2.xpose.msra.mxu0 0.0
        %3315 = vmatprep.subr.mxu0 0.0
        %3316 = vmatpush2.xpose.msra.mxu0 0.0
        %3317 = vmatprep.mubr.f32.mxu0 %v3009
        %3318 = vmatmul.mubr.f32.gmra.mxu0 %v3008
        %v3319 = vpop.f32.mrf.mxu0
        %v3320 = vadd.f32 %v3245, %v3319
        %v3321 = vpop.f32.mrf.mxu0
        %3322 = vmatprep.mubr.f32.mxu0 %v3025
        %3323 = vmatmul.mubr.f32.gmra.mxu0 %v3024
        %v3324 = vpop.f32.mrf.mxu0
        %v3325 = vadd.f32 %v3250, %v3324
        %v3326 = vpop.f32.mrf.mxu0
        %3327 = vdwg.mxu0
        %3328 = vmatprep.subr.mxu0 0.0
        %3329 = vmatpush1.xpose.msra.mxu0 0.0
        %3330 = vmatprep.subr.mxu0 0.0
        %3331 = vmatpush1.xpose.msra.mxu0 0.0
        %3332 = vmatprep.subr.mxu0 0.0
        %3333 = vmatpush1.xpose.msra.mxu0 0.0
        %3334 = vmatprep.subr.mxu0 0.0
        %3335 = vmatpush1.xpose.msra.mxu0 0.0
        %3336 = vmatprep.subr.mxu0 0.0
        %3337 = vmatpush1.xpose.msra.mxu0 0.0
        %3338 = vmatprep.subr.mxu0 0.0
        %3339 = vmatpush1.xpose.msra.mxu0 0.0
        %3340 = vmatprep.subr.mxu0 0.0
        %3341 = vmatpush1.xpose.msra.mxu0 0.0
        %3342 = vmatprep.subr.mxu0 0.0
        %3343 = vmatpush1.xpose.msra.mxu0 0.0
        %3344 = vmatprep.subr.mxu0 0.0
        %3345 = vmatpush1.xpose.msra.mxu0 0.0
        %3346 = vmatprep.subr.mxu0 0.0
        %3347 = vmatpush1.xpose.msra.mxu0 0.0
        %3348 = vmatprep.subr.mxu0 0.0
        %3349 = vmatpush1.xpose.msra.mxu0 0.0
        %3350 = vmatprep.subr.mxu0 0.0
        %3351 = vmatpush1.xpose.msra.mxu0 0.0
        %3352 = vmatprep.subr.mxu0 %v3091
        %3353 = vmatpush1.xpose.msra.mxu0 %v3090
        %3354 = vmatprep.subr.mxu0 %v3075
        %3355 = vmatpush1.xpose.msra.mxu0 %v3074
        %3356 = vmatprep.subr.mxu0 %v3059
        %3357 = vmatpush1.xpose.msra.mxu0 %v3058
        %3358 = vmatprep.subr.mxu0 %v3043
        %3359 = vmatpush1.xpose.msra.mxu0 %v3042
        %3360 = vmatprep.subr.mxu0 0.0
        %3361 = vmatpush2.xpose.msra.mxu0 0.0
        %3362 = vmatprep.subr.mxu0 0.0
        %3363 = vmatpush2.xpose.msra.mxu0 0.0
        %3364 = vmatprep.subr.mxu0 0.0
        %3365 = vmatpush2.xpose.msra.mxu0 0.0
        %3366 = vmatprep.subr.mxu0 0.0
        %3367 = vmatpush2.xpose.msra.mxu0 0.0
        %3368 = vmatprep.subr.mxu0 0.0
        %3369 = vmatpush2.xpose.msra.mxu0 0.0
        %3370 = vmatprep.subr.mxu0 0.0
        %3371 = vmatpush2.xpose.msra.mxu0 0.0
        %3372 = vmatprep.subr.mxu0 0.0
        %3373 = vmatpush2.xpose.msra.mxu0 0.0
        %3374 = vmatprep.subr.mxu0 0.0
        %3375 = vmatpush2.xpose.msra.mxu0 0.0
        %3376 = vmatprep.subr.mxu0 0.0
        %3377 = vmatpush2.xpose.msra.mxu0 0.0
        %3378 = vmatprep.subr.mxu0 0.0
        %3379 = vmatpush2.xpose.msra.mxu0 0.0
        %3380 = vmatprep.subr.mxu0 0.0
        %3381 = vmatpush2.xpose.msra.mxu0 0.0
        %3382 = vmatprep.subr.mxu0 0.0
        %3383 = vmatpush2.xpose.msra.mxu0 0.0
        %3384 = vmatprep.subr.mxu0 0.0
        %3385 = vmatpush2.xpose.msra.mxu0 0.0
        %3386 = vmatprep.subr.mxu0 0.0
        %3387 = vmatpush2.xpose.msra.mxu0 0.0
        %3388 = vmatprep.subr.mxu0 0.0
        %3389 = vmatpush2.xpose.msra.mxu0 0.0
        %3390 = vmatprep.subr.mxu0 0.0
        %3391 = vmatpush2.xpose.msra.mxu0 0.0
        %3392 = vmatprep.mubr.f32.mxu0 %v3011
        %3393 = vmatmul.mubr.f32.gmra.mxu0 %v3010
        %v3394 = vpop.f32.mrf.mxu0
        %v3395 = vadd.f32 %v3320, %v3394
        %v3396 = vpop.f32.mrf.mxu0
        %3397 = vmatprep.mubr.f32.mxu0 %v3027
        %3398 = vmatmul.mubr.f32.gmra.mxu0 %v3026
        %v3399 = vpop.f32.mrf.mxu0
        %v3400 = vadd.f32 %v3325, %v3399
        %v3401 = vpop.f32.mrf.mxu0
        %3402 = vdwg.mxu0
        %3403 = vmatprep.subr.mxu0 0.0
        %3404 = vmatpush1.xpose.msra.mxu0 0.0
        %3405 = vmatprep.subr.mxu0 0.0
        %3406 = vmatpush1.xpose.msra.mxu0 0.0
        %3407 = vmatprep.subr.mxu0 0.0
        %3408 = vmatpush1.xpose.msra.mxu0 0.0
        %3409 = vmatprep.subr.mxu0 0.0
        %3410 = vmatpush1.xpose.msra.mxu0 0.0
        %3411 = vmatprep.subr.mxu0 0.0
        %3412 = vmatpush1.xpose.msra.mxu0 0.0
        %3413 = vmatprep.subr.mxu0 0.0
        %3414 = vmatpush1.xpose.msra.mxu0 0.0
        %3415 = vmatprep.subr.mxu0 0.0
        %3416 = vmatpush1.xpose.msra.mxu0 0.0
        %3417 = vmatprep.subr.mxu0 0.0
        %3418 = vmatpush1.xpose.msra.mxu0 0.0
        %3419 = vmatprep.subr.mxu0 0.0
        %3420 = vmatpush1.xpose.msra.mxu0 0.0
        %3421 = vmatprep.subr.mxu0 0.0
        %3422 = vmatpush1.xpose.msra.mxu0 0.0
        %3423 = vmatprep.subr.mxu0 0.0
        %3424 = vmatpush1.xpose.msra.mxu0 0.0
        %3425 = vmatprep.subr.mxu0 0.0
        %3426 = vmatpush1.xpose.msra.mxu0 0.0
        %3427 = vmatprep.subr.mxu0 %v3093
        %3428 = vmatpush1.xpose.msra.mxu0 %v3092
        %3429 = vmatprep.subr.mxu0 %v3077
        %3430 = vmatpush1.xpose.msra.mxu0 %v3076
        %3431 = vmatprep.subr.mxu0 %v3061
        %3432 = vmatpush1.xpose.msra.mxu0 %v3060
        %3433 = vmatprep.subr.mxu0 %v3045
        %3434 = vmatpush1.xpose.msra.mxu0 %v3044
        %3435 = vmatprep.subr.mxu0 0.0
        %3436 = vmatpush2.xpose.msra.mxu0 0.0
        %3437 = vmatprep.subr.mxu0 0.0
        %3438 = vmatpush2.xpose.msra.mxu0 0.0
        %3439 = vmatprep.subr.mxu0 0.0
        %3440 = vmatpush2.xpose.msra.mxu0 0.0
        %3441 = vmatprep.subr.mxu0 0.0
        %3442 = vmatpush2.xpose.msra.mxu0 0.0
        %3443 = vmatprep.subr.mxu0 0.0
        %3444 = vmatpush2.xpose.msra.mxu0 0.0
        %3445 = vmatprep.subr.mxu0 0.0
        %3446 = vmatpush2.xpose.msra.mxu0 0.0
        %3447 = vmatprep.subr.mxu0 0.0
        %3448 = vmatpush2.xpose.msra.mxu0 0.0
        %3449 = vmatprep.subr.mxu0 0.0
        %3450 = vmatpush2.xpose.msra.mxu0 0.0
        %3451 = vmatprep.subr.mxu0 0.0
        %3452 = vmatpush2.xpose.msra.mxu0 0.0
        %3453 = vmatprep.subr.mxu0 0.0
        %3454 = vmatpush2.xpose.msra.mxu0 0.0
        %3455 = vmatprep.subr.mxu0 0.0
        %3456 = vmatpush2.xpose.msra.mxu0 0.0
        %3457 = vmatprep.subr.mxu0 0.0
        %3458 = vmatpush2.xpose.msra.mxu0 0.0
        %3459 = vmatprep.subr.mxu0 0.0
        %3460 = vmatpush2.xpose.msra.mxu0 0.0
        %3461 = vmatprep.subr.mxu0 0.0
        %3462 = vmatpush2.xpose.msra.mxu0 0.0
        %3463 = vmatprep.subr.mxu0 0.0
        %3464 = vmatpush2.xpose.msra.mxu0 0.0
        %3465 = vmatprep.subr.mxu0 0.0
        %3466 = vmatpush2.xpose.msra.mxu0 0.0
        %3467 = vmatprep.mubr.f32.mxu0 %v3013
        %3468 = vmatmul.mubr.f32.gmra.mxu0 %v3012
        %v3469 = vpop.f32.mrf.mxu0
        %v3470 = vadd.f32 %v3395, %v3469
        %v3471 = vpop.f32.mrf.mxu0
        %3472 = vmatprep.mubr.f32.mxu0 %v3029
        %3473 = vmatmul.mubr.f32.gmra.mxu0 %v3028
        %v3474 = vpop.f32.mrf.mxu0
        %v3475 = vadd.f32 %v3400, %v3474
        %v3476 = vpop.f32.mrf.mxu0
        %3477 = vdwg.mxu0
        %3478 = vmatprep.subr.mxu0 0.0
        %3479 = vmatpush1.xpose.msra.mxu0 0.0
        %3480 = vmatprep.subr.mxu0 0.0
        %3481 = vmatpush1.xpose.msra.mxu0 0.0
        %3482 = vmatprep.subr.mxu0 0.0
        %3483 = vmatpush1.xpose.msra.mxu0 0.0
        %3484 = vmatprep.subr.mxu0 0.0
        %3485 = vmatpush1.xpose.msra.mxu0 0.0
        %3486 = vmatprep.subr.mxu0 0.0
        %3487 = vmatpush1.xpose.msra.mxu0 0.0
        %3488 = vmatprep.subr.mxu0 0.0
        %3489 = vmatpush1.xpose.msra.mxu0 0.0
        %3490 = vmatprep.subr.mxu0 0.0
        %3491 = vmatpush1.xpose.msra.mxu0 0.0
        %3492 = vmatprep.subr.mxu0 0.0
        %3493 = vmatpush1.xpose.msra.mxu0 0.0
        %3494 = vmatprep.subr.mxu0 0.0
        %3495 = vmatpush1.xpose.msra.mxu0 0.0
        %3496 = vmatprep.subr.mxu0 0.0
        %3497 = vmatpush1.xpose.msra.mxu0 0.0
        %3498 = vmatprep.subr.mxu0 0.0
        %3499 = vmatpush1.xpose.msra.mxu0 0.0
        %3500 = vmatprep.subr.mxu0 0.0
        %3501 = vmatpush1.xpose.msra.mxu0 0.0
        %3502 = vmatprep.subr.mxu0 %v3095
        %3503 = vmatpush1.xpose.msra.mxu0 %v3094
        %3504 = vmatprep.subr.mxu0 %v3079
        %3505 = vmatpush1.xpose.msra.mxu0 %v3078
        %3506 = vmatprep.subr.mxu0 %v3063
        %3507 = vmatpush1.xpose.msra.mxu0 %v3062
        %3508 = vmatprep.subr.mxu0 %v3047
        %3509 = vmatpush1.xpose.msra.mxu0 %v3046
        %3510 = vmatprep.subr.mxu0 0.0
        %3511 = vmatpush2.xpose.msra.mxu0 0.0
        %3512 = vmatprep.subr.mxu0 0.0
        %3513 = vmatpush2.xpose.msra.mxu0 0.0
        %3514 = vmatprep.subr.mxu0 0.0
        %3515 = vmatpush2.xpose.msra.mxu0 0.0
        %3516 = vmatprep.subr.mxu0 0.0
        %3517 = vmatpush2.xpose.msra.mxu0 0.0
        %3518 = vmatprep.subr.mxu0 0.0
        %3519 = vmatpush2.xpose.msra.mxu0 0.0
        %3520 = vmatprep.subr.mxu0 0.0
        %3521 = vmatpush2.xpose.msra.mxu0 0.0
        %3522 = vmatprep.subr.mxu0 0.0
        %3523 = vmatpush2.xpose.msra.mxu0 0.0
        %3524 = vmatprep.subr.mxu0 0.0
        %3525 = vmatpush2.xpose.msra.mxu0 0.0
        %3526 = vmatprep.subr.mxu0 0.0
        %3527 = vmatpush2.xpose.msra.mxu0 0.0
        %3528 = vmatprep.subr.mxu0 0.0
        %3529 = vmatpush2.xpose.msra.mxu0 0.0
        %3530 = vmatprep.subr.mxu0 0.0
        %3531 = vmatpush2.xpose.msra.mxu0 0.0
        %3532 = vmatprep.subr.mxu0 0.0
        %3533 = vmatpush2.xpose.msra.mxu0 0.0
        %3534 = vmatprep.subr.mxu0 0.0
        %3535 = vmatpush2.xpose.msra.mxu0 0.0
        %3536 = vmatprep.subr.mxu0 0.0
        %3537 = vmatpush2.xpose.msra.mxu0 0.0
        %3538 = vmatprep.subr.mxu0 0.0
        %3539 = vmatpush2.xpose.msra.mxu0 0.0
        %3540 = vmatprep.subr.mxu0 0.0
        %3541 = vmatpush2.xpose.msra.mxu0 0.0
        %3542 = vmatprep.mubr.f32.mxu0 %v3015
        %3543 = vmatmul.mubr.f32.gmra.mxu0 %v3014
        %v3544 = vpop.f32.mrf.mxu0
        %v3545 = vadd.f32 %v3470, %v3544
        %v3546 = vpop.f32.mrf.mxu0
        %3547 = vmatprep.mubr.f32.mxu0 %v3031
        %3548 = vmatmul.mubr.f32.gmra.mxu0 %v3030
        %v3549 = vpop.f32.mrf.mxu0
        %v3550 = vadd.f32 %v3475, %v3549
        %v3551 = vpop.f32.mrf.mxu0
        %3552 = vdwg.mxu0
        %3553 = vmatprep.subr.mxu0 0.0
        %3554 = vmatpush1.xpose.msra.mxu0 0.0
        %3555 = vmatprep.subr.mxu0 0.0
        %3556 = vmatpush1.xpose.msra.mxu0 0.0
        %3557 = vmatprep.subr.mxu0 0.0
        %3558 = vmatpush1.xpose.msra.mxu0 0.0
        %3559 = vmatprep.subr.mxu0 0.0
        %3560 = vmatpush1.xpose.msra.mxu0 0.0
        %3561 = vmatprep.subr.mxu0 0.0
        %3562 = vmatpush1.xpose.msra.mxu0 0.0
        %3563 = vmatprep.subr.mxu0 0.0
        %3564 = vmatpush1.xpose.msra.mxu0 0.0
        %3565 = vmatprep.subr.mxu0 0.0
        %3566 = vmatpush1.xpose.msra.mxu0 0.0
        %3567 = vmatprep.subr.mxu0 0.0
        %3568 = vmatpush1.xpose.msra.mxu0 0.0
        %3569 = vmatprep.subr.mxu0 0.0
        %3570 = vmatpush1.xpose.msra.mxu0 0.0
        %3571 = vmatprep.subr.mxu0 0.0
        %3572 = vmatpush1.xpose.msra.mxu0 0.0
        %3573 = vmatprep.subr.mxu0 0.0
        %3574 = vmatpush1.xpose.msra.mxu0 0.0
        %3575 = vmatprep.subr.mxu0 0.0
        %3576 = vmatpush1.xpose.msra.mxu0 0.0
        %3577 = vmatprep.subr.mxu0 %v3097
        %3578 = vmatpush1.xpose.msra.mxu0 %v3096
        %3579 = vmatprep.subr.mxu0 %v3081
        %3580 = vmatpush1.xpose.msra.mxu0 %v3080
        %3581 = vmatprep.subr.mxu0 %v3065
        %3582 = vmatpush1.xpose.msra.mxu0 %v3064
        %3583 = vmatprep.subr.mxu0 %v3049
        %3584 = vmatpush1.xpose.msra.mxu0 %v3048
        %3585 = vmatprep.subr.mxu0 0.0
        %3586 = vmatpush2.xpose.msra.mxu0 0.0
        %3587 = vmatprep.subr.mxu0 0.0
        %3588 = vmatpush2.xpose.msra.mxu0 0.0
        %3589 = vmatprep.subr.mxu0 0.0
        %3590 = vmatpush2.xpose.msra.mxu0 0.0
        %3591 = vmatprep.subr.mxu0 0.0
        %3592 = vmatpush2.xpose.msra.mxu0 0.0
        %3593 = vmatprep.subr.mxu0 0.0
        %3594 = vmatpush2.xpose.msra.mxu0 0.0
        %3595 = vmatprep.subr.mxu0 0.0
        %3596 = vmatpush2.xpose.msra.mxu0 0.0
        %3597 = vmatprep.subr.mxu0 0.0
        %3598 = vmatpush2.xpose.msra.mxu0 0.0
        %3599 = vmatprep.subr.mxu0 0.0
        %3600 = vmatpush2.xpose.msra.mxu0 0.0
        %3601 = vmatprep.subr.mxu0 0.0
        %3602 = vmatpush2.xpose.msra.mxu0 0.0
        %3603 = vmatprep.subr.mxu0 0.0
        %3604 = vmatpush2.xpose.msra.mxu0 0.0
        %3605 = vmatprep.subr.mxu0 0.0
        %3606 = vmatpush2.xpose.msra.mxu0 0.0
        %3607 = vmatprep.subr.mxu0 0.0
        %3608 = vmatpush2.xpose.msra.mxu0 0.0
        %3609 = vmatprep.subr.mxu0 0.0
        %3610 = vmatpush2.xpose.msra.mxu0 0.0
        %3611 = vmatprep.subr.mxu0 0.0
        %3612 = vmatpush2.xpose.msra.mxu0 0.0
        %3613 = vmatprep.subr.mxu0 0.0
        %3614 = vmatpush2.xpose.msra.mxu0 0.0
        %3615 = vmatprep.subr.mxu0 0.0
        %3616 = vmatpush2.xpose.msra.mxu0 0.0
        %3617 = vmatprep.mubr.f32.mxu0 %v3017
        %3618 = vmatmul.mubr.f32.gmra.mxu0 %v3016
        %v3619 = vpop.f32.mrf.mxu0
        %v3620 = vadd.f32 %v3545, %v3619
        %v3621 = vpop.f32.mrf.mxu0
        %3622 = vmatprep.mubr.f32.mxu0 %v3033
        %3623 = vmatmul.mubr.f32.gmra.mxu0 %v3032
        %v3624 = vpop.f32.mrf.mxu0
        %v3625 = vadd.f32 %v3550, %v3624
        %v3626 = vpop.f32.mrf.mxu0
        %3627 = vdwg.mxu0
        %3628 = vmatprep.subr.mxu0 0.0
        %3629 = vmatpush1.xpose.msra.mxu0 0.0
        %3630 = vmatprep.subr.mxu0 0.0
        %3631 = vmatpush1.xpose.msra.mxu0 0.0
        %3632 = vmatprep.subr.mxu0 0.0
        %3633 = vmatpush1.xpose.msra.mxu0 0.0
        %3634 = vmatprep.subr.mxu0 0.0
        %3635 = vmatpush1.xpose.msra.mxu0 0.0
        %3636 = vmatprep.subr.mxu0 0.0
        %3637 = vmatpush1.xpose.msra.mxu0 0.0
        %3638 = vmatprep.subr.mxu0 0.0
        %3639 = vmatpush1.xpose.msra.mxu0 0.0
        %3640 = vmatprep.subr.mxu0 0.0
        %3641 = vmatpush1.xpose.msra.mxu0 0.0
        %3642 = vmatprep.subr.mxu0 0.0
        %3643 = vmatpush1.xpose.msra.mxu0 0.0
        %3644 = vmatprep.subr.mxu0 0.0
        %3645 = vmatpush1.xpose.msra.mxu0 0.0
        %3646 = vmatprep.subr.mxu0 0.0
        %3647 = vmatpush1.xpose.msra.mxu0 0.0
        %3648 = vmatprep.subr.mxu0 0.0
        %3649 = vmatpush1.xpose.msra.mxu0 0.0
        %3650 = vmatprep.subr.mxu0 0.0
        %3651 = vmatpush1.xpose.msra.mxu0 0.0
        %3652 = vmatprep.subr.mxu0 %v3099
        %3653 = vmatpush1.xpose.msra.mxu0 %v3098
        %3654 = vmatprep.subr.mxu0 %v3083
        %3655 = vmatpush1.xpose.msra.mxu0 %v3082
        %3656 = vmatprep.subr.mxu0 %v3067
        %3657 = vmatpush1.xpose.msra.mxu0 %v3066
        %3658 = vmatprep.subr.mxu0 %v3051
        %3659 = vmatpush1.xpose.msra.mxu0 %v3050
        %3660 = vmatprep.subr.mxu0 0.0
        %3661 = vmatpush2.xpose.msra.mxu0 0.0
        %3662 = vmatprep.subr.mxu0 0.0
        %3663 = vmatpush2.xpose.msra.mxu0 0.0
        %3664 = vmatprep.subr.mxu0 0.0
        %3665 = vmatpush2.xpose.msra.mxu0 0.0
        %3666 = vmatprep.subr.mxu0 0.0
        %3667 = vmatpush2.xpose.msra.mxu0 0.0
        %3668 = vmatprep.subr.mxu0 0.0
        %3669 = vmatpush2.xpose.msra.mxu0 0.0
        %3670 = vmatprep.subr.mxu0 0.0
        %3671 = vmatpush2.xpose.msra.mxu0 0.0
        %3672 = vmatprep.subr.mxu0 0.0
        %3673 = vmatpush2.xpose.msra.mxu0 0.0
        %3674 = vmatprep.subr.mxu0 0.0
        %3675 = vmatpush2.xpose.msra.mxu0 0.0
        %3676 = vmatprep.subr.mxu0 0.0
        %3677 = vmatpush2.xpose.msra.mxu0 0.0
        %3678 = vmatprep.subr.mxu0 0.0
        %3679 = vmatpush2.xpose.msra.mxu0 0.0
        %3680 = vmatprep.subr.mxu0 0.0
        %3681 = vmatpush2.xpose.msra.mxu0 0.0
        %3682 = vmatprep.subr.mxu0 0.0
        %3683 = vmatpush2.xpose.msra.mxu0 0.0
        %3684 = vmatprep.subr.mxu0 0.0
        %3685 = vmatpush2.xpose.msra.mxu0 0.0
        %3686 = vmatprep.subr.mxu0 0.0
        %3687 = vmatpush2.xpose.msra.mxu0 0.0
        %3688 = vmatprep.subr.mxu0 0.0
        %3689 = vmatpush2.xpose.msra.mxu0 0.0
        %3690 = vmatprep.subr.mxu0 0.0
        %3691 = vmatpush2.xpose.msra.mxu0 0.0
        %3692 = vmatprep.mubr.f32.mxu0 %v3019
        %3693 = vmatmul.mubr.f32.gmra.mxu0 %v3018
        %v3694 = vpop.f32.mrf.mxu0
        %v3695 = vadd.f32 %v3620, %v3694
        %v3696 = vpop.f32.mrf.mxu0
        %3697 = vmatprep.mubr.f32.mxu0 %v3035
        %3698 = vmatmul.mubr.f32.gmra.mxu0 %v3034
        %v3699 = vpop.f32.mrf.mxu0
        %v3700 = vadd.f32 %v3625, %v3699
        %v3701 = vpop.f32.mrf.mxu0
        %3702 = vdwg.mxu0
        %v3703 = vadd.f32 %v1404, %v3695
        %v3704 = vadd.f32 %v1405, %v3700
        %v3705 = vsel %vm733, %v3703, 0.0
        %3706 = vadd.xlane.f32.xlu0 %v3705
        %v3707 = vpop.xlane.xlu0 %3706
        %v3708 = vsel %vm733, %v3704, 0.0
        %3709 = vadd.xlane.f32.xlu0 %v3708
        %v3710 = vpop.xlane.xlu0 %3709
        %v3711 = vmul.f32 %v3707, %v1374
        %v3712 = vmul.f32 %v3710, %v1374
        %v3713 = vsub.f32 %v3703, %v3711
        %v3714 = vsub.f32 %v3704, %v3712
        %v3715 = vmul.f32 %v3713, %v3713
        %v3716 = vmul.f32 %v3714, %v3714
        %v3717 = vsel %vm733, %v3715, 0.0
        %3718 = vadd.xlane.f32.xlu0 %v3717
        %v3719 = vpop.xlane.xlu0 %3718
        %v3720 = vsel %vm733, %v3716, 0.0
        %3721 = vadd.xlane.f32.xlu0 %v3720
        %v3722 = vpop.xlane.xlu0 %3721
        %v3723 = vmul.f32 %v3719, %v1374
        %v3724 = vmul.f32 %v3722, %v1374
        %v3725 = vadd.f32 %v3723, 1e-05
        %v3726 = vadd.f32 %v3724, 1e-05
        %v3727 = vrsqrt.pop %v3725
        %v3728 = vrsqrt.pop %v3726
        %v3729 = vmul.f32 %v3713, %v3727
        %v3730 = vmul.f32 %v3714, %v3728
        %v3731 = vlaneseq
        %v3732 = vshrl.u32 %v3731, 7
        %v3733 = vsub.s32 2, %v3732
        %v3734 = vrot.slane %v728, %v3733
        %v3735 = vmul.f32 %v3729, %v3734
        %v3736 = vmul.f32 %v3730, %v3734
        %3738 = vrot.lane.b32.xlu0 %v3734, 96
        %v3739 = vpop.permute.xlu0 %3738
        %v3741 = vadd.f32 %v3735, %v3739
        %v3742 = vadd.f32 %v3736, %v3739
        %3743 = vst.msk [vmem:[#allocation2] sm:$0xff] %vm733, %v3741
        %3744 = vst.msk [vmem:[#allocation2 + $0x8] sm:$0xff] %vm733, %v3742
        %p3745 = scmp.eq.s32.totalorder %s34, 5
        // Predicated region
        $region117: #{pallas_transformer_forward.1} parent=67 // pred_check
          %p3746 = pneg %p3745
        $region118: #{pallas_transformer_forward.1} parent=67 // pred_check_branch
          %3748 = sbr.rel (%p3746) target = $region120
        $region119: #{pallas_transformer_forward.1} parent=67 // pred_region
          %v3749 = vld [vmem:[#allocation9] sm:$0x3]
          %v3751 = vsel %vm1259, %v3749, 0
          %3753 = vmatprep.subr.mxu0 0.0
          %3754 = vmatpush1.msra.mxu0 0.0
          %3755 = vmatprep.subr.mxu0 0.0
          %3756 = vmatpush1.msra.mxu0 0.0
          %3757 = vmatprep.subr.mxu0 0.0
          %3758 = vmatpush1.msra.mxu0 0.0
          %3759 = vmatprep.subr.mxu0 0.0
          %3760 = vmatpush1.msra.mxu0 0.0
          %3761 = vmatprep.subr.mxu0 0.0
          %3762 = vmatpush1.msra.mxu0 0.0
          %3763 = vmatprep.subr.mxu0 0.0
          %3764 = vmatpush1.msra.mxu0 0.0
          %3765 = vmatprep.subr.mxu0 0.0
          %3766 = vmatpush1.msra.mxu0 0.0
          %3767 = vmatprep.subr.mxu0 0.0
          %3768 = vmatpush1.msra.mxu0 0.0
          %3769 = vmatprep.subr.mxu0 0.0
          %3770 = vmatpush1.msra.mxu0 0.0
          %3771 = vmatprep.subr.mxu0 0.0
          %3772 = vmatpush1.msra.mxu0 0.0
          %3773 = vmatprep.subr.mxu0 0.0
          %3774 = vmatpush1.msra.mxu0 0.0
          %3775 = vmatprep.subr.mxu0 0.0
          %3776 = vmatpush1.msra.mxu0 0.0
          %3777 = vmatprep.subr.mxu0 0.0
          %3778 = vmatpush1.msra.mxu0 0.0
          %3779 = vmatprep.subr.mxu0 0.0
          %3780 = vmatpush1.msra.mxu0 0.0
          %3781 = vmatprep.subr.mxu0 0.0
          %3782 = vmatpush1.msra.mxu0 %v3742
          %3783 = vmatprep.subr.mxu0 0.0
          %3784 = vmatpush1.msra.mxu0 %v3741
          %3785 = vmatprep.subr.mxu0 0.0
          %3786 = vmatpush2.msra.mxu0 0.0
          %3787 = vmatprep.subr.mxu0 0.0
          %3788 = vmatpush2.msra.mxu0 0.0
          %3789 = vmatprep.subr.mxu0 0.0
          %3790 = vmatpush2.msra.mxu0 0.0
          %3791 = vmatprep.subr.mxu0 0.0
          %3792 = vmatpush2.msra.mxu0 0.0
          %3793 = vmatprep.subr.mxu0 0.0
          %3794 = vmatpush2.msra.mxu0 0.0
          %3795 = vmatprep.subr.mxu0 0.0
          %3796 = vmatpush2.msra.mxu0 0.0
          %3797 = vmatprep.subr.mxu0 0.0
          %3798 = vmatpush2.msra.mxu0 0.0
          %3799 = vmatprep.subr.mxu0 0.0
          %3800 = vmatpush2.msra.mxu0 0.0
          %3801 = vmatprep.subr.mxu0 0.0
          %3802 = vmatpush2.msra.mxu0 0.0
          %3803 = vmatprep.subr.mxu0 0.0
          %3804 = vmatpush2.msra.mxu0 0.0
          %3805 = vmatprep.subr.mxu0 0.0
          %3806 = vmatpush2.msra.mxu0 0.0
          %3807 = vmatprep.subr.mxu0 0.0
          %3808 = vmatpush2.msra.mxu0 0.0
          %3809 = vmatprep.subr.mxu0 0.0
          %3810 = vmatpush2.msra.mxu0 0.0
          %3811 = vmatprep.subr.mxu0 0.0
          %3812 = vmatpush2.msra.mxu0 0.0
          %3813 = vmatprep.subr.mxu0 0.0
          %3814 = vmatpush2.msra.mxu0 0.0
          %3815 = vmatprep.subr.mxu0 0.0
          %3816 = vmatpush2.msra.mxu0 0.0
          %3817 = vmatprep.mubr.f32.mxu0 0.0
          %3818 = vmatmul.mubr.f32.gmra.mxu0 %v3751
          %v3819 = vpop.f32.mrf.mxu0
          %v3820 = vadd.f32 0.0, %v3819
          %v3821 = vpop.f32.mrf.mxu0
          %3822 = vdwg.mxu0
          %v3823 = vld [vmem:[#allocation11] sm:$0x1]
          %v3824 = vld [vmem:[#allocation11 + $0x1] sm:$0x1]
          %vm3825 = vcmask 254976
          %v3826 = vsel %vm3825, %v3820, 0.0
          %3827 = vadd.xlane.f32.xlu0 %v3826
          %v3828 = vpop.xlane.xlu0 %3827
          %v3829 = vmul.f32 %v3828, %v1374
          %v3830 = vsub.f32 %v3820, %v3829
          %v3831 = vmul.f32 %v3830, %v3830
          %v3832 = vsel %vm3825, %v3831, 0.0
          %3833 = vadd.xlane.f32.xlu0 %v3832
          %v3834 = vpop.xlane.xlu0 %3833
          %v3835 = vmul.f32 %v3834, %v1374
          %v3836 = vadd.f32 %v3835, 1e-05
          %v3837 = vrsqrt.pop %v3836
          %v3838 = vmul.f32 %v3830, %v3837
          %v3839 = vlaneseq
          %v3840 = vshrl.u32 %v3839, 7
          %v3841 = vsub.s32 0, %v3840
          %v3842 = vrot.slane %v3823, %v3841
          %v3843 = vmul.f32 %v3838, %v3842
          %v3844 = vlaneseq
          %v3845 = vshrl.u32 %v3844, 7
          %v3846 = vsub.s32 0, %v3845
          %v3847 = vrot.slane %v3824, %v3846
          %v3848 = vadd.f32 %v3843, %v3847
          %v3849 = vld [vmem:[#allocation12] sm:$0xff]
          %v3850 = vld [vmem:[#allocation12 + $0x8] sm:$0xff]
          %v3851 = vld [vmem:[#allocation12 + $0x10] sm:$0xff]
          %v3852 = vld [vmem:[#allocation12 + $0x18] sm:$0xff]
          %v3853 = vld [vmem:[#allocation14] sm:$0x1]
          %v3855 = vlaneseq
          %v3856 = vshrl.u32 %v3855, 7
          %v3857 = vsub.s32 0, %v3856
          %v3858 = vrot.slane %v3853, %v3857
          %v3861 = vsel %vm733, %v3848, 0
          %3863 = vmatprep.subr.mxu0 0.0
          %3864 = vmatpush1.msra.mxu0 0.0
          %3865 = vmatprep.subr.mxu0 0.0
          %3866 = vmatpush1.msra.mxu0 0.0
          %3867 = vmatprep.subr.mxu0 0.0
          %3868 = vmatpush1.msra.mxu0 0.0
          %3869 = vmatprep.subr.mxu0 0.0
          %3870 = vmatpush1.msra.mxu0 0.0
          %3871 = vmatprep.subr.mxu0 0.0
          %3872 = vmatpush1.msra.mxu0 0.0
          %3873 = vmatprep.subr.mxu0 0.0
          %3874 = vmatpush1.msra.mxu0 0.0
          %3875 = vmatprep.subr.mxu0 0.0
          %3876 = vmatpush1.msra.mxu0 0.0
          %3877 = vmatprep.subr.mxu0 0.0
          %3878 = vmatpush1.msra.mxu0 0.0
          %3879 = vmatprep.subr.mxu0 0.0
          %3880 = vmatpush1.msra.mxu0 0.0
          %3881 = vmatprep.subr.mxu0 0.0
          %3882 = vmatpush1.msra.mxu0 0.0
          %3883 = vmatprep.subr.mxu0 0.0
          %3884 = vmatpush1.msra.mxu0 0.0
          %3885 = vmatprep.subr.mxu0 0.0
          %3886 = vmatpush1.msra.mxu0 0.0
          %3887 = vmatprep.subr.mxu0 0.0
          %3888 = vmatpush1.msra.mxu0 %v3852
          %3889 = vmatprep.subr.mxu0 0.0
          %3890 = vmatpush1.msra.mxu0 %v3851
          %3891 = vmatprep.subr.mxu0 0.0
          %3892 = vmatpush1.msra.mxu0 %v3850
          %3893 = vmatprep.subr.mxu0 0.0
          %3894 = vmatpush1.msra.mxu0 %v3849
          %3895 = vmatprep.subr.mxu0 0.0
          %3896 = vmatpush2.msra.mxu0 0.0
          %3897 = vmatprep.subr.mxu0 0.0
          %3898 = vmatpush2.msra.mxu0 0.0
          %3899 = vmatprep.subr.mxu0 0.0
          %3900 = vmatpush2.msra.mxu0 0.0
          %3901 = vmatprep.subr.mxu0 0.0
          %3902 = vmatpush2.msra.mxu0 0.0
          %3903 = vmatprep.subr.mxu0 0.0
          %3904 = vmatpush2.msra.mxu0 0.0
          %3905 = vmatprep.subr.mxu0 0.0
          %3906 = vmatpush2.msra.mxu0 0.0
          %3907 = vmatprep.subr.mxu0 0.0
          %3908 = vmatpush2.msra.mxu0 0.0
          %3909 = vmatprep.subr.mxu0 0.0
          %3910 = vmatpush2.msra.mxu0 0.0
          %3911 = vmatprep.subr.mxu0 0.0
          %3912 = vmatpush2.msra.mxu0 0.0
          %3913 = vmatprep.subr.mxu0 0.0
          %3914 = vmatpush2.msra.mxu0 0.0
          %3915 = vmatprep.subr.mxu0 0.0
          %3916 = vmatpush2.msra.mxu0 0.0
          %3917 = vmatprep.subr.mxu0 0.0
          %3918 = vmatpush2.msra.mxu0 0.0
          %3919 = vmatprep.subr.mxu0 0.0
          %3920 = vmatpush2.msra.mxu0 0.0
          %3921 = vmatprep.subr.mxu0 0.0
          %3922 = vmatpush2.msra.mxu0 0.0
          %3923 = vmatprep.subr.mxu0 0.0
          %3924 = vmatpush2.msra.mxu0 0.0
          %3925 = vmatprep.subr.mxu0 0.0
          %3926 = vmatpush2.msra.mxu0 0.0
          %3927 = vmatprep.mubr.f32.mxu0 0.0
          %3928 = vmatmul.mubr.f32.gmra.mxu0 %v3861
          %v3929 = vpop.f32.mrf.mxu0
          %v3930 = vadd.f32 %v3858, %v3929
          %v3931 = vpop.f32.mrf.mxu0
          %3932 = vdwg.mxu0
          %vm3933 = vcmask 607232
          %3934 = vst.msk [vmem:[#allocation21] sm:$0x3] %vm3933, %v3930
        $region120: #{pallas_transformer_forward.1} parent=67 // pred_fallthru
          _
        // Predicated region
        $region121: #{pallas_transformer_forward.1} parent=67 // pred_check
          %p3935 = pneg %p319
        $region122: #{pallas_transformer_forward.1} parent=67 // pred_check_branch
          %3937 = sbr.rel (%p3935) target = $region124
        $region123: #{pallas_transformer_forward.1} parent=67 // pred_region
          %s3939 = ssub.s32 32, 32
          %3940 = vsyncadd [#allocation5], %s3939
          %s3942 = sshll.u32 [#allocation21], 4
          %s3943 = int_to_ptr.vmem [resolvable:$true] %s3942
          %3945 = dma.vmem_to_hbm [thread:$0]  %s3943, 32, %s12, [#allocation5]
        $region124: #{pallas_transformer_forward.1} parent=67 // pred_fallthru
          _
        // Predicated region
        $region125: #{pallas_transformer_forward.1} parent=67 // pred_check
          %p3946 = pneg %p319
        $region126: #{pallas_transformer_forward.1} parent=67 // pred_check_branch
          %3948 = sbr.rel (%p3946) target = $region128
        $region127: #{pallas_transformer_forward.1} parent=67 // pred_region
          %3949 = dma.done [#allocation5], 32
        $region128: #{pallas_transformer_forward.1} parent=67 // pred_fallthru
          _
      $region68: #{pallas_transformer_forward.1} parent=5 // pred_fallthru
        _
      %p3950 = scmp.le.s32.totalorder 2, %s29
      // Predicated region
      $region129: #{pallas_transformer_forward.1} parent=5 // pred_check
        %p3951 = pneg %p3950
      $region130: #{pallas_transformer_forward.1} parent=5 // pred_check_branch
        %3953 = sbr.rel (%p3951) target = $region132
      $region131: #{pallas_transformer_forward.1} parent=5 // pred_region
        %s3954 = ssub.s32 %s29, 2
      $region132: #{pallas_transformer_forward.1} parent=5 // pred_fallthru
        _
    $region6: #{pallas_transformer_forward.1} parent=1 // loop_footer
      %s33 = sadd.s32 1, %s29
    $region7: #{pallas_transformer_forward.1} parent=1 // loop_footer_branch
      %28 = sbr.rel target = $region3
    $region8: #{pallas_transformer_forward.1} parent=1 // loop_exit
      _
    %3955 = vsyncpa [#allocation4], 1
    %s3956 = scalar_lea.sflag [#allocation4], 1
    %3957 = vsyncpa %s3956, 1
    %3958 = vsyncpa [#allocation7], 1
    %3959 = vsyncpa [#allocation10], 1
    %3960 = vsyncpa [#allocation13], 1
    %3961 = vsyncpa [#allocation16], 1
    %s3962 = scalar_lea.sflag [#allocation16], 1
    %3963 = vsyncpa %s3962, 1
    %3964 = vsyncpa [#allocation19], 1
    %s3965 = scalar_lea.sflag [#allocation19], 1
    %3966 = vsyncpa %s3965, 1
    %3967 = vsyncpa [#allocation5], 1
    %s3968 = scalar_lea.sflag [#allocation5], 1
    %3969 = vsyncpa %s3968, 1

</llo_original>
